<compile_context>
chip_gen: v7x
topology: tpu7x:2x2x1
jax: 0.10.0
libtpu: 0.0.40
codegen_flags: <defaults>
</compile_context>

<pallas_src>
import math
import functools

import jax
import jax.numpy as jnp
from jax.experimental import pallas as pl
from jax.experimental.pallas import tpu as pltpu

LN_EPS = 1e-5  # torch.nn.LayerNorm default


# ----------------------------- in-kernel helpers -----------------------------

def _layernorm(x, gamma, beta):
    mu = jnp.mean(x, axis=-1, keepdims=True)
    var = jnp.mean((x - mu) ** 2, axis=-1, keepdims=True)
    return (x - mu) * jax.lax.rsqrt(var + LN_EPS) * gamma + beta


# ----------------------------- Pallas kernel ----------------------------------

def encoder_layer_kernel(num_heads, apply_final_ln,
                         x_ref,
                         wq_ref, bq_ref, wk_ref, bk_ref, wv_ref, bv_ref,
                         wo_ref, bo_ref,
                         w1_ref, b1_ref, w2_ref, b2_ref,
                         g1_ref, be1_ref, g2_ref, be2_ref,
                         gf_ref, bf_ref,
                         o_ref,
                         k_cache, v_cache, ctx_buf):
    """One BERT encoder layer for one (batch, query-tile) grid step.

    x_ref:   (1, S, D) full sequence for this batch element (fetched once per b;
             the query tile / residual stream is sliced from it in-kernel).
    k_cache/v_cache: (S, D) bf16 VMEM scratch holding the K/V projections,
             computed once per batch element (t == 0) and reused across tiles.
    ctx_buf: (tq, D) bf16 VMEM scratch; per-head contexts land here lane-dense
             so the output projection is a single full-K matmul.
    """
    t = pl.program_id(1)
    _, S, D = x_ref.shape
    tq = o_ref.shape[1]
    H = num_heads
    dh = D // H
    scale = 1.0 / math.sqrt(dh)

    # --- K/V projections: once per batch element, cached in VMEM (bf16) ---
    @pl.when(t == 0)
    def _():
        xf_b = x_ref[0].astype(jnp.bfloat16)
        k = jnp.dot(xf_b, wk_ref[...], preferred_element_type=jnp.float32) + bk_ref[0]
        v = jnp.dot(xf_b, wv_ref[...], preferred_element_type=jnp.float32) + bv_ref[0]
        k_cache[...] = k.astype(jnp.bfloat16)
        v_cache[...] = v.astype(jnp.bfloat16)

    # --- query tile sliced from the single resident activation block ---
    q_start = pl.multiple_of(t * tq, tq)
    xq = x_ref[0, pl.ds(q_start, tq), :]                 # (tq, D) f32 residual stream
    q = jnp.dot(xq.astype(jnp.bfloat16), wq_ref[...],
                preferred_element_type=jnp.float32) + bq_ref[0]
    # Fold 1/sqrt(dh) into q once (scores scale uniformly; tq*D muls vs H*tq*S).
    q_b = (q * scale).astype(jnp.bfloat16)

    # --- per-head attention; contexts written lane-dense into ctx_buf ---
    for h in range(H):
        lo = h * dh
        qh = q_b[:, lo:lo + dh]                          # (tq, dh) bf16
        kh = k_cache[:, lo:lo + dh]                      # (S, dh)  bf16
        vh = v_cache[:, lo:lo + dh]                      # (S, dh)  bf16
        s = jax.lax.dot_general(qh, kh, (((1,), (1,)), ((), ())),
                                preferred_element_type=jnp.float32)  # (tq, S) f32
        s = s - jnp.max(s, axis=-1, keepdims=True)
        e = jnp.exp(s)
        p = e * pl.reciprocal(jnp.sum(e, axis=-1, keepdims=True), approx=True)
        ctx_buf[:, lo:lo + dh] = jnp.dot(
            p.astype(jnp.bfloat16), vh,
            preferred_element_type=jnp.float32).astype(jnp.bfloat16)

    # --- output projection: ONE full-K (K = D) matmul ---
    attn = jnp.dot(ctx_buf[...], wo_ref[...],
                   preferred_element_type=jnp.float32) + bo_ref[0]

    x1 = _layernorm(xq + attn, g1_ref[0], be1_ref[0])

    # --- feed-forward ---
    h1 = jnp.maximum(
        jnp.dot(x1.astype(jnp.bfloat16), w1_ref[...],
                preferred_element_type=jnp.float32) + b1_ref[0], 0.0)
    ffn = jnp.dot(h1.astype(jnp.bfloat16), w2_ref[...],
                  preferred_element_type=jnp.float32) + b2_ref[0]
    x2 = _layernorm(x1 + ffn, g2_ref[0], be2_ref[0])

    # Fused model-final LayerNorm (static flag -> only emitted for the last layer).
    if apply_final_ln:
        x2 = _layernorm(x2, gf_ref[0], bf_ref[0])

    o_ref[0] = x2


# ----------------------------- wrapper -----------------------------------------

def _rep(shape):
    # weight / vector replicated across the (batch, query-tile) grid
    return pl.BlockSpec(shape, lambda b, t: (0,) * len(shape))


def _vmem_capacity_bytes():
    try:
        return int(pltpu.get_tpu_info().vmem_capacity_bytes)
    except Exception:
        return 64 << 20  # conservative (v7x-sized) fallback


def _vmem_limit_bytes(S, tq, D, F):
    bf16, f32 = 2, 4
    weights = (4 * D * D + 2 * D * F) * bf16          # constant-index blocks still double-buffered
    vectors = (11 * D + F) * f32
    act_blocks = (S * D + tq * D) * f32               # x block (per b) + output tile
    scratch = (2 * S * D + tq * D) * bf16             # K/V cache + ctx buffer (single-buffered)
    live = (tq * S + tq * F + 4 * tq * D) * f32       # scores / h1 / residual intermediates
    need = 2 * (weights + vectors + act_blocks) + scratch + live + (8 << 20)
    cap = _vmem_capacity_bytes()
    # Leave ~8 MiB of Mosaic internal-scratch headroom; no artificial 64 MiB cap
    # on 128 MiB chips (v5e/v6e).
    # TODO(synk): at BERT-base sizes on v7x, move weights to memory_space=pl.ANY
    # with a one-time copy into single-buffered VMEM scratch to reclaim ~14 MiB.
    return int(min(max(need, 32 << 20), cap - (8 << 20)))


def run_encoder_layer(x, p, num_heads, *, final_gamma, final_beta,
                      apply_final_ln, tq=None):
    B, S, D = x.shape
    F = p["w1"].shape[1]
    if tq is None:
        tq = min(S, 128)
        # On 128 MiB-VMEM chips (v5e/v6e), larger query tiles amortize MXU
        # fill/drain and the ~0.35 us per-grid-step overhead; keep 128 on v7x.
        if S >= 256 and _vmem_capacity_bytes() > (100 << 20):
            tq = min(S, 256)
    assert S % tq == 0 and D % num_heads == 0
    ntq = S // tq
    # TODO(synk): for tiny B*ntq (< 4) the grid under-feeds v7x's 2 TensorCores;
    # folding batch elements' query tiles into one axis would help at such shapes.

    bf16 = jnp.bfloat16
    wq, wk = p["wq"].astype(bf16), p["wk"].astype(bf16)
    wv, wo = p["wv"].astype(bf16), p["wo"].astype(bf16)
    w1, w2 = p["w1"].astype(bf16), p["w2"].astype(bf16)

    kernel = functools.partial(encoder_layer_kernel, num_heads, apply_final_ln)

    in_specs = [
        pl.BlockSpec((1, S, D), lambda b, t: (b, 0, 0)),    # full sequence (residual + K/V source)
        _rep((D, D)), _rep((1, D)),                         # Wq, bq
        _rep((D, D)), _rep((1, D)),                         # Wk, bk
        _rep((D, D)), _rep((1, D)),                         # Wv, bv
        _rep((D, D)), _rep((1, D)),                         # Wo, bo
        _rep((D, F)), _rep((1, F)),                         # W1, b1
        _rep((F, D)), _rep((1, D)),                         # W2, b2
        _rep((1, D)), _rep((1, D)),                         # gamma1, beta1
        _rep((1, D)), _rep((1, D)),                         # gamma2, beta2
        _rep((1, D)), _rep((1, D)),                         # final gamma/beta
    ]

    # FLOPs: K/V once per batch element; Q/attn/o-proj/FFN per query tile.
    flops = int(B * (4 * S * D * D
                     + ntq * (2 * tq * D * D        # Q proj
                              + 4 * tq * S * D      # scores + context (all heads)
                              + 2 * tq * D * D      # output proj
                              + 4 * tq * D * F)))   # FFN
    # Bytes: weights fetched once per call (constant index_map), activations read
    # once per batch element, output written once.
    bytes_accessed = int(B * S * D * 4 * 2
                         + (4 * D * D + 2 * D * F) * 2
                         + (11 * D + F) * 4)
    cost = pl.CostEstimate(flops=flops,
                           transcendentals=int(B * num_heads * S * S),
                           bytes_accessed=bytes_accessed)

    return pl.pallas_call(
        kernel,
        out_shape=jax.ShapeDtypeStruct((B, S, D), jnp.float32),
        grid_spec=pltpu.PrefetchScalarGridSpec(
            num_scalar_prefetch=0,
            grid=(B, ntq),
            in_specs=in_specs,
            out_specs=pl.BlockSpec((1, tq, D), lambda b, t: (b, t, 0)),
            scratch_shapes=[pltpu.VMEM((S, D), bf16),    # K cache (per batch element)
                            pltpu.VMEM((S, D), bf16),    # V cache
                            pltpu.VMEM((tq, D), bf16)],  # per-tile context buffer
        ),
        compiler_params=pltpu.CompilerParams(
            # t axis carries the K/V cache -> "arbitrary"; batch axis parallel.
            dimension_semantics=("parallel", "arbitrary"),
            vmem_limit_bytes=_vmem_limit_bytes(S, tq, D, F),
        ),
        cost_estimate=cost,
    )(x,
      wq, p["bq"], wk, p["bk"], wv, p["bv"],
      wo, p["bo"], w1, p["b1"], w2, p["b2"],
      p["g1"], p["be1"], p["g2"], p["be2"],
      final_gamma, final_beta)


# ----------------------------- BERT model (glue in plain JAX) -------------------

def make_positional_encoding(max_len, d_model):
    position = jnp.arange(max_len, dtype=jnp.float32)[:, None]
    div_term = jnp.exp(jnp.arange(0, d_model, 2, dtype=jnp.float32)
                       * (-math.log(10000.0) / d_model))
    pe = jnp.zeros((max_len, d_model), jnp.float32)
    pe = pe.at[:, 0::2].set(jnp.sin(position * div_term))
    pe = pe.at[:, 1::2].set(jnp.cos(position * div_term))
    return pe


def init_params(key, vocab_size, d_model, d_ff, num_layers, num_segments):
    keys = jax.random.split(key, 3 + num_layers)
    params = {
        "tok_emb": 0.02 * jax.random.normal(keys[0], (vocab_size, d_model), jnp.float32),
        "seg_emb": 0.02 * jax.random.normal(keys[1], (num_segments, d_model), jnp.float32),
        "final_gamma": jnp.ones((1, d_model), jnp.float32),
        "final_beta": jnp.zeros((1, d_model), jnp.float32),
        "layers": [],
    }
    for li in range(num_layers):
        lk = jax.random.split(keys[3 + li], 6)
        D, F = d_model, d_ff
        layer = {
            "wq": 0.05 * jax.random.normal(lk[0], (D, D), jnp.float32),
            "bq": jnp.zeros((1, D), jnp.float32),
            "wk": 0.05 * jax.random.normal(lk[1], (D, D), jnp.float32),
            "bk": jnp.zeros((1, D), jnp.float32),
            "wv": 0.05 * jax.random.normal(lk[2], (D, D), jnp.float32),
            "bv": jnp.zeros((1, D), jnp.float32),
            "wo": 0.05 * jax.random.normal(lk[3], (D, D), jnp.float32),
            "bo": jnp.zeros((1, D), jnp.float32),
            "w1": 0.05 * jax.random.normal(lk[4], (D, F), jnp.float32),
            "b1": jnp.zeros((1, F), jnp.float32),
            "w2": 0.05 * jax.random.normal(lk[5], (F, D), jnp.float32),
            "b2": jnp.zeros((1, D), jnp.float32),
            "g1": jnp.ones((1, D), jnp.float32),
            "be1": jnp.zeros((1, D), jnp.float32),
            "g2": jnp.ones((1, D), jnp.float32),
            "be2": jnp.zeros((1, D), jnp.float32),
        }
        params["layers"].append(layer)
    return params


def bert_forward(params, input_ids, segment_ids, pe, d_model, num_heads):
    # TODO(synk): token/segment embedding gathers + positional add kept in plain
    # JAX (data-dependent gather); the hot encoder path runs in Pallas.
    tok = params["tok_emb"][input_ids] * math.sqrt(d_model)   # (B, S, D)
    seg = params["seg_emb"][segment_ids]                      # (B, S, D)
    S = input_ids.shape[1]
    x = tok + seg + pe[None, :S, :]
    n = len(params["layers"])
    for i, lp in enumerate(params["layers"]):
        x = run_encoder_layer(
            x, lp, num_heads,
            final_gamma=params["final_gamma"], final_beta=params["final_beta"],
            apply_final_ln=(i == n - 1))                      # final LN fused in last layer
    return x


bert_forward_jit = jax.jit(bert_forward, static_argnames=("d_model", "num_heads"))


# ----------------------------- pure-JAX f32 reference ---------------------------

def bert_reference(params, input_ids, segment_ids, pe, d_model, num_heads):
    tok = params["tok_emb"][input_ids] * math.sqrt(d_model)
    seg = params["seg_emb"][segment_ids]
    S = input_ids.shape[1]
    x = tok + seg + pe[None, :S, :]
    B = x.shape[0]
    dh = d_model // num_heads
    for p in params["layers"]:
        q = x @ p["wq"] + p["bq"][0]
        k = x @ p["wk"] + p["bk"][0]
        v = x @ p["wv"] + p["bv"][0]
        q = q.reshape(B, S, num_heads, dh).transpose(0, 2, 1, 3)
        k = k.reshape(B, S, num_heads, dh).transpose(0, 2, 1, 3)
        v = v.reshape(B, S, num_heads, dh).transpose(0, 2, 1, 3)
        s = jnp.einsum("bhqd,bhkd->bhqk", q, k) / math.sqrt(dh)
        w = jax.nn.softmax(s, axis=-1)
        ctx = jnp.einsum("bhqk,bhkd->bhqd", w, v).transpose(0, 2, 1, 3).reshape(B, S, d_model)
        attn = ctx @ p["wo"] + p["bo"][0]
        x = _layernorm(x + attn, p["g1"][0], p["be1"][0])
        h1 = jax.nn.relu(x @ p["w1"] + p["b1"][0])
        ffn = h1 @ p["w2"] + p["b2"][0]
        x = _layernorm(x + ffn, p["g2"][0], p["be2"][0])
    return _layernorm(x, params["final_gamma"][0], params["final_beta"][0])


# ----------------------------- main ---------------------------------------------

if __name__ == "__main__":
    # Small shapes; D and d_ff are multiples of 128 so all blocks are lane-dense.
    vocab_size, d_model, d_ff = 50, 128, 256
    num_heads, num_layers, num_segments, max_len = 4, 2, 2, 32
    B, S = 2, 16

    key = jax.random.PRNGKey(0)
    k_params, k_ids, k_seg = jax.random.split(key, 3)

    params = init_params(k_params, vocab_size, d_model, d_ff, num_layers, num_segments)
    pe = make_positional_encoding(max_len, d_model)

    input_ids = jax.random.randint(k_ids, (B, S), 0, vocab_size, dtype=jnp.int32)
    segment_ids = jax.random.randint(k_seg, (B, S), 0, num_segments, dtype=jnp.int32)

    out = bert_forward_jit(params, input_ids, segment_ids, pe,
                           d_model=d_model, num_heads=num_heads)
    out = jax.block_until_ready(out)

    ref = bert_reference(params, input_ids, segment_ids, pe, d_model, num_heads)
    ref = jax.block_until_ready(ref)

    assert out.shape == (B, S, d_model)
    # bf16 matmul inputs (f32 accumulation) + approx softmax reciprocal
    # -> loosened tolerance vs the f32 reference.
    assert jnp.allclose(out, ref, atol=3e-2, rtol=3e-2), "Pallas output mismatch vs reference"

    print("KERNEL_OK")
</pallas_src>

<mosaic_0001>
module attributes {stable_mosaic.version = 11 : i64} {
  func.func @encoder_layer_kernel(%arg0: i32, %arg1: i32, %arg2: memref<1x16x128xf32, #tpu.memory_space<vmem>>, %arg3: memref<128x128xbf16, #tpu.memory_space<vmem>>, %arg4: memref<1x128xf32, #tpu.memory_space<vmem>>, %arg5: memref<128x128xbf16, #tpu.memory_space<vmem>>, %arg6: memref<1x128xf32, #tpu.memory_space<vmem>>, %arg7: memref<128x128xbf16, #tpu.memory_space<vmem>>, %arg8: memref<1x128xf32, #tpu.memory_space<vmem>>, %arg9: memref<128x128xbf16, #tpu.memory_space<vmem>>, %arg10: memref<1x128xf32, #tpu.memory_space<vmem>>, %arg11: memref<128x256xbf16, #tpu.memory_space<vmem>>, %arg12: memref<1x256xf32, #tpu.memory_space<vmem>>, %arg13: memref<256x128xbf16, #tpu.memory_space<vmem>>, %arg14: memref<1x128xf32, #tpu.memory_space<vmem>>, %arg15: memref<1x128xf32, #tpu.memory_space<vmem>>, %arg16: memref<1x128xf32, #tpu.memory_space<vmem>>, %arg17: memref<1x128xf32, #tpu.memory_space<vmem>>, %arg18: memref<1x128xf32, #tpu.memory_space<vmem>>, %arg19: memref<1x128xf32, #tpu.memory_space<vmem>>, %arg20: memref<1x128xf32, #tpu.memory_space<vmem>>, %arg21: memref<1x16x128xf32, #tpu.memory_space<vmem>>, %arg22: memref<16x128xbf16, #tpu.memory_space<vmem>>, %arg23: memref<16x128xbf16, #tpu.memory_space<vmem>>, %arg24: memref<16x128xbf16, #tpu.memory_space<vmem>>) attributes {dimension_semantics = [#tpu.dimension_semantics<parallel>, #tpu.dimension_semantics<arbitrary>], iteration_bounds = array<i64: 2, 1>, scalar_prefetch = 0 : i64, scratch_operands = 3 : i64, tpu.core_type = #tpu.core_type<tc>, window_params = [{transform_indices = @transform_0, window_bounds = array<i64: 1, 16, 128>}, {pipeline_mode = #tpu.pipeline_mode<synchronous>, transform_indices = @transform_1, window_bounds = array<i64: 128, 128>}, {pipeline_mode = #tpu.pipeline_mode<synchronous>, transform_indices = @transform_2, window_bounds = array<i64: 1, 128>}, {pipeline_mode = #tpu.pipeline_mode<synchronous>, transform_indices = @transform_3, window_bounds = array<i64: 128, 128>}, {pipeline_mode = #tpu.pipeline_mode<synchronous>, transform_indices = @transform_4, window_bounds = array<i64: 1, 128>}, {pipeline_mode = #tpu.pipeline_mode<synchronous>, transform_indices = @transform_5, window_bounds = array<i64: 128, 128>}, {pipeline_mode = #tpu.pipeline_mode<synchronous>, transform_indices = @transform_6, window_bounds = array<i64: 1, 128>}, {pipeline_mode = #tpu.pipeline_mode<synchronous>, transform_indices = @transform_7, window_bounds = array<i64: 128, 128>}, {pipeline_mode = #tpu.pipeline_mode<synchronous>, transform_indices = @transform_8, window_bounds = array<i64: 1, 128>}, {pipeline_mode = #tpu.pipeline_mode<synchronous>, transform_indices = @transform_9, window_bounds = array<i64: 128, 256>}, {pipeline_mode = #tpu.pipeline_mode<synchronous>, transform_indices = @transform_10, window_bounds = array<i64: 1, 256>}, {pipeline_mode = #tpu.pipeline_mode<synchronous>, transform_indices = @transform_11, window_bounds = array<i64: 256, 128>}, {pipeline_mode = #tpu.pipeline_mode<synchronous>, transform_indices = @transform_12, window_bounds = array<i64: 1, 128>}, {pipeline_mode = #tpu.pipeline_mode<synchronous>, transform_indices = @transform_13, window_bounds = array<i64: 1, 128>}, {pipeline_mode = #tpu.pipeline_mode<synchronous>, transform_indices = @transform_14, window_bounds = array<i64: 1, 128>}, {pipeline_mode = #tpu.pipeline_mode<synchronous>, transform_indices = @transform_15, window_bounds = array<i64: 1, 128>}, {pipeline_mode = #tpu.pipeline_mode<synchronous>, transform_indices = @transform_16, window_bounds = array<i64: 1, 128>}, {pipeline_mode = #tpu.pipeline_mode<synchronous>, transform_indices = @transform_17, window_bounds = array<i64: 1, 128>}, {pipeline_mode = #tpu.pipeline_mode<synchronous>, transform_indices = @transform_18, window_bounds = array<i64: 1, 128>}, {transform_indices = @transform_19, window_bounds = array<i64: 1, 16, 128>}]} {
    %c0_i32 = arith.constant 0 : i32
    %0 = arith.cmpi eq, %arg1, %c0_i32 : i32
    %1 = arith.extui %0 : i1 to i32
    %c0_i32_0 = arith.constant 0 : i32
    %2 = arith.cmpi ne, %1, %c0_i32_0 : i32
    scf.if %2 {
      %c0_83 = arith.constant 0 : index
      %c0_84 = arith.constant 0 : index
      %c0_85 = arith.constant 0 : index
      %178 = vector.load %arg2[%c0_83, %c0_84, %c0_85] : memref<1x16x128xf32, #tpu.memory_space<vmem>>, vector<1x16x128xf32>
      %179 = vector.shape_cast %178 : vector<1x16x128xf32> to vector<16x128xf32>
      %180 = arith.truncf %179 : vector<16x128xf32> to vector<16x128xbf16>
      %c0_86 = arith.constant 0 : index
      %c0_87 = arith.constant 0 : index
      %181 = vector.load %arg5[%c0_86, %c0_87] : memref<128x128xbf16, #tpu.memory_space<vmem>>, vector<128x128xbf16>
      %cst_88 = arith.constant dense<0.000000e+00> : vector<16x128xf32>
      %182 = tpu.matmul %180, %181, %cst_88 {dimension_numbers = #tpu.dot_dimension_numbers<[1], [0], [0], [1], [0, 0, 1, 1], [], []>} : vector<16x128xbf16>, vector<128x128xbf16>, vector<16x128xf32> -> vector<16x128xf32>
      %c0_89 = arith.constant 0 : index
      %c0_90 = arith.constant 0 : index
      %183 = vector.load %arg6[%c0_89, %c0_90] : memref<1x128xf32, #tpu.memory_space<vmem>>, vector<1x128xf32>
      %184 = vector.shape_cast %183 : vector<1x128xf32> to vector<128xf32>
      %185 = vector.shape_cast %184 : vector<128xf32> to vector<1x128xf32>
      %186 = vector.broadcast %185 : vector<1x128xf32> to vector<16x128xf32>
      %187 = arith.addf %182, %186 : vector<16x128xf32>
      %c0_91 = arith.constant 0 : index
      %c0_92 = arith.constant 0 : index
      %188 = vector.load %arg7[%c0_91, %c0_92] : memref<128x128xbf16, #tpu.memory_space<vmem>>, vector<128x128xbf16>
      %cst_93 = arith.constant dense<0.000000e+00> : vector<16x128xf32>
      %189 = tpu.matmul %180, %188, %cst_93 {dimension_numbers = #tpu.dot_dimension_numbers<[1], [0], [0], [1], [0, 0, 1, 1], [], []>} : vector<16x128xbf16>, vector<128x128xbf16>, vector<16x128xf32> -> vector<16x128xf32>
      %c0_94 = arith.constant 0 : index
      %c0_95 = arith.constant 0 : index
      %190 = vector.load %arg8[%c0_94, %c0_95] : memref<1x128xf32, #tpu.memory_space<vmem>>, vector<1x128xf32>
      %191 = vector.shape_cast %190 : vector<1x128xf32> to vector<128xf32>
      %192 = vector.shape_cast %191 : vector<128xf32> to vector<1x128xf32>
      %193 = vector.broadcast %192 : vector<1x128xf32> to vector<16x128xf32>
      %194 = arith.addf %189, %193 : vector<16x128xf32>
      %195 = arith.truncf %187 : vector<16x128xf32> to vector<16x128xbf16>
      %c0_96 = arith.constant 0 : index
      %c0_97 = arith.constant 0 : index
      %196 = vector.load %arg22[%c0_96, %c0_97] : memref<16x128xbf16, #tpu.memory_space<vmem>>, vector<16x128xbf16>
      tpu.vector_store %arg22[%c0_96, %c0_97], %195 {strides = array<i32>} : memref<16x128xbf16, #tpu.memory_space<vmem>>, vector<16x128xbf16>,
      %197 = arith.truncf %194 : vector<16x128xf32> to vector<16x128xbf16>
      %c0_98 = arith.constant 0 : index
      %c0_99 = arith.constant 0 : index
      %198 = vector.load %arg23[%c0_98, %c0_99] : memref<16x128xbf16, #tpu.memory_space<vmem>>, vector<16x128xbf16>
      tpu.vector_store %arg23[%c0_98, %c0_99], %197 {strides = array<i32>} : memref<16x128xbf16, #tpu.memory_space<vmem>>, vector<16x128xbf16>,
    } else {
    }
    %c16_i32 = arith.constant 16 : i32
    %3 = arith.muli %arg1, %c16_i32 : i32
    %4 = tpu.assume_multiple %3, 16 : i32
    %c0 = arith.constant 0 : index
    %5 = arith.index_cast %4 : i32 to index
    %c0_1 = arith.constant 0 : index
    %6 = vector.load %arg2[%c0, %5, %c0_1] : memref<1x16x128xf32, #tpu.memory_space<vmem>>, vector<1x16x128xf32>
    %7 = vector.shape_cast %6 : vector<1x16x128xf32> to vector<16x128xf32>
    %8 = arith.truncf %7 : vector<16x128xf32> to vector<16x128xbf16>
    %c0_2 = arith.constant 0 : index
    %c0_3 = arith.constant 0 : index
    %9 = vector.load %arg3[%c0_2, %c0_3] : memref<128x128xbf16, #tpu.memory_space<vmem>>, vector<128x128xbf16>
    %cst = arith.constant dense<0.000000e+00> : vector<16x128xf32>
    %10 = tpu.matmul %8, %9, %cst {dimension_numbers = #tpu.dot_dimension_numbers<[1], [0], [0], [1], [0, 0, 1, 1], [], []>} : vector<16x128xbf16>, vector<128x128xbf16>, vector<16x128xf32> -> vector<16x128xf32>
    %c0_4 = arith.constant 0 : index
    %c0_5 = arith.constant 0 : index
    %11 = vector.load %arg4[%c0_4, %c0_5] : memref<1x128xf32, #tpu.memory_space<vmem>>, vector<1x128xf32>
    %12 = vector.shape_cast %11 : vector<1x128xf32> to vector<128xf32>
    %13 = vector.shape_cast %12 : vector<128xf32> to vector<1x128xf32>
    %14 = vector.broadcast %13 : vector<1x128xf32> to vector<16x128xf32>
    %15 = arith.addf %10, %14 : vector<16x128xf32>
    %cst_6 = arith.constant 0.176776692 : f32
    %16 = vector.broadcast %cst_6 : f32 to vector<16x128xf32>
    %17 = arith.mulf %15, %16 : vector<16x128xf32>
    %18 = arith.truncf %17 : vector<16x128xf32> to vector<16x128xbf16>
    %19 = vector.extract_strided_slice %18 {offsets = [0, 0], sizes = [16, 32], strides = [1, 1]} : vector<16x128xbf16> to vector<16x32xbf16>
    %c0_7 = arith.constant 0 : index
    %c0_8 = arith.constant 0 : index
    %20 = vector.load %arg22[%c0_7, %c0_8] : memref<16x128xbf16, #tpu.memory_space<vmem>>, vector<16x32xbf16>
    %c0_9 = arith.constant 0 : index
    %c0_10 = arith.constant 0 : index
    %21 = vector.load %arg23[%c0_9, %c0_10] : memref<16x128xbf16, #tpu.memory_space<vmem>>, vector<16x32xbf16>
    %cst_11 = arith.constant dense<0.000000e+00> : vector<16x16xf32>
    %22 = tpu.matmul %19, %20, %cst_11 {dimension_numbers = #tpu.dot_dimension_numbers<[1], [1], [0], [0], [0, 0, 1, 0], [], []>} : vector<16x32xbf16>, vector<16x32xbf16>, vector<16x16xf32> -> vector<16x16xf32>
    %cst_12 = arith.constant dense<0xFF800000> : vector<16xf32>
    %23 = vector.multi_reduction <maximumf>, %22, %cst_12 [1] : vector<16x16xf32> to vector<16xf32>
    %24 = vector.shape_cast %23 : vector<16xf32> to vector<16x1xf32>
    %25 = vector.broadcast %24 : vector<16x1xf32> to vector<16x16xf32>
    %26 = arith.subf %22, %25 : vector<16x16xf32>
    %27 = math.exp %26 : vector<16x16xf32>
    %cst_13 = arith.constant dense<0.000000e+00> : vector<16xf32>
    %28 = vector.multi_reduction <add>, %27, %cst_13 [1] : vector<16x16xf32> to vector<16xf32>
    %29 = vector.shape_cast %28 : vector<16xf32> to vector<16x1xf32>
    %30 = tpu.reciprocal %29 {approx = true} : vector<16x1xf32> -> vector<16x1xf32>
    %31 = vector.broadcast %30 : vector<16x1xf32> to vector<16x16xf32>
    %32 = arith.mulf %27, %31 : vector<16x16xf32>
    %33 = arith.truncf %32 : vector<16x16xf32> to vector<16x16xbf16>
    %cst_14 = arith.constant dense<0.000000e+00> : vector<16x32xf32>
    %34 = tpu.matmul %33, %21, %cst_14 {dimension_numbers = #tpu.dot_dimension_numbers<[1], [0], [0], [1], [0, 0, 1, 1], [], []>} : vector<16x16xbf16>, vector<16x32xbf16>, vector<16x32xf32> -> vector<16x32xf32>
    %35 = arith.truncf %34 : vector<16x32xf32> to vector<16x32xbf16>
    %c0_15 = arith.constant 0 : index
    %c0_16 = arith.constant 0 : index
    %36 = vector.load %arg24[%c0_15, %c0_16] : memref<16x128xbf16, #tpu.memory_space<vmem>>, vector<16x32xbf16>
    tpu.vector_store %arg24[%c0_15, %c0_16], %35 {strides = array<i32>} : memref<16x128xbf16, #tpu.memory_space<vmem>>, vector<16x32xbf16>,
    %37 = vector.extract_strided_slice %18 {offsets = [0, 32], sizes = [16, 32], strides = [1, 1]} : vector<16x128xbf16> to vector<16x32xbf16>
    %c0_17 = arith.constant 0 : index
    %c32 = arith.constant 32 : index
    %38 = vector.load %arg22[%c0_17, %c32] : memref<16x128xbf16, #tpu.memory_space<vmem>>, vector<16x32xbf16>
    %c0_18 = arith.constant 0 : index
    %c32_19 = arith.constant 32 : index
    %39 = vector.load %arg23[%c0_18, %c32_19] : memref<16x128xbf16, #tpu.memory_space<vmem>>, vector<16x32xbf16>
    %cst_20 = arith.constant dense<0.000000e+00> : vector<16x16xf32>
    %40 = tpu.matmul %37, %38, %cst_20 {dimension_numbers = #tpu.dot_dimension_numbers<[1], [1], [0], [0], [0, 0, 1, 0], [], []>} : vector<16x32xbf16>, vector<16x32xbf16>, vector<16x16xf32> -> vector<16x16xf32>
    %cst_21 = arith.constant dense<0xFF800000> : vector<16xf32>
    %41 = vector.multi_reduction <maximumf>, %40, %cst_21 [1] : vector<16x16xf32> to vector<16xf32>
    %42 = vector.shape_cast %41 : vector<16xf32> to vector<16x1xf32>
    %43 = vector.broadcast %42 : vector<16x1xf32> to vector<16x16xf32>
    %44 = arith.subf %40, %43 : vector<16x16xf32>
    %45 = math.exp %44 : vector<16x16xf32>
    %cst_22 = arith.constant dense<0.000000e+00> : vector<16xf32>
    %46 = vector.multi_reduction <add>, %45, %cst_22 [1] : vector<16x16xf32> to vector<16xf32>
    %47 = vector.shape_cast %46 : vector<16xf32> to vector<16x1xf32>
    %48 = tpu.reciprocal %47 {approx = true} : vector<16x1xf32> -> vector<16x1xf32>
    %49 = vector.broadcast %48 : vector<16x1xf32> to vector<16x16xf32>
    %50 = arith.mulf %45, %49 : vector<16x16xf32>
    %51 = arith.truncf %50 : vector<16x16xf32> to vector<16x16xbf16>
    %cst_23 = arith.constant dense<0.000000e+00> : vector<16x32xf32>
    %52 = tpu.matmul %51, %39, %cst_23 {dimension_numbers = #tpu.dot_dimension_numbers<[1], [0], [0], [1], [0, 0, 1, 1], [], []>} : vector<16x16xbf16>, vector<16x32xbf16>, vector<16x32xf32> -> vector<16x32xf32>
    %53 = arith.truncf %52 : vector<16x32xf32> to vector<16x32xbf16>
    %c0_24 = arith.constant 0 : index
    %c32_25 = arith.constant 32 : index
    %54 = vector.load %arg24[%c0_24, %c32_25] : memref<16x128xbf16, #tpu.memory_space<vmem>>, vector<16x32xbf16>
    tpu.vector_store %arg24[%c0_24, %c32_25], %53 {strides = array<i32>} : memref<16x128xbf16, #tpu.memory_space<vmem>>, vector<16x32xbf16>,
    %55 = vector.extract_strided_slice %18 {offsets = [0, 64], sizes = [16, 32], strides = [1, 1]} : vector<16x128xbf16> to vector<16x32xbf16>
    %c0_26 = arith.constant 0 : index
    %c64 = arith.constant 64 : index
    %56 = vector.load %arg22[%c0_26, %c64] : memref<16x128xbf16, #tpu.memory_space<vmem>>, vector<16x32xbf16>
    %c0_27 = arith.constant 0 : index
    %c64_28 = arith.constant 64 : index
    %57 = vector.load %arg23[%c0_27, %c64_28] : memref<16x128xbf16, #tpu.memory_space<vmem>>, vector<16x32xbf16>
    %cst_29 = arith.constant dense<0.000000e+00> : vector<16x16xf32>
    %58 = tpu.matmul %55, %56, %cst_29 {dimension_numbers = #tpu.dot_dimension_numbers<[1], [1], [0], [0], [0, 0, 1, 0], [], []>} : vector<16x32xbf16>, vector<16x32xbf16>, vector<16x16xf32> -> vector<16x16xf32>
    %cst_30 = arith.constant dense<0xFF800000> : vector<16xf32>
    %59 = vector.multi_reduction <maximumf>, %58, %cst_30 [1] : vector<16x16xf32> to vector<16xf32>
    %60 = vector.shape_cast %59 : vector<16xf32> to vector<16x1xf32>
    %61 = vector.broadcast %60 : vector<16x1xf32> to vector<16x16xf32>
    %62 = arith.subf %58, %61 : vector<16x16xf32>
    %63 = math.exp %62 : vector<16x16xf32>
    %cst_31 = arith.constant dense<0.000000e+00> : vector<16xf32>
    %64 = vector.multi_reduction <add>, %63, %cst_31 [1] : vector<16x16xf32> to vector<16xf32>
    %65 = vector.shape_cast %64 : vector<16xf32> to vector<16x1xf32>
    %66 = tpu.reciprocal %65 {approx = true} : vector<16x1xf32> -> vector<16x1xf32>
    %67 = vector.broadcast %66 : vector<16x1xf32> to vector<16x16xf32>
    %68 = arith.mulf %63, %67 : vector<16x16xf32>
    %69 = arith.truncf %68 : vector<16x16xf32> to vector<16x16xbf16>
    %cst_32 = arith.constant dense<0.000000e+00> : vector<16x32xf32>
    %70 = tpu.matmul %69, %57, %cst_32 {dimension_numbers = #tpu.dot_dimension_numbers<[1], [0], [0], [1], [0, 0, 1, 1], [], []>} : vector<16x16xbf16>, vector<16x32xbf16>, vector<16x32xf32> -> vector<16x32xf32>
    %71 = arith.truncf %70 : vector<16x32xf32> to vector<16x32xbf16>
    %c0_33 = arith.constant 0 : index
    %c64_34 = arith.constant 64 : index
    %72 = vector.load %arg24[%c0_33, %c64_34] : memref<16x128xbf16, #tpu.memory_space<vmem>>, vector<16x32xbf16>
    tpu.vector_store %arg24[%c0_33, %c64_34], %71 {strides = array<i32>} : memref<16x128xbf16, #tpu.memory_space<vmem>>, vector<16x32xbf16>,
    %73 = vector.extract_strided_slice %18 {offsets = [0, 96], sizes = [16, 32], strides = [1, 1]} : vector<16x128xbf16> to vector<16x32xbf16>
    %c0_35 = arith.constant 0 : index
    %c96 = arith.constant 96 : index
    %74 = vector.load %arg22[%c0_35, %c96] : memref<16x128xbf16, #tpu.memory_space<vmem>>, vector<16x32xbf16>
    %c0_36 = arith.constant 0 : index
    %c96_37 = arith.constant 96 : index
    %75 = vector.load %arg23[%c0_36, %c96_37] : memref<16x128xbf16, #tpu.memory_space<vmem>>, vector<16x32xbf16>
    %cst_38 = arith.constant dense<0.000000e+00> : vector<16x16xf32>
    %76 = tpu.matmul %73, %74, %cst_38 {dimension_numbers = #tpu.dot_dimension_numbers<[1], [1], [0], [0], [0, 0, 1, 0], [], []>} : vector<16x32xbf16>, vector<16x32xbf16>, vector<16x16xf32> -> vector<16x16xf32>
    %cst_39 = arith.constant dense<0xFF800000> : vector<16xf32>
    %77 = vector.multi_reduction <maximumf>, %76, %cst_39 [1] : vector<16x16xf32> to vector<16xf32>
    %78 = vector.shape_cast %77 : vector<16xf32> to vector<16x1xf32>
    %79 = vector.broadcast %78 : vector<16x1xf32> to vector<16x16xf32>
    %80 = arith.subf %76, %79 : vector<16x16xf32>
    %81 = math.exp %80 : vector<16x16xf32>
    %cst_40 = arith.constant dense<0.000000e+00> : vector<16xf32>
    %82 = vector.multi_reduction <add>, %81, %cst_40 [1] : vector<16x16xf32> to vector<16xf32>
    %83 = vector.shape_cast %82 : vector<16xf32> to vector<16x1xf32>
    %84 = tpu.reciprocal %83 {approx = true} : vector<16x1xf32> -> vector<16x1xf32>
    %85 = vector.broadcast %84 : vector<16x1xf32> to vector<16x16xf32>
    %86 = arith.mulf %81, %85 : vector<16x16xf32>
    %87 = arith.truncf %86 : vector<16x16xf32> to vector<16x16xbf16>
    %cst_41 = arith.constant dense<0.000000e+00> : vector<16x32xf32>
    %88 = tpu.matmul %87, %75, %cst_41 {dimension_numbers = #tpu.dot_dimension_numbers<[1], [0], [0], [1], [0, 0, 1, 1], [], []>} : vector<16x16xbf16>, vector<16x32xbf16>, vector<16x32xf32> -> vector<16x32xf32>
    %89 = arith.truncf %88 : vector<16x32xf32> to vector<16x32xbf16>
    %c0_42 = arith.constant 0 : index
    %c96_43 = arith.constant 96 : index
    %90 = vector.load %arg24[%c0_42, %c96_43] : memref<16x128xbf16, #tpu.memory_space<vmem>>, vector<16x32xbf16>
    tpu.vector_store %arg24[%c0_42, %c96_43], %89 {strides = array<i32>} : memref<16x128xbf16, #tpu.memory_space<vmem>>, vector<16x32xbf16>,
    %c0_44 = arith.constant 0 : index
    %c0_45 = arith.constant 0 : index
    %91 = vector.load %arg24[%c0_44, %c0_45] : memref<16x128xbf16, #tpu.memory_space<vmem>>, vector<16x128xbf16>
    %c0_46 = arith.constant 0 : index
    %c0_47 = arith.constant 0 : index
    %92 = vector.load %arg9[%c0_46, %c0_47] : memref<128x128xbf16, #tpu.memory_space<vmem>>, vector<128x128xbf16>
    %cst_48 = arith.constant dense<0.000000e+00> : vector<16x128xf32>
    %93 = tpu.matmul %91, %92, %cst_48 {dimension_numbers = #tpu.dot_dimension_numbers<[1], [0], [0], [1], [0, 0, 1, 1], [], []>} : vector<16x128xbf16>, vector<128x128xbf16>, vector<16x128xf32> -> vector<16x128xf32>
    %c0_49 = arith.constant 0 : index
    %c0_50 = arith.constant 0 : index
    %94 = vector.load %arg10[%c0_49, %c0_50] : memref<1x128xf32, #tpu.memory_space<vmem>>, vector<1x128xf32>
    %95 = vector.shape_cast %94 : vector<1x128xf32> to vector<128xf32>
    %96 = vector.shape_cast %95 : vector<128xf32> to vector<1x128xf32>
    %97 = vector.broadcast %96 : vector<1x128xf32> to vector<16x128xf32>
    %98 = arith.addf %93, %97 : vector<16x128xf32>
    %99 = arith.addf %7, %98 : vector<16x128xf32>
    %c0_51 = arith.constant 0 : index
    %c0_52 = arith.constant 0 : index
    %100 = vector.load %arg15[%c0_51, %c0_52] : memref<1x128xf32, #tpu.memory_space<vmem>>, vector<1x128xf32>
    %101 = vector.shape_cast %100 : vector<1x128xf32> to vector<128xf32>
    %c0_53 = arith.constant 0 : index
    %c0_54 = arith.constant 0 : index
    %102 = vector.load %arg16[%c0_53, %c0_54] : memref<1x128xf32, #tpu.memory_space<vmem>>, vector<1x128xf32>
    %103 = vector.shape_cast %102 : vector<1x128xf32> to vector<128xf32>
    %cst_55 = arith.constant dense<0.000000e+00> : vector<16xf32>
    %104 = vector.multi_reduction <add>, %99, %cst_55 [1] : vector<16x128xf32> to vector<16xf32>
    %105 = vector.shape_cast %104 : vector<16xf32> to vector<16x1xf32>
    %cst_56 = arith.constant 1.280000e+02 : f32
    %106 = vector.broadcast %cst_56 : f32 to vector<16x1xf32>
    %107 = arith.divf %105, %106 : vector<16x1xf32>
    %108 = vector.broadcast %107 : vector<16x1xf32> to vector<16x128xf32>
    %109 = arith.subf %99, %108 : vector<16x128xf32>
    %110 = arith.mulf %109, %109 : vector<16x128xf32>
    %cst_57 = arith.constant dense<0.000000e+00> : vector<16xf32>
    %111 = vector.multi_reduction <add>, %110, %cst_57 [1] : vector<16x128xf32> to vector<16xf32>
    %112 = vector.shape_cast %111 : vector<16xf32> to vector<16x1xf32>
    %cst_58 = arith.constant 1.280000e+02 : f32
    %113 = vector.broadcast %cst_58 : f32 to vector<16x1xf32>
    %114 = arith.divf %112, %113 : vector<16x1xf32>
    %115 = vector.broadcast %107 : vector<16x1xf32> to vector<16x128xf32>
    %116 = arith.subf %99, %115 : vector<16x128xf32>
    %cst_59 = arith.constant 9.99999974E-6 : f32
    %117 = vector.broadcast %cst_59 : f32 to vector<16x1xf32>
    %118 = arith.addf %114, %117 : vector<16x1xf32>
    %119 = math.rsqrt %118 : vector<16x1xf32>
    %120 = vector.broadcast %119 : vector<16x1xf32> to vector<16x128xf32>
    %121 = arith.mulf %116, %120 : vector<16x128xf32>
    %122 = vector.shape_cast %101 : vector<128xf32> to vector<1x128xf32>
    %123 = vector.broadcast %122 : vector<1x128xf32> to vector<16x128xf32>
    %124 = arith.mulf %121, %123 : vector<16x128xf32>
    %125 = vector.shape_cast %103 : vector<128xf32> to vector<1x128xf32>
    %126 = vector.broadcast %125 : vector<1x128xf32> to vector<16x128xf32>
    %127 = arith.addf %124, %126 : vector<16x128xf32>
    %128 = arith.truncf %127 : vector<16x128xf32> to vector<16x128xbf16>
    %c0_60 = arith.constant 0 : index
    %c0_61 = arith.constant 0 : index
    %129 = vector.load %arg11[%c0_60, %c0_61] : memref<128x256xbf16, #tpu.memory_space<vmem>>, vector<128x256xbf16>
    %cst_62 = arith.constant dense<0.000000e+00> : vector<16x256xf32>
    %130 = tpu.matmul %128, %129, %cst_62 {dimension_numbers = #tpu.dot_dimension_numbers<[1], [0], [0], [1], [0, 0, 1, 1], [], []>} : vector<16x128xbf16>, vector<128x256xbf16>, vector<16x256xf32> -> vector<16x256xf32>
    %c0_63 = arith.constant 0 : index
    %c0_64 = arith.constant 0 : index
    %131 = vector.load %arg12[%c0_63, %c0_64] : memref<1x256xf32, #tpu.memory_space<vmem>>, vector<1x256xf32>
    %132 = vector.shape_cast %131 : vector<1x256xf32> to vector<256xf32>
    %133 = vector.shape_cast %132 : vector<256xf32> to vector<1x256xf32>
    %134 = vector.broadcast %133 : vector<1x256xf32> to vector<16x256xf32>
    %135 = arith.addf %130, %134 : vector<16x256xf32>
    %cst_65 = arith.constant 0.000000e+00 : f32
    %136 = vector.broadcast %cst_65 : f32 to vector<16x256xf32>
    %137 = arith.maximumf %135, %136 : vector<16x256xf32>
    %138 = arith.truncf %137 : vector<16x256xf32> to vector<16x256xbf16>
    %c0_66 = arith.constant 0 : index
    %c0_67 = arith.constant 0 : index
    %139 = vector.load %arg13[%c0_66, %c0_67] : memref<256x128xbf16, #tpu.memory_space<vmem>>, vector<256x128xbf16>
    %cst_68 = arith.constant dense<0.000000e+00> : vector<16x128xf32>
    %140 = tpu.matmul %138, %139, %cst_68 {dimension_numbers = #tpu.dot_dimension_numbers<[1], [0], [0], [1], [0, 0, 1, 1], [], []>} : vector<16x256xbf16>, vector<256x128xbf16>, vector<16x128xf32> -> vector<16x128xf32>
    %c0_69 = arith.constant 0 : index
    %c0_70 = arith.constant 0 : index
    %141 = vector.load %arg14[%c0_69, %c0_70] : memref<1x128xf32, #tpu.memory_space<vmem>>, vector<1x128xf32>
    %142 = vector.shape_cast %141 : vector<1x128xf32> to vector<128xf32>
    %143 = vector.shape_cast %142 : vector<128xf32> to vector<1x128xf32>
    %144 = vector.broadcast %143 : vector<1x128xf32> to vector<16x128xf32>
    %145 = arith.addf %140, %144 : vector<16x128xf32>
    %146 = arith.addf %127, %145 : vector<16x128xf32>
    %c0_71 = arith.constant 0 : index
    %c0_72 = arith.constant 0 : index
    %147 = vector.load %arg17[%c0_71, %c0_72] : memref<1x128xf32, #tpu.memory_space<vmem>>, vector<1x128xf32>
    %148 = vector.shape_cast %147 : vector<1x128xf32> to vector<128xf32>
    %c0_73 = arith.constant 0 : index
    %c0_74 = arith.constant 0 : index
    %149 = vector.load %arg18[%c0_73, %c0_74] : memref<1x128xf32, #tpu.memory_space<vmem>>, vector<1x128xf32>
    %150 = vector.shape_cast %149 : vector<1x128xf32> to vector<128xf32>
    %cst_75 = arith.constant dense<0.000000e+00> : vector<16xf32>
    %151 = vector.multi_reduction <add>, %146, %cst_75 [1] : vector<16x128xf32> to vector<16xf32>
    %152 = vector.shape_cast %151 : vector<16xf32> to vector<16x1xf32>
    %cst_76 = arith.constant 1.280000e+02 : f32
    %153 = vector.broadcast %cst_76 : f32 to vector<16x1xf32>
    %154 = arith.divf %152, %153 : vector<16x1xf32>
    %155 = vector.broadcast %154 : vector<16x1xf32> to vector<16x128xf32>
    %156 = arith.subf %146, %155 : vector<16x128xf32>
    %157 = arith.mulf %156, %156 : vector<16x128xf32>
    %cst_77 = arith.constant dense<0.000000e+00> : vector<16xf32>
    %158 = vector.multi_reduction <add>, %157, %cst_77 [1] : vector<16x128xf32> to vector<16xf32>
    %159 = vector.shape_cast %158 : vector<16xf32> to vector<16x1xf32>
    %cst_78 = arith.constant 1.280000e+02 : f32
    %160 = vector.broadcast %cst_78 : f32 to vector<16x1xf32>
    %161 = arith.divf %159, %160 : vector<16x1xf32>
    %162 = vector.broadcast %154 : vector<16x1xf32> to vector<16x128xf32>
    %163 = arith.subf %146, %162 : vector<16x128xf32>
    %cst_79 = arith.constant 9.99999974E-6 : f32
    %164 = vector.broadcast %cst_79 : f32 to vector<16x1xf32>
    %165 = arith.addf %161, %164 : vector<16x1xf32>
    %166 = math.rsqrt %165 : vector<16x1xf32>
    %167 = vector.broadcast %166 : vector<16x1xf32> to vector<16x128xf32>
    %168 = arith.mulf %163, %167 : vector<16x128xf32>
    %169 = vector.shape_cast %148 : vector<128xf32> to vector<1x128xf32>
    %170 = vector.broadcast %169 : vector<1x128xf32> to vector<16x128xf32>
    %171 = arith.mulf %168, %170 : vector<16x128xf32>
    %172 = vector.shape_cast %150 : vector<128xf32> to vector<1x128xf32>
    %173 = vector.broadcast %172 : vector<1x128xf32> to vector<16x128xf32>
    %174 = arith.addf %171, %173 : vector<16x128xf32>
    %c0_80 = arith.constant 0 : index
    %c0_81 = arith.constant 0 : index
    %c0_82 = arith.constant 0 : index
    %175 = vector.load %arg21[%c0_80, %c0_81, %c0_82] : memref<1x16x128xf32, #tpu.memory_space<vmem>>, vector<1x16x128xf32>
    %176 = vector.shape_cast %175 : vector<1x16x128xf32> to vector<16x128xf32>
    %177 = vector.shape_cast %174 : vector<16x128xf32> to vector<1x16x128xf32>
    tpu.vector_store %arg21[%c0_80, %c0_81, %c0_82], %177 {strides = array<i32>} : memref<1x16x128xf32, #tpu.memory_space<vmem>>, vector<1x16x128xf32>,
    return
  }
  func.func @transform_0(%arg0: i32, %arg1: i32) -> (i32, i32, i32) {
    %c0_i32 = arith.constant 0 : i32
    %c0_i32_0 = arith.constant 0 : i32
    %c0_i32_1 = arith.constant 0 : i32
    return %arg0, %c0_i32, %c0_i32_0 : i32, i32, i32
  }
  func.func @transform_1(%arg0: i32, %arg1: i32) -> (i32, i32) {
    %c0_i32 = arith.constant 0 : i32
    %c0_i32_0 = arith.constant 0 : i32
    %c0_i32_1 = arith.constant 0 : i32
    return %c0_i32, %c0_i32_0 : i32, i32
  }
  func.func @transform_2(%arg0: i32, %arg1: i32) -> (i32, i32) {
    %c0_i32 = arith.constant 0 : i32
    %c0_i32_0 = arith.constant 0 : i32
    %c0_i32_1 = arith.constant 0 : i32
    return %c0_i32, %c0_i32_0 : i32, i32
  }
  func.func @transform_3(%arg0: i32, %arg1: i32) -> (i32, i32) {
    %c0_i32 = arith.constant 0 : i32
    %c0_i32_0 = arith.constant 0 : i32
    %c0_i32_1 = arith.constant 0 : i32
    return %c0_i32, %c0_i32_0 : i32, i32
  }
  func.func @transform_4(%arg0: i32, %arg1: i32) -> (i32, i32) {
    %c0_i32 = arith.constant 0 : i32
    %c0_i32_0 = arith.constant 0 : i32
    %c0_i32_1 = arith.constant 0 : i32
    return %c0_i32, %c0_i32_0 : i32, i32
  }
  func.func @transform_5(%arg0: i32, %arg1: i32) -> (i32, i32) {
    %c0_i32 = arith.constant 0 : i32
    %c0_i32_0 = arith.constant 0 : i32
    %c0_i32_1 = arith.constant 0 : i32
    return %c0_i32, %c0_i32_0 : i32, i32
  }
  func.func @transform_6(%arg0: i32, %arg1: i32) -> (i32, i32) {
    %c0_i32 = arith.constant 0 : i32
    %c0_i32_0 = arith.constant 0 : i32
    %c0_i32_1 = arith.constant 0 : i32
    return %c0_i32, %c0_i32_0 : i32, i32
  }
  func.func @transform_7(%arg0: i32, %arg1: i32) -> (i32, i32) {
    %c0_i32 = arith.constant 0 : i32
    %c0_i32_0 = arith.constant 0 : i32
    %c0_i32_1 = arith.constant 0 : i32
    return %c0_i32, %c0_i32_0 : i32, i32
  }
  func.func @transform_8(%arg0: i32, %arg1: i32) -> (i32, i32) {
    %c0_i32 = arith.constant 0 : i32
    %c0_i32_0 = arith.constant 0 : i32
    %c0_i32_1 = arith.constant 0 : i32
    return %c0_i32, %c0_i32_0 : i32, i32
  }
  func.func @transform_9(%arg0: i32, %arg1: i32) -> (i32, i32) {
    %c0_i32 = arith.constant 0 : i32
    %c0_i32_0 = arith.constant 0 : i32
    %c0_i32_1 = arith.constant 0 : i32
    return %c0_i32, %c0_i32_0 : i32, i32
  }
  func.func @transform_10(%arg0: i32, %arg1: i32) -> (i32, i32) {
    %c0_i32 = arith.constant 0 : i32
    %c0_i32_0 = arith.constant 0 : i32
    %c0_i32_1 = arith.constant 0 : i32
    return %c0_i32, %c0_i32_0 : i32, i32
  }
  func.func @transform_11(%arg0: i32, %arg1: i32) -> (i32, i32) {
    %c0_i32 = arith.constant 0 : i32
    %c0_i32_0 = arith.constant 0 : i32
    %c0_i32_1 = arith.constant 0 : i32
    return %c0_i32, %c0_i32_0 : i32, i32
  }
  func.func @transform_12(%arg0: i32, %arg1: i32) -> (i32, i32) {
    %c0_i32 = arith.constant 0 : i32
    %c0_i32_0 = arith.constant 0 : i32
    %c0_i32_1 = arith.constant 0 : i32
    return %c0_i32, %c0_i32_0 : i32, i32
  }
  func.func @transform_13(%arg0: i32, %arg1: i32) -> (i32, i32) {
    %c0_i32 = arith.constant 0 : i32
    %c0_i32_0 = arith.constant 0 : i32
    %c0_i32_1 = arith.constant 0 : i32
    return %c0_i32, %c0_i32_0 : i32, i32
  }
  func.func @transform_14(%arg0: i32, %arg1: i32) -> (i32, i32) {
    %c0_i32 = arith.constant 0 : i32
    %c0_i32_0 = arith.constant 0 : i32
    %c0_i32_1 = arith.constant 0 : i32
    return %c0_i32, %c0_i32_0 : i32, i32
  }
  func.func @transform_15(%arg0: i32, %arg1: i32) -> (i32, i32) {
    %c0_i32 = arith.constant 0 : i32
    %c0_i32_0 = arith.constant 0 : i32
    %c0_i32_1 = arith.constant 0 : i32
    return %c0_i32, %c0_i32_0 : i32, i32
  }
  func.func @transform_16(%arg0: i32, %arg1: i32) -> (i32, i32) {
    %c0_i32 = arith.constant 0 : i32
    %c0_i32_0 = arith.constant 0 : i32
    %c0_i32_1 = arith.constant 0 : i32
    return %c0_i32, %c0_i32_0 : i32, i32
  }
  func.func @transform_17(%arg0: i32, %arg1: i32) -> (i32, i32) {
    %c0_i32 = arith.constant 0 : i32
    %c0_i32_0 = arith.constant 0 : i32
    %c0_i32_1 = arith.constant 0 : i32
    return %c0_i32, %c0_i32_0 : i32, i32
  }
  func.func @transform_18(%arg0: i32, %arg1: i32) -> (i32, i32) {
    %c0_i32 = arith.constant 0 : i32
    %c0_i32_0 = arith.constant 0 : i32
    %c0_i32_1 = arith.constant 0 : i32
    return %c0_i32, %c0_i32_0 : i32, i32
  }
  func.func @transform_19(%arg0: i32, %arg1: i32) -> (i32, i32, i32) {
    %c0_i32 = arith.constant 0 : i32
    %c0_i32_0 = arith.constant 0 : i32
    return %arg0, %arg1, %c0_i32 : i32, i32, i32
  }
}

module attributes {stable_mosaic.version = 11 : i64} {
  func.func @encoder_layer_kernel(%arg0: i32, %arg1: i32, %arg2: memref<1x16x128xf32, #tpu.memory_space<vmem>>, %arg3: memref<128x128xbf16, #tpu.memory_space<vmem>>, %arg4: memref<1x128xf32, #tpu.memory_space<vmem>>, %arg5: memref<128x128xbf16, #tpu.memory_space<vmem>>, %arg6: memref<1x128xf32, #tpu.memory_space<vmem>>, %arg7: memref<128x128xbf16, #tpu.memory_space<vmem>>, %arg8: memref<1x128xf32, #tpu.memory_space<vmem>>, %arg9: memref<128x128xbf16, #tpu.memory_space<vmem>>, %arg10: memref<1x128xf32, #tpu.memory_space<vmem>>, %arg11: memref<128x256xbf16, #tpu.memory_space<vmem>>, %arg12: memref<1x256xf32, #tpu.memory_space<vmem>>, %arg13: memref<256x128xbf16, #tpu.memory_space<vmem>>, %arg14: memref<1x128xf32, #tpu.memory_space<vmem>>, %arg15: memref<1x128xf32, #tpu.memory_space<vmem>>, %arg16: memref<1x128xf32, #tpu.memory_space<vmem>>, %arg17: memref<1x128xf32, #tpu.memory_space<vmem>>, %arg18: memref<1x128xf32, #tpu.memory_space<vmem>>, %arg19: memref<1x128xf32, #tpu.memory_space<vmem>>, %arg20: memref<1x128xf32, #tpu.memory_space<vmem>>, %arg21: memref<1x16x128xf32, #tpu.memory_space<vmem>>, %arg22: memref<16x128xbf16, #tpu.memory_space<vmem>>, %arg23: memref<16x128xbf16, #tpu.memory_space<vmem>>, %arg24: memref<16x128xbf16, #tpu.memory_space<vmem>>) attributes {dimension_semantics = [#tpu.dimension_semantics<parallel>, #tpu.dimension_semantics<arbitrary>], iteration_bounds = array<i64: 2, 1>, scalar_prefetch = 0 : i64, scratch_operands = 3 : i64, tpu.core_type = #tpu.core_type<tc>, window_params = [{transform_indices = @transform_0, window_bounds = array<i64: 1, 16, 128>}, {pipeline_mode = #tpu.pipeline_mode<synchronous>, transform_indices = @transform_1, window_bounds = array<i64: 128, 128>}, {pipeline_mode = #tpu.pipeline_mode<synchronous>, transform_indices = @transform_2, window_bounds = array<i64: 1, 128>}, {pipeline_mode = #tpu.pipeline_mode<synchronous>, transform_indices = @transform_3, window_bounds = array<i64: 128, 128>}, {pipeline_mode = #tpu.pipeline_mode<synchronous>, transform_indices = @transform_4, window_bounds = array<i64: 1, 128>}, {pipeline_mode = #tpu.pipeline_mode<synchronous>, transform_indices = @transform_5, window_bounds = array<i64: 128, 128>}, {pipeline_mode = #tpu.pipeline_mode<synchronous>, transform_indices = @transform_6, window_bounds = array<i64: 1, 128>}, {pipeline_mode = #tpu.pipeline_mode<synchronous>, transform_indices = @transform_7, window_bounds = array<i64: 128, 128>}, {pipeline_mode = #tpu.pipeline_mode<synchronous>, transform_indices = @transform_8, window_bounds = array<i64: 1, 128>}, {pipeline_mode = #tpu.pipeline_mode<synchronous>, transform_indices = @transform_9, window_bounds = array<i64: 128, 256>}, {pipeline_mode = #tpu.pipeline_mode<synchronous>, transform_indices = @transform_10, window_bounds = array<i64: 1, 256>}, {pipeline_mode = #tpu.pipeline_mode<synchronous>, transform_indices = @transform_11, window_bounds = array<i64: 256, 128>}, {pipeline_mode = #tpu.pipeline_mode<synchronous>, transform_indices = @transform_12, window_bounds = array<i64: 1, 128>}, {pipeline_mode = #tpu.pipeline_mode<synchronous>, transform_indices = @transform_13, window_bounds = array<i64: 1, 128>}, {pipeline_mode = #tpu.pipeline_mode<synchronous>, transform_indices = @transform_14, window_bounds = array<i64: 1, 128>}, {pipeline_mode = #tpu.pipeline_mode<synchronous>, transform_indices = @transform_15, window_bounds = array<i64: 1, 128>}, {pipeline_mode = #tpu.pipeline_mode<synchronous>, transform_indices = @transform_16, window_bounds = array<i64: 1, 128>}, {pipeline_mode = #tpu.pipeline_mode<synchronous>, transform_indices = @transform_17, window_bounds = array<i64: 1, 128>}, {pipeline_mode = #tpu.pipeline_mode<synchronous>, transform_indices = @transform_18, window_bounds = array<i64: 1, 128>}, {transform_indices = @transform_19, window_bounds = array<i64: 1, 16, 128>}]} {
    %c0_i32 = arith.constant 0 : i32
    %0 = arith.cmpi eq, %arg1, %c0_i32 : i32
    %1 = arith.extui %0 : i1 to i32
    %c0_i32_0 = arith.constant 0 : i32
    %2 = arith.cmpi ne, %1, %c0_i32_0 : i32
    scf.if %2 {
      %c0_92 = arith.constant 0 : index
      %c0_93 = arith.constant 0 : index
      %c0_94 = arith.constant 0 : index
      %206 = vector.load %arg2[%c0_92, %c0_93, %c0_94] : memref<1x16x128xf32, #tpu.memory_space<vmem>>, vector<1x16x128xf32>
      %207 = vector.shape_cast %206 : vector<1x16x128xf32> to vector<16x128xf32>
      %208 = arith.truncf %207 : vector<16x128xf32> to vector<16x128xbf16>
      %c0_95 = arith.constant 0 : index
      %c0_96 = arith.constant 0 : index
      %209 = vector.load %arg5[%c0_95, %c0_96] : memref<128x128xbf16, #tpu.memory_space<vmem>>, vector<128x128xbf16>
      %cst_97 = arith.constant dense<0.000000e+00> : vector<16x128xf32>
      %210 = tpu.matmul %208, %209, %cst_97 {dimension_numbers = #tpu.dot_dimension_numbers<[1], [0], [0], [1], [0, 0, 1, 1], [], []>} : vector<16x128xbf16>, vector<128x128xbf16>, vector<16x128xf32> -> vector<16x128xf32>
      %c0_98 = arith.constant 0 : index
      %c0_99 = arith.constant 0 : index
      %211 = vector.load %arg6[%c0_98, %c0_99] : memref<1x128xf32, #tpu.memory_space<vmem>>, vector<1x128xf32>
      %212 = vector.shape_cast %211 : vector<1x128xf32> to vector<128xf32>
      %213 = vector.shape_cast %212 : vector<128xf32> to vector<1x128xf32>
      %214 = vector.broadcast %213 : vector<1x128xf32> to vector<16x128xf32>
      %215 = arith.addf %210, %214 : vector<16x128xf32>
      %c0_100 = arith.constant 0 : index
      %c0_101 = arith.constant 0 : index
      %216 = vector.load %arg7[%c0_100, %c0_101] : memref<128x128xbf16, #tpu.memory_space<vmem>>, vector<128x128xbf16>
      %cst_102 = arith.constant dense<0.000000e+00> : vector<16x128xf32>
      %217 = tpu.matmul %208, %216, %cst_102 {dimension_numbers = #tpu.dot_dimension_numbers<[1], [0], [0], [1], [0, 0, 1, 1], [], []>} : vector<16x128xbf16>, vector<128x128xbf16>, vector<16x128xf32> -> vector<16x128xf32>
      %c0_103 = arith.constant 0 : index
      %c0_104 = arith.constant 0 : index
      %218 = vector.load %arg8[%c0_103, %c0_104] : memref<1x128xf32, #tpu.memory_space<vmem>>, vector<1x128xf32>
      %219 = vector.shape_cast %218 : vector<1x128xf32> to vector<128xf32>
      %220 = vector.shape_cast %219 : vector<128xf32> to vector<1x128xf32>
      %221 = vector.broadcast %220 : vector<1x128xf32> to vector<16x128xf32>
      %222 = arith.addf %217, %221 : vector<16x128xf32>
      %223 = arith.truncf %215 : vector<16x128xf32> to vector<16x128xbf16>
      %c0_105 = arith.constant 0 : index
      %c0_106 = arith.constant 0 : index
      %224 = vector.load %arg22[%c0_105, %c0_106] : memref<16x128xbf16, #tpu.memory_space<vmem>>, vector<16x128xbf16>
      tpu.vector_store %arg22[%c0_105, %c0_106], %223 {strides = array<i32>} : memref<16x128xbf16, #tpu.memory_space<vmem>>, vector<16x128xbf16>,
      %225 = arith.truncf %222 : vector<16x128xf32> to vector<16x128xbf16>
      %c0_107 = arith.constant 0 : index
      %c0_108 = arith.constant 0 : index
      %226 = vector.load %arg23[%c0_107, %c0_108] : memref<16x128xbf16, #tpu.memory_space<vmem>>, vector<16x128xbf16>
      tpu.vector_store %arg23[%c0_107, %c0_108], %225 {strides = array<i32>} : memref<16x128xbf16, #tpu.memory_space<vmem>>, vector<16x128xbf16>,
    } else {
    }
    %c16_i32 = arith.constant 16 : i32
    %3 = arith.muli %arg1, %c16_i32 : i32
    %4 = tpu.assume_multiple %3, 16 : i32
    %c0 = arith.constant 0 : index
    %5 = arith.index_cast %4 : i32 to index
    %c0_1 = arith.constant 0 : index
    %6 = vector.load %arg2[%c0, %5, %c0_1] : memref<1x16x128xf32, #tpu.memory_space<vmem>>, vector<1x16x128xf32>
    %7 = vector.shape_cast %6 : vector<1x16x128xf32> to vector<16x128xf32>
    %8 = arith.truncf %7 : vector<16x128xf32> to vector<16x128xbf16>
    %c0_2 = arith.constant 0 : index
    %c0_3 = arith.constant 0 : index
    %9 = vector.load %arg3[%c0_2, %c0_3] : memref<128x128xbf16, #tpu.memory_space<vmem>>, vector<128x128xbf16>
    %cst = arith.constant dense<0.000000e+00> : vector<16x128xf32>
    %10 = tpu.matmul %8, %9, %cst {dimension_numbers = #tpu.dot_dimension_numbers<[1], [0], [0], [1], [0, 0, 1, 1], [], []>} : vector<16x128xbf16>, vector<128x128xbf16>, vector<16x128xf32> -> vector<16x128xf32>
    %c0_4 = arith.constant 0 : index
    %c0_5 = arith.constant 0 : index
    %11 = vector.load %arg4[%c0_4, %c0_5] : memref<1x128xf32, #tpu.memory_space<vmem>>, vector<1x128xf32>
    %12 = vector.shape_cast %11 : vector<1x128xf32> to vector<128xf32>
    %13 = vector.shape_cast %12 : vector<128xf32> to vector<1x128xf32>
    %14 = vector.broadcast %13 : vector<1x128xf32> to vector<16x128xf32>
    %15 = arith.addf %10, %14 : vector<16x128xf32>
    %cst_6 = arith.constant 0.176776692 : f32
    %16 = vector.broadcast %cst_6 : f32 to vector<16x128xf32>
    %17 = arith.mulf %15, %16 : vector<16x128xf32>
    %18 = arith.truncf %17 : vector<16x128xf32> to vector<16x128xbf16>
    %19 = vector.extract_strided_slice %18 {offsets = [0, 0], sizes = [16, 32], strides = [1, 1]} : vector<16x128xbf16> to vector<16x32xbf16>
    %c0_7 = arith.constant 0 : index
    %c0_8 = arith.constant 0 : index
    %20 = vector.load %arg22[%c0_7, %c0_8] : memref<16x128xbf16, #tpu.memory_space<vmem>>, vector<16x32xbf16>
    %c0_9 = arith.constant 0 : index
    %c0_10 = arith.constant 0 : index
    %21 = vector.load %arg23[%c0_9, %c0_10] : memref<16x128xbf16, #tpu.memory_space<vmem>>, vector<16x32xbf16>
    %cst_11 = arith.constant dense<0.000000e+00> : vector<16x16xf32>
    %22 = tpu.matmul %19, %20, %cst_11 {dimension_numbers = #tpu.dot_dimension_numbers<[1], [1], [0], [0], [0, 0, 1, 0], [], []>} : vector<16x32xbf16>, vector<16x32xbf16>, vector<16x16xf32> -> vector<16x16xf32>
    %cst_12 = arith.constant dense<0xFF800000> : vector<16xf32>
    %23 = vector.multi_reduction <maximumf>, %22, %cst_12 [1] : vector<16x16xf32> to vector<16xf32>
    %24 = vector.shape_cast %23 : vector<16xf32> to vector<16x1xf32>
    %25 = vector.broadcast %24 : vector<16x1xf32> to vector<16x16xf32>
    %26 = arith.subf %22, %25 : vector<16x16xf32>
    %27 = math.exp %26 : vector<16x16xf32>
    %cst_13 = arith.constant dense<0.000000e+00> : vector<16xf32>
    %28 = vector.multi_reduction <add>, %27, %cst_13 [1] : vector<16x16xf32> to vector<16xf32>
    %29 = vector.shape_cast %28 : vector<16xf32> to vector<16x1xf32>
    %30 = tpu.reciprocal %29 {approx = true} : vector<16x1xf32> -> vector<16x1xf32>
    %31 = vector.broadcast %30 : vector<16x1xf32> to vector<16x16xf32>
    %32 = arith.mulf %27, %31 : vector<16x16xf32>
    %33 = arith.truncf %32 : vector<16x16xf32> to vector<16x16xbf16>
    %cst_14 = arith.constant dense<0.000000e+00> : vector<16x32xf32>
    %34 = tpu.matmul %33, %21, %cst_14 {dimension_numbers = #tpu.dot_dimension_numbers<[1], [0], [0], [1], [0, 0, 1, 1], [], []>} : vector<16x16xbf16>, vector<16x32xbf16>, vector<16x32xf32> -> vector<16x32xf32>
    %35 = arith.truncf %34 : vector<16x32xf32> to vector<16x32xbf16>
    %c0_15 = arith.constant 0 : index
    %c0_16 = arith.constant 0 : index
    %36 = vector.load %arg24[%c0_15, %c0_16] : memref<16x128xbf16, #tpu.memory_space<vmem>>, vector<16x32xbf16>
    tpu.vector_store %arg24[%c0_15, %c0_16], %35 {strides = array<i32>} : memref<16x128xbf16, #tpu.memory_space<vmem>>, vector<16x32xbf16>,
    %37 = vector.extract_strided_slice %18 {offsets = [0, 32], sizes = [16, 32], strides = [1, 1]} : vector<16x128xbf16> to vector<16x32xbf16>
    %c0_17 = arith.constant 0 : index
    %c32 = arith.constant 32 : index
    %38 = vector.load %arg22[%c0_17, %c32] : memref<16x128xbf16, #tpu.memory_space<vmem>>, vector<16x32xbf16>
    %c0_18 = arith.constant 0 : index
    %c32_19 = arith.constant 32 : index
    %39 = vector.load %arg23[%c0_18, %c32_19] : memref<16x128xbf16, #tpu.memory_space<vmem>>, vector<16x32xbf16>
    %cst_20 = arith.constant dense<0.000000e+00> : vector<16x16xf32>
    %40 = tpu.matmul %37, %38, %cst_20 {dimension_numbers = #tpu.dot_dimension_numbers<[1], [1], [0], [0], [0, 0, 1, 0], [], []>} : vector<16x32xbf16>, vector<16x32xbf16>, vector<16x16xf32> -> vector<16x16xf32>
    %cst_21 = arith.constant dense<0xFF800000> : vector<16xf32>
    %41 = vector.multi_reduction <maximumf>, %40, %cst_21 [1] : vector<16x16xf32> to vector<16xf32>
    %42 = vector.shape_cast %41 : vector<16xf32> to vector<16x1xf32>
    %43 = vector.broadcast %42 : vector<16x1xf32> to vector<16x16xf32>
    %44 = arith.subf %40, %43 : vector<16x16xf32>
    %45 = math.exp %44 : vector<16x16xf32>
    %cst_22 = arith.constant dense<0.000000e+00> : vector<16xf32>
    %46 = vector.multi_reduction <add>, %45, %cst_22 [1] : vector<16x16xf32> to vector<16xf32>
    %47 = vector.shape_cast %46 : vector<16xf32> to vector<16x1xf32>
    %48 = tpu.reciprocal %47 {approx = true} : vector<16x1xf32> -> vector<16x1xf32>
    %49 = vector.broadcast %48 : vector<16x1xf32> to vector<16x16xf32>
    %50 = arith.mulf %45, %49 : vector<16x16xf32>
    %51 = arith.truncf %50 : vector<16x16xf32> to vector<16x16xbf16>
    %cst_23 = arith.constant dense<0.000000e+00> : vector<16x32xf32>
    %52 = tpu.matmul %51, %39, %cst_23 {dimension_numbers = #tpu.dot_dimension_numbers<[1], [0], [0], [1], [0, 0, 1, 1], [], []>} : vector<16x16xbf16>, vector<16x32xbf16>, vector<16x32xf32> -> vector<16x32xf32>
    %53 = arith.truncf %52 : vector<16x32xf32> to vector<16x32xbf16>
    %c0_24 = arith.constant 0 : index
    %c32_25 = arith.constant 32 : index
    %54 = vector.load %arg24[%c0_24, %c32_25] : memref<16x128xbf16, #tpu.memory_space<vmem>>, vector<16x32xbf16>
    tpu.vector_store %arg24[%c0_24, %c32_25], %53 {strides = array<i32>} : memref<16x128xbf16, #tpu.memory_space<vmem>>, vector<16x32xbf16>,
    %55 = vector.extract_strided_slice %18 {offsets = [0, 64], sizes = [16, 32], strides = [1, 1]} : vector<16x128xbf16> to vector<16x32xbf16>
    %c0_26 = arith.constant 0 : index
    %c64 = arith.constant 64 : index
    %56 = vector.load %arg22[%c0_26, %c64] : memref<16x128xbf16, #tpu.memory_space<vmem>>, vector<16x32xbf16>
    %c0_27 = arith.constant 0 : index
    %c64_28 = arith.constant 64 : index
    %57 = vector.load %arg23[%c0_27, %c64_28] : memref<16x128xbf16, #tpu.memory_space<vmem>>, vector<16x32xbf16>
    %cst_29 = arith.constant dense<0.000000e+00> : vector<16x16xf32>
    %58 = tpu.matmul %55, %56, %cst_29 {dimension_numbers = #tpu.dot_dimension_numbers<[1], [1], [0], [0], [0, 0, 1, 0], [], []>} : vector<16x32xbf16>, vector<16x32xbf16>, vector<16x16xf32> -> vector<16x16xf32>
    %cst_30 = arith.constant dense<0xFF800000> : vector<16xf32>
    %59 = vector.multi_reduction <maximumf>, %58, %cst_30 [1] : vector<16x16xf32> to vector<16xf32>
    %60 = vector.shape_cast %59 : vector<16xf32> to vector<16x1xf32>
    %61 = vector.broadcast %60 : vector<16x1xf32> to vector<16x16xf32>
    %62 = arith.subf %58, %61 : vector<16x16xf32>
    %63 = math.exp %62 : vector<16x16xf32>
    %cst_31 = arith.constant dense<0.000000e+00> : vector<16xf32>
    %64 = vector.multi_reduction <add>, %63, %cst_31 [1] : vector<16x16xf32> to vector<16xf32>
    %65 = vector.shape_cast %64 : vector<16xf32> to vector<16x1xf32>
    %66 = tpu.reciprocal %65 {approx = true} : vector<16x1xf32> -> vector<16x1xf32>
    %67 = vector.broadcast %66 : vector<16x1xf32> to vector<16x16xf32>
    %68 = arith.mulf %63, %67 : vector<16x16xf32>
    %69 = arith.truncf %68 : vector<16x16xf32> to vector<16x16xbf16>
    %cst_32 = arith.constant dense<0.000000e+00> : vector<16x32xf32>
    %70 = tpu.matmul %69, %57, %cst_32 {dimension_numbers = #tpu.dot_dimension_numbers<[1], [0], [0], [1], [0, 0, 1, 1], [], []>} : vector<16x16xbf16>, vector<16x32xbf16>, vector<16x32xf32> -> vector<16x32xf32>
    %71 = arith.truncf %70 : vector<16x32xf32> to vector<16x32xbf16>
    %c0_33 = arith.constant 0 : index
    %c64_34 = arith.constant 64 : index
    %72 = vector.load %arg24[%c0_33, %c64_34] : memref<16x128xbf16, #tpu.memory_space<vmem>>, vector<16x32xbf16>
    tpu.vector_store %arg24[%c0_33, %c64_34], %71 {strides = array<i32>} : memref<16x128xbf16, #tpu.memory_space<vmem>>, vector<16x32xbf16>,
    %73 = vector.extract_strided_slice %18 {offsets = [0, 96], sizes = [16, 32], strides = [1, 1]} : vector<16x128xbf16> to vector<16x32xbf16>
    %c0_35 = arith.constant 0 : index
    %c96 = arith.constant 96 : index
    %74 = vector.load %arg22[%c0_35, %c96] : memref<16x128xbf16, #tpu.memory_space<vmem>>, vector<16x32xbf16>
    %c0_36 = arith.constant 0 : index
    %c96_37 = arith.constant 96 : index
    %75 = vector.load %arg23[%c0_36, %c96_37] : memref<16x128xbf16, #tpu.memory_space<vmem>>, vector<16x32xbf16>
    %cst_38 = arith.constant dense<0.000000e+00> : vector<16x16xf32>
    %76 = tpu.matmul %73, %74, %cst_38 {dimension_numbers = #tpu.dot_dimension_numbers<[1], [1], [0], [0], [0, 0, 1, 0], [], []>} : vector<16x32xbf16>, vector<16x32xbf16>, vector<16x16xf32> -> vector<16x16xf32>
    %cst_39 = arith.constant dense<0xFF800000> : vector<16xf32>
    %77 = vector.multi_reduction <maximumf>, %76, %cst_39 [1] : vector<16x16xf32> to vector<16xf32>
    %78 = vector.shape_cast %77 : vector<16xf32> to vector<16x1xf32>
    %79 = vector.broadcast %78 : vector<16x1xf32> to vector<16x16xf32>
    %80 = arith.subf %76, %79 : vector<16x16xf32>
    %81 = math.exp %80 : vector<16x16xf32>
    %cst_40 = arith.constant dense<0.000000e+00> : vector<16xf32>
    %82 = vector.multi_reduction <add>, %81, %cst_40 [1] : vector<16x16xf32> to vector<16xf32>
    %83 = vector.shape_cast %82 : vector<16xf32> to vector<16x1xf32>
    %84 = tpu.reciprocal %83 {approx = true} : vector<16x1xf32> -> vector<16x1xf32>
    %85 = vector.broadcast %84 : vector<16x1xf32> to vector<16x16xf32>
    %86 = arith.mulf %81, %85 : vector<16x16xf32>
    %87 = arith.truncf %86 : vector<16x16xf32> to vector<16x16xbf16>
    %cst_41 = arith.constant dense<0.000000e+00> : vector<16x32xf32>
    %88 = tpu.matmul %87, %75, %cst_41 {dimension_numbers = #tpu.dot_dimension_numbers<[1], [0], [0], [1], [0, 0, 1, 1], [], []>} : vector<16x16xbf16>, vector<16x32xbf16>, vector<16x32xf32> -> vector<16x32xf32>
    %89 = arith.truncf %88 : vector<16x32xf32> to vector<16x32xbf16>
    %c0_42 = arith.constant 0 : index
    %c96_43 = arith.constant 96 : index
    %90 = vector.load %arg24[%c0_42, %c96_43] : memref<16x128xbf16, #tpu.memory_space<vmem>>, vector<16x32xbf16>
    tpu.vector_store %arg24[%c0_42, %c96_43], %89 {strides = array<i32>} : memref<16x128xbf16, #tpu.memory_space<vmem>>, vector<16x32xbf16>,
    %c0_44 = arith.constant 0 : index
    %c0_45 = arith.constant 0 : index
    %91 = vector.load %arg24[%c0_44, %c0_45] : memref<16x128xbf16, #tpu.memory_space<vmem>>, vector<16x128xbf16>
    %c0_46 = arith.constant 0 : index
    %c0_47 = arith.constant 0 : index
    %92 = vector.load %arg9[%c0_46, %c0_47] : memref<128x128xbf16, #tpu.memory_space<vmem>>, vector<128x128xbf16>
    %cst_48 = arith.constant dense<0.000000e+00> : vector<16x128xf32>
    %93 = tpu.matmul %91, %92, %cst_48 {dimension_numbers = #tpu.dot_dimension_numbers<[1], [0], [0], [1], [0, 0, 1, 1], [], []>} : vector<16x128xbf16>, vector<128x128xbf16>, vector<16x128xf32> -> vector<16x128xf32>
    %c0_49 = arith.constant 0 : index
    %c0_50 = arith.constant 0 : index
    %94 = vector.load %arg10[%c0_49, %c0_50] : memref<1x128xf32, #tpu.memory_space<vmem>>, vector<1x128xf32>
    %95 = vector.shape_cast %94 : vector<1x128xf32> to vector<128xf32>
    %96 = vector.shape_cast %95 : vector<128xf32> to vector<1x128xf32>
    %97 = vector.broadcast %96 : vector<1x128xf32> to vector<16x128xf32>
    %98 = arith.addf %93, %97 : vector<16x128xf32>
    %99 = arith.addf %7, %98 : vector<16x128xf32>
    %c0_51 = arith.constant 0 : index
    %c0_52 = arith.constant 0 : index
    %100 = vector.load %arg15[%c0_51, %c0_52] : memref<1x128xf32, #tpu.memory_space<vmem>>, vector<1x128xf32>
    %101 = vector.shape_cast %100 : vector<1x128xf32> to vector<128xf32>
    %c0_53 = arith.constant 0 : index
    %c0_54 = arith.constant 0 : index
    %102 = vector.load %arg16[%c0_53, %c0_54] : memref<1x128xf32, #tpu.memory_space<vmem>>, vector<1x128xf32>
    %103 = vector.shape_cast %102 : vector<1x128xf32> to vector<128xf32>
    %cst_55 = arith.constant dense<0.000000e+00> : vector<16xf32>
    %104 = vector.multi_reduction <add>, %99, %cst_55 [1] : vector<16x128xf32> to vector<16xf32>
    %105 = vector.shape_cast %104 : vector<16xf32> to vector<16x1xf32>
    %cst_56 = arith.constant 1.280000e+02 : f32
    %106 = vector.broadcast %cst_56 : f32 to vector<16x1xf32>
    %107 = arith.divf %105, %106 : vector<16x1xf32>
    %108 = vector.broadcast %107 : vector<16x1xf32> to vector<16x128xf32>
    %109 = arith.subf %99, %108 : vector<16x128xf32>
    %110 = arith.mulf %109, %109 : vector<16x128xf32>
    %cst_57 = arith.constant dense<0.000000e+00> : vector<16xf32>
    %111 = vector.multi_reduction <add>, %110, %cst_57 [1] : vector<16x128xf32> to vector<16xf32>
    %112 = vector.shape_cast %111 : vector<16xf32> to vector<16x1xf32>
    %cst_58 = arith.constant 1.280000e+02 : f32
    %113 = vector.broadcast %cst_58 : f32 to vector<16x1xf32>
    %114 = arith.divf %112, %113 : vector<16x1xf32>
    %115 = vector.broadcast %107 : vector<16x1xf32> to vector<16x128xf32>
    %116 = arith.subf %99, %115 : vector<16x128xf32>
    %cst_59 = arith.constant 9.99999974E-6 : f32
    %117 = vector.broadcast %cst_59 : f32 to vector<16x1xf32>
    %118 = arith.addf %114, %117 : vector<16x1xf32>
    %119 = math.rsqrt %118 : vector<16x1xf32>
    %120 = vector.broadcast %119 : vector<16x1xf32> to vector<16x128xf32>
    %121 = arith.mulf %116, %120 : vector<16x128xf32>
    %122 = vector.shape_cast %101 : vector<128xf32> to vector<1x128xf32>
    %123 = vector.broadcast %122 : vector<1x128xf32> to vector<16x128xf32>
    %124 = arith.mulf %121, %123 : vector<16x128xf32>
    %125 = vector.shape_cast %103 : vector<128xf32> to vector<1x128xf32>
    %126 = vector.broadcast %125 : vector<1x128xf32> to vector<16x128xf32>
    %127 = arith.addf %124, %126 : vector<16x128xf32>
    %128 = arith.truncf %127 : vector<16x128xf32> to vector<16x128xbf16>
    %c0_60 = arith.constant 0 : index
    %c0_61 = arith.constant 0 : index
    %129 = vector.load %arg11[%c0_60, %c0_61] : memref<128x256xbf16, #tpu.memory_space<vmem>>, vector<128x256xbf16>
    %cst_62 = arith.constant dense<0.000000e+00> : vector<16x256xf32>
    %130 = tpu.matmul %128, %129, %cst_62 {dimension_numbers = #tpu.dot_dimension_numbers<[1], [0], [0], [1], [0, 0, 1, 1], [], []>} : vector<16x128xbf16>, vector<128x256xbf16>, vector<16x256xf32> -> vector<16x256xf32>
    %c0_63 = arith.constant 0 : index
    %c0_64 = arith.constant 0 : index
    %131 = vector.load %arg12[%c0_63, %c0_64] : memref<1x256xf32, #tpu.memory_space<vmem>>, vector<1x256xf32>
    %132 = vector.shape_cast %131 : vector<1x256xf32> to vector<256xf32>
    %133 = vector.shape_cast %132 : vector<256xf32> to vector<1x256xf32>
    %134 = vector.broadcast %133 : vector<1x256xf32> to vector<16x256xf32>
    %135 = arith.addf %130, %134 : vector<16x256xf32>
    %cst_65 = arith.constant 0.000000e+00 : f32
    %136 = vector.broadcast %cst_65 : f32 to vector<16x256xf32>
    %137 = arith.maximumf %135, %136 : vector<16x256xf32>
    %138 = arith.truncf %137 : vector<16x256xf32> to vector<16x256xbf16>
    %c0_66 = arith.constant 0 : index
    %c0_67 = arith.constant 0 : index
    %139 = vector.load %arg13[%c0_66, %c0_67] : memref<256x128xbf16, #tpu.memory_space<vmem>>, vector<256x128xbf16>
    %cst_68 = arith.constant dense<0.000000e+00> : vector<16x128xf32>
    %140 = tpu.matmul %138, %139, %cst_68 {dimension_numbers = #tpu.dot_dimension_numbers<[1], [0], [0], [1], [0, 0, 1, 1], [], []>} : vector<16x256xbf16>, vector<256x128xbf16>, vector<16x128xf32> -> vector<16x128xf32>
    %c0_69 = arith.constant 0 : index
    %c0_70 = arith.constant 0 : index
    %141 = vector.load %arg14[%c0_69, %c0_70] : memref<1x128xf32, #tpu.memory_space<vmem>>, vector<1x128xf32>
    %142 = vector.shape_cast %141 : vector<1x128xf32> to vector<128xf32>
    %143 = vector.shape_cast %142 : vector<128xf32> to vector<1x128xf32>
    %144 = vector.broadcast %143 : vector<1x128xf32> to vector<16x128xf32>
    %145 = arith.addf %140, %144 : vector<16x128xf32>
    %146 = arith.addf %127, %145 : vector<16x128xf32>
    %c0_71 = arith.constant 0 : index
    %c0_72 = arith.constant 0 : index
    %147 = vector.load %arg17[%c0_71, %c0_72] : memref<1x128xf32, #tpu.memory_space<vmem>>, vector<1x128xf32>
    %148 = vector.shape_cast %147 : vector<1x128xf32> to vector<128xf32>
    %c0_73 = arith.constant 0 : index
    %c0_74 = arith.constant 0 : index
    %149 = vector.load %arg18[%c0_73, %c0_74] : memref<1x128xf32, #tpu.memory_space<vmem>>, vector<1x128xf32>
    %150 = vector.shape_cast %149 : vector<1x128xf32> to vector<128xf32>
    %cst_75 = arith.constant dense<0.000000e+00> : vector<16xf32>
    %151 = vector.multi_reduction <add>, %146, %cst_75 [1] : vector<16x128xf32> to vector<16xf32>
    %152 = vector.shape_cast %151 : vector<16xf32> to vector<16x1xf32>
    %cst_76 = arith.constant 1.280000e+02 : f32
    %153 = vector.broadcast %cst_76 : f32 to vector<16x1xf32>
    %154 = arith.divf %152, %153 : vector<16x1xf32>
    %155 = vector.broadcast %154 : vector<16x1xf32> to vector<16x128xf32>
    %156 = arith.subf %146, %155 : vector<16x128xf32>
    %157 = arith.mulf %156, %156 : vector<16x128xf32>
    %cst_77 = arith.constant dense<0.000000e+00> : vector<16xf32>
    %158 = vector.multi_reduction <add>, %157, %cst_77 [1] : vector<16x128xf32> to vector<16xf32>
    %159 = vector.shape_cast %158 : vector<16xf32> to vector<16x1xf32>
    %cst_78 = arith.constant 1.280000e+02 : f32
    %160 = vector.broadcast %cst_78 : f32 to vector<16x1xf32>
    %161 = arith.divf %159, %160 : vector<16x1xf32>
    %162 = vector.broadcast %154 : vector<16x1xf32> to vector<16x128xf32>
    %163 = arith.subf %146, %162 : vector<16x128xf32>
    %cst_79 = arith.constant 9.99999974E-6 : f32
    %164 = vector.broadcast %cst_79 : f32 to vector<16x1xf32>
    %165 = arith.addf %161, %164 : vector<16x1xf32>
    %166 = math.rsqrt %165 : vector<16x1xf32>
    %167 = vector.broadcast %166 : vector<16x1xf32> to vector<16x128xf32>
    %168 = arith.mulf %163, %167 : vector<16x128xf32>
    %169 = vector.shape_cast %148 : vector<128xf32> to vector<1x128xf32>
    %170 = vector.broadcast %169 : vector<1x128xf32> to vector<16x128xf32>
    %171 = arith.mulf %168, %170 : vector<16x128xf32>
    %172 = vector.shape_cast %150 : vector<128xf32> to vector<1x128xf32>
    %173 = vector.broadcast %172 : vector<1x128xf32> to vector<16x128xf32>
    %174 = arith.addf %171, %173 : vector<16x128xf32>
    %c0_80 = arith.constant 0 : index
    %c0_81 = arith.constant 0 : index
    %175 = vector.load %arg19[%c0_80, %c0_81] : memref<1x128xf32, #tpu.memory_space<vmem>>, vector<1x128xf32>
    %176 = vector.shape_cast %175 : vector<1x128xf32> to vector<128xf32>
    %c0_82 = arith.constant 0 : index
    %c0_83 = arith.constant 0 : index
    %177 = vector.load %arg20[%c0_82, %c0_83] : memref<1x128xf32, #tpu.memory_space<vmem>>, vector<1x128xf32>
    %178 = vector.shape_cast %177 : vector<1x128xf32> to vector<128xf32>
    %cst_84 = arith.constant dense<0.000000e+00> : vector<16xf32>
    %179 = vector.multi_reduction <add>, %174, %cst_84 [1] : vector<16x128xf32> to vector<16xf32>
    %180 = vector.shape_cast %179 : vector<16xf32> to vector<16x1xf32>
    %cst_85 = arith.constant 1.280000e+02 : f32
    %181 = vector.broadcast %cst_85 : f32 to vector<16x1xf32>
    %182 = arith.divf %180, %181 : vector<16x1xf32>
    %183 = vector.broadcast %182 : vector<16x1xf32> to vector<16x128xf32>
    %184 = arith.subf %174, %183 : vector<16x128xf32>
    %185 = arith.mulf %184, %184 : vector<16x128xf32>
    %cst_86 = arith.constant dense<0.000000e+00> : vector<16xf32>
    %186 = vector.multi_reduction <add>, %185, %cst_86 [1] : vector<16x128xf32> to vector<16xf32>
    %187 = vector.shape_cast %186 : vector<16xf32> to vector<16x1xf32>
    %cst_87 = arith.constant 1.280000e+02 : f32
    %188 = vector.broadcast %cst_87 : f32 to vector<16x1xf32>
    %189 = arith.divf %187, %188 : vector<16x1xf32>
    %190 = vector.broadcast %182 : vector<16x1xf32> to vector<16x128xf32>
    %191 = arith.subf %174, %190 : vector<16x128xf32>
    %cst_88 = arith.constant 9.99999974E-6 : f32
    %192 = vector.broadcast %cst_88 : f32 to vector<16x1xf32>
    %193 = arith.addf %189, %192 : vector<16x1xf32>
    %194 = math.rsqrt %193 : vector<16x1xf32>
    %195 = vector.broadcast %194 : vector<16x1xf32> to vector<16x128xf32>
    %196 = arith.mulf %191, %195 : vector<16x128xf32>
    %197 = vector.shape_cast %176 : vector<128xf32> to vector<1x128xf32>
    %198 = vector.broadcast %197 : vector<1x128xf32> to vector<16x128xf32>
    %199 = arith.mulf %196, %198 : vector<16x128xf32>
    %200 = vector.shape_cast %178 : vector<128xf32> to vector<1x128xf32>
    %201 = vector.broadcast %200 : vector<1x128xf32> to vector<16x128xf32>
    %202 = arith.addf %199, %201 : vector<16x128xf32>
    %c0_89 = arith.constant 0 : index
    %c0_90 = arith.constant 0 : index
    %c0_91 = arith.constant 0 : index
    %203 = vector.load %arg21[%c0_89, %c0_90, %c0_91] : memref<1x16x128xf32, #tpu.memory_space<vmem>>, vector<1x16x128xf32>
    %204 = vector.shape_cast %203 : vector<1x16x128xf32> to vector<16x128xf32>
    %205 = vector.shape_cast %202 : vector<16x128xf32> to vector<1x16x128xf32>
    tpu.vector_store %arg21[%c0_89, %c0_90, %c0_91], %205 {strides = array<i32>} : memref<1x16x128xf32, #tpu.memory_space<vmem>>, vector<1x16x128xf32>,
    return
  }
  func.func @transform_0(%arg0: i32, %arg1: i32) -> (i32, i32, i32) {
    %c0_i32 = arith.constant 0 : i32
    %c0_i32_0 = arith.constant 0 : i32
    %c0_i32_1 = arith.constant 0 : i32
    return %arg0, %c0_i32, %c0_i32_0 : i32, i32, i32
  }
  func.func @transform_1(%arg0: i32, %arg1: i32) -> (i32, i32) {
    %c0_i32 = arith.constant 0 : i32
    %c0_i32_0 = arith.constant 0 : i32
    %c0_i32_1 = arith.constant 0 : i32
    return %c0_i32, %c0_i32_0 : i32, i32
  }
  func.func @transform_2(%arg0: i32, %arg1: i32) -> (i32, i32) {
    %c0_i32 = arith.constant 0 : i32
    %c0_i32_0 = arith.constant 0 : i32
    %c0_i32_1 = arith.constant 0 : i32
    return %c0_i32, %c0_i32_0 : i32, i32
  }
  func.func @transform_3(%arg0: i32, %arg1: i32) -> (i32, i32) {
    %c0_i32 = arith.constant 0 : i32
    %c0_i32_0 = arith.constant 0 : i32
    %c0_i32_1 = arith.constant 0 : i32
    return %c0_i32, %c0_i32_0 : i32, i32
  }
  func.func @transform_4(%arg0: i32, %arg1: i32) -> (i32, i32) {
    %c0_i32 = arith.constant 0 : i32
    %c0_i32_0 = arith.constant 0 : i32
    %c0_i32_1 = arith.constant 0 : i32
    return %c0_i32, %c0_i32_0 : i32, i32
  }
  func.func @transform_5(%arg0: i32, %arg1: i32) -> (i32, i32) {
    %c0_i32 = arith.constant 0 : i32
    %c0_i32_0 = arith.constant 0 : i32
    %c0_i32_1 = arith.constant 0 : i32
    return %c0_i32, %c0_i32_0 : i32, i32
  }
  func.func @transform_6(%arg0: i32, %arg1: i32) -> (i32, i32) {
    %c0_i32 = arith.constant 0 : i32
    %c0_i32_0 = arith.constant 0 : i32
    %c0_i32_1 = arith.constant 0 : i32
    return %c0_i32, %c0_i32_0 : i32, i32
  }
  func.func @transform_7(%arg0: i32, %arg1: i32) -> (i32, i32) {
    %c0_i32 = arith.constant 0 : i32
    %c0_i32_0 = arith.constant 0 : i32
    %c0_i32_1 = arith.constant 0 : i32
    return %c0_i32, %c0_i32_0 : i32, i32
  }
  func.func @transform_8(%arg0: i32, %arg1: i32) -> (i32, i32) {
    %c0_i32 = arith.constant 0 : i32
    %c0_i32_0 = arith.constant 0 : i32
    %c0_i32_1 = arith.constant 0 : i32
    return %c0_i32, %c0_i32_0 : i32, i32
  }
  func.func @transform_9(%arg0: i32, %arg1: i32) -> (i32, i32) {
    %c0_i32 = arith.constant 0 : i32
    %c0_i32_0 = arith.constant 0 : i32
    %c0_i32_1 = arith.constant 0 : i32
    return %c0_i32, %c0_i32_0 : i32, i32
  }
  func.func @transform_10(%arg0: i32, %arg1: i32) -> (i32, i32) {
    %c0_i32 = arith.constant 0 : i32
    %c0_i32_0 = arith.constant 0 : i32
    %c0_i32_1 = arith.constant 0 : i32
    return %c0_i32, %c0_i32_0 : i32, i32
  }
  func.func @transform_11(%arg0: i32, %arg1: i32) -> (i32, i32) {
    %c0_i32 = arith.constant 0 : i32
    %c0_i32_0 = arith.constant 0 : i32
    %c0_i32_1 = arith.constant 0 : i32
    return %c0_i32, %c0_i32_0 : i32, i32
  }
  func.func @transform_12(%arg0: i32, %arg1: i32) -> (i32, i32) {
    %c0_i32 = arith.constant 0 : i32
    %c0_i32_0 = arith.constant 0 : i32
    %c0_i32_1 = arith.constant 0 : i32
    return %c0_i32, %c0_i32_0 : i32, i32
  }
  func.func @transform_13(%arg0: i32, %arg1: i32) -> (i32, i32) {
    %c0_i32 = arith.constant 0 : i32
    %c0_i32_0 = arith.constant 0 : i32
    %c0_i32_1 = arith.constant 0 : i32
    return %c0_i32, %c0_i32_0 : i32, i32
  }
  func.func @transform_14(%arg0: i32, %arg1: i32) -> (i32, i32) {
    %c0_i32 = arith.constant 0 : i32
    %c0_i32_0 = arith.constant 0 : i32
    %c0_i32_1 = arith.constant 0 : i32
    return %c0_i32, %c0_i32_0 : i32, i32
  }
  func.func @transform_15(%arg0: i32, %arg1: i32) -> (i32, i32) {
    %c0_i32 = arith.constant 0 : i32
    %c0_i32_0 = arith.constant 0 : i32
    %c0_i32_1 = arith.constant 0 : i32
    return %c0_i32, %c0_i32_0 : i32, i32
  }
  func.func @transform_16(%arg0: i32, %arg1: i32) -> (i32, i32) {
    %c0_i32 = arith.constant 0 : i32
    %c0_i32_0 = arith.constant 0 : i32
    %c0_i32_1 = arith.constant 0 : i32
    return %c0_i32, %c0_i32_0 : i32, i32
  }
  func.func @transform_17(%arg0: i32, %arg1: i32) -> (i32, i32) {
    %c0_i32 = arith.constant 0 : i32
    %c0_i32_0 = arith.constant 0 : i32
    %c0_i32_1 = arith.constant 0 : i32
    return %c0_i32, %c0_i32_0 : i32, i32
  }
  func.func @transform_18(%arg0: i32, %arg1: i32) -> (i32, i32) {
    %c0_i32 = arith.constant 0 : i32
    %c0_i32_0 = arith.constant 0 : i32
    %c0_i32_1 = arith.constant 0 : i32
    return %c0_i32, %c0_i32_0 : i32, i32
  }
  func.func @transform_19(%arg0: i32, %arg1: i32) -> (i32, i32, i32) {
    %c0_i32 = arith.constant 0 : i32
    %c0_i32_0 = arith.constant 0 : i32
    return %arg0, %arg1, %c0_i32 : i32, i32, i32
  }
}

</mosaic_0001>

<llo_original>
// kernel: bert_forward.2
$region0: #{bert_forward.2}
  #allocation0 [shape = 'u32[]', space=smem, size = 0x4, offset = 0x4, fixed_abs, tag = 'smem constant byte address 0x4 - core index']
  #allocation1 [shape = 'u32[144,128]{1,0:T(1,128)}', space=vmem, size = 0x12000, scoped, tag = 'internal scratch']
  #allocation2 [shape = 'bf16[16,128]{1,0:T(16,128)(2,1)}', space=vmem, size = 0x1000, scoped, tag = 'scratch operand']
  #allocation3 [shape = 'bf16[16,128]{1,0:T(16,128)(2,1)}', space=vmem, size = 0x1000, scoped, tag = 'scratch operand']
  #allocation4 [shape = 'bf16[16,128]{1,0:T(16,128)(2,1)}', space=vmem, size = 0x1000, scoped, tag = 'scratch operand']
  %s0 = inlined_call_operand.vmem [shape: f32[2,16,128], index: 0, kind: input, shape index: {}]
  %s1 = inlined_call_operand.vmem [shape: bf16[128,128], index: 1, kind: input, shape index: {}]
  %s2 = inlined_call_operand.vmem [shape: f32[1,128], index: 2, kind: input, shape index: {}]
  %s3 = inlined_call_operand.vmem [shape: bf16[128,128], index: 3, kind: input, shape index: {}]
  %s4 = inlined_call_operand.vmem [shape: f32[1,128], index: 4, kind: input, shape index: {}]
  %s5 = inlined_call_operand.vmem [shape: bf16[128,128], index: 5, kind: input, shape index: {}]
  %s6 = inlined_call_operand.vmem [shape: f32[1,128], index: 6, kind: input, shape index: {}]
  %s7 = inlined_call_operand.vmem [shape: bf16[128,128], index: 7, kind: input, shape index: {}]
  %s8 = inlined_call_operand.vmem [shape: f32[1,128], index: 8, kind: input, shape index: {}]
  %s9 = inlined_call_operand.vmem [shape: bf16[128,256], index: 9, kind: input, shape index: {}]
  %s10 = inlined_call_operand.vmem [shape: f32[1,256], index: 10, kind: input, shape index: {}]
  %s11 = inlined_call_operand.vmem [shape: bf16[256,128], index: 11, kind: input, shape index: {}]
  %s12 = inlined_call_operand.vmem [shape: f32[1,128], index: 12, kind: input, shape index: {}]
  %s13 = inlined_call_operand.vmem [shape: f32[1,128], index: 13, kind: input, shape index: {}]
  %s14 = inlined_call_operand.vmem [shape: f32[1,128], index: 14, kind: input, shape index: {}]
  %s15 = inlined_call_operand.vmem [shape: f32[1,128], index: 15, kind: input, shape index: {}]
  %s16 = inlined_call_operand.vmem [shape: f32[1,128], index: 16, kind: input, shape index: {}]
  %s17 = inlined_call_operand.vmem [shape: f32[1,128], index: 17, kind: input, shape index: {}]
  %s18 = inlined_call_operand.vmem [shape: f32[1,128], index: 18, kind: input, shape index: {}]
  %s19 = inlined_call_operand.vmem [shape: f32[2,16,128], index: 19, kind: output, shape index: {}]
  %s20 = sld [smem:[#allocation0]]
  $region113: #{bert_forward.2} parent=0
    _
  %s22 = ssub.s32 1, %s20
  %s23 = scalar_select 0, %s22, %s20
  loop: start=0, step=1, limit=4
  $region2: #{bert_forward.2} parent=0 // loop_pre_header
    _
  $region3: #{bert_forward.2} parent=0 // loop_header
    %s25 = sphi 0, %s29
    %p26 = scmp.ge.s32.totalorder %s25, 4
    %s32 = sphi 0, %s44
    %s33 = sphi 0, %s40
    %s34 = sphi 0, %s32
    %s35 = sphi 0, %s33
    %s36 = sphi 0, %s34
    %s37 = sphi 0, %s35
    %s47 = sphi 0, %s49
    %s50 = sphi 0, %s47
    %s51 = sphi 0, %s50
    %s67 = sphi 0, %s51
    %s71 = sphi 0, %s71
    %s73 = sphi 0, %s71
    %s74 = sphi 0, %s73
    %s88 = sphi 0, %s74
    %s92 = sphi 0, %s92
    %s94 = sphi 0, %s92
    %s95 = sphi 0, %s94
    %s109 = sphi 0, %s95
    %s113 = sphi 0, %s113
    %s115 = sphi 0, %s113
    %s116 = sphi 0, %s115
    %s130 = sphi 0, %s116
    %s134 = sphi 0, %s134
    %s136 = sphi 0, %s134
    %s137 = sphi 0, %s136
    %s151 = sphi 0, %s137
    %s155 = sphi 0, %s155
    %s157 = sphi 0, %s155
    %s158 = sphi 0, %s157
    %s172 = sphi 0, %s158
    %s176 = sphi 0, %s176
    %s178 = sphi 0, %s176
    %s179 = sphi 0, %s178
    %s193 = sphi 0, %s179
    %s197 = sphi 0, %s197
    %s199 = sphi 0, %s197
    %s200 = sphi 0, %s199
    %s214 = sphi 0, %s200
    %s218 = sphi 0, %s218
    %s220 = sphi 0, %s218
    %s221 = sphi 0, %s220
    %s235 = sphi 0, %s221
    %s239 = sphi 0, %s239
    %s241 = sphi 0, %s239
    %s242 = sphi 0, %s241
    %s256 = sphi 0, %s242
    %s260 = sphi 0, %s260
    %s262 = sphi 0, %s260
    %s263 = sphi 0, %s262
    %s277 = sphi 0, %s263
    %s281 = sphi 0, %s281
    %s283 = sphi 0, %s281
    %s284 = sphi 0, %s283
    %s298 = sphi 0, %s284
    %s302 = sphi 0, %s302
    %s304 = sphi 0, %s302
    %s305 = sphi 0, %s304
    %s319 = sphi 0, %s305
    %s323 = sphi 0, %s323
    %s325 = sphi 0, %s323
    %s326 = sphi 0, %s325
    %s340 = sphi 0, %s326
    %s344 = sphi 0, %s344
    %s346 = sphi 0, %s344
    %s347 = sphi 0, %s346
    %s361 = sphi 0, %s347
    %s365 = sphi 0, %s365
    %s367 = sphi 0, %s365
    %s368 = sphi 0, %s367
    %s382 = sphi 0, %s368
    %s386 = sphi 0, %s386
    %s388 = sphi 0, %s386
    %s389 = sphi 0, %s388
    %s403 = sphi 0, %s389
    %s407 = sphi 0, %s407
    %s409 = sphi 0, %s407
    %s410 = sphi 0, %s409
    %s424 = sphi 0, %s410
    %s428 = sphi 0, %s428
    %s430 = sphi 0, %s428
    %s431 = sphi 0, %s430
    %s445 = sphi 0, %s431
    %s453 = sphi 0, %s455
    %s456 = sphi 0, %s453
    %s457 = sphi 0, %s456
    %s473 = sphi 0, %s457
  $region4: #{bert_forward.2} parent=0 // loop_header_branch
    %28 = sbr.rel (%p26) target = $region8
  $region5: #{bert_forward.2} parent=0 // loop_body
    %s30 = ssub.s32 %s25, 1
    %s31 = ssub.s32 %s25, 2
    %s38 = sadd.s32 1, %s33
    %p39 = scmp.ge.s32.totalorder %s38, 1
    %s40 = scalar_select %p39, 0, %s38
    %s41 = sadd.s32 1, %s32
    %s42 = scalar_select %p39, %s41, %s32
    %p43 = scmp.ge.s32.totalorder %s42, 2
    %s44 = scalar_select %p43, 0, %s42
    %s45 = ssub.s32 %s32, %s44
    %p46 = scmp.eq.s32.totalorder %s45, 0
    %s48 = sadd.s32 %s47, 1
    %s49 = scalar_select %p46, %s47, %s48
    %p52 = pneg %p46
    %p53 = scmp.eq.s32.totalorder %s25, 1
    %p54 = por %p52, %p53
    %p55 = scmp.ne.s32.totalorder %s47, %s50
    %p56 = scmp.eq.s32.totalorder %s25, 0
    %p57 = por %p55, %p56
    %p58 = scmp.ne.s32.totalorder %s47, %s50
    %p59 = scmp.eq.s32.totalorder %s30, 1
    %p60 = por %p58, %p59
    %p61 = scmp.ne.s32.totalorder %s50, %s51
    %p62 = scmp.eq.s32.totalorder %s30, 0
    %p63 = por %p61, %p62
    %p64 = scmp.ne.s32.totalorder %s50, %s51
    %p65 = scmp.eq.s32.totalorder %s31, 1
    %p66 = por %p64, %p65
    %p68 = scmp.ne.s32.totalorder %s51, %s67
    %p69 = scmp.eq.s32.totalorder %s31, 0
    %p70 = por %p68, %p69
    %s72 = sadd.s32 %s71, 1
    %p75 = scmp.eq.s32.totalorder %s25, 1
    %p76 = scmp.ne.s32.totalorder %s71, %s73
    %p77 = scmp.eq.s32.totalorder %s25, 0
    %p78 = por %p76, %p77
    %p79 = scmp.ne.s32.totalorder %s71, %s73
    %p80 = scmp.eq.s32.totalorder %s30, 1
    %p81 = por %p79, %p80
    %p82 = scmp.ne.s32.totalorder %s73, %s74
    %p83 = scmp.eq.s32.totalorder %s30, 0
    %p84 = por %p82, %p83
    %p85 = scmp.ne.s32.totalorder %s73, %s74
    %p86 = scmp.eq.s32.totalorder %s31, 1
    %p87 = por %p85, %p86
    %p89 = scmp.ne.s32.totalorder %s74, %s88
    %p90 = scmp.eq.s32.totalorder %s31, 0
    %p91 = por %p89, %p90
    %s93 = sadd.s32 %s92, 1
    %p96 = scmp.eq.s32.totalorder %s25, 1
    %p97 = scmp.ne.s32.totalorder %s92, %s94
    %p98 = scmp.eq.s32.totalorder %s25, 0
    %p99 = por %p97, %p98
    %p100 = scmp.ne.s32.totalorder %s92, %s94
    %p101 = scmp.eq.s32.totalorder %s30, 1
    %p102 = por %p100, %p101
    %p103 = scmp.ne.s32.totalorder %s94, %s95
    %p104 = scmp.eq.s32.totalorder %s30, 0
    %p105 = por %p103, %p104
    %p106 = scmp.ne.s32.totalorder %s94, %s95
    %p107 = scmp.eq.s32.totalorder %s31, 1
    %p108 = por %p106, %p107
    %p110 = scmp.ne.s32.totalorder %s95, %s109
    %p111 = scmp.eq.s32.totalorder %s31, 0
    %p112 = por %p110, %p111
    %s114 = sadd.s32 %s113, 1
    %p117 = scmp.eq.s32.totalorder %s25, 1
    %p118 = scmp.ne.s32.totalorder %s113, %s115
    %p119 = scmp.eq.s32.totalorder %s25, 0
    %p120 = por %p118, %p119
    %p121 = scmp.ne.s32.totalorder %s113, %s115
    %p122 = scmp.eq.s32.totalorder %s30, 1
    %p123 = por %p121, %p122
    %p124 = scmp.ne.s32.totalorder %s115, %s116
    %p125 = scmp.eq.s32.totalorder %s30, 0
    %p126 = por %p124, %p125
    %p127 = scmp.ne.s32.totalorder %s115, %s116
    %p128 = scmp.eq.s32.totalorder %s31, 1
    %p129 = por %p127, %p128
    %p131 = scmp.ne.s32.totalorder %s116, %s130
    %p132 = scmp.eq.s32.totalorder %s31, 0
    %p133 = por %p131, %p132
    %s135 = sadd.s32 %s134, 1
    %p138 = scmp.eq.s32.totalorder %s25, 1
    %p139 = scmp.ne.s32.totalorder %s134, %s136
    %p140 = scmp.eq.s32.totalorder %s25, 0
    %p141 = por %p139, %p140
    %p142 = scmp.ne.s32.totalorder %s134, %s136
    %p143 = scmp.eq.s32.totalorder %s30, 1
    %p144 = por %p142, %p143
    %p145 = scmp.ne.s32.totalorder %s136, %s137
    %p146 = scmp.eq.s32.totalorder %s30, 0
    %p147 = por %p145, %p146
    %p148 = scmp.ne.s32.totalorder %s136, %s137
    %p149 = scmp.eq.s32.totalorder %s31, 1
    %p150 = por %p148, %p149
    %p152 = scmp.ne.s32.totalorder %s137, %s151
    %p153 = scmp.eq.s32.totalorder %s31, 0
    %p154 = por %p152, %p153
    %s156 = sadd.s32 %s155, 1
    %p159 = scmp.eq.s32.totalorder %s25, 1
    %p160 = scmp.ne.s32.totalorder %s155, %s157
    %p161 = scmp.eq.s32.totalorder %s25, 0
    %p162 = por %p160, %p161
    %p163 = scmp.ne.s32.totalorder %s155, %s157
    %p164 = scmp.eq.s32.totalorder %s30, 1
    %p165 = por %p163, %p164
    %p166 = scmp.ne.s32.totalorder %s157, %s158
    %p167 = scmp.eq.s32.totalorder %s30, 0
    %p168 = por %p166, %p167
    %p169 = scmp.ne.s32.totalorder %s157, %s158
    %p170 = scmp.eq.s32.totalorder %s31, 1
    %p171 = por %p169, %p170
    %p173 = scmp.ne.s32.totalorder %s158, %s172
    %p174 = scmp.eq.s32.totalorder %s31, 0
    %p175 = por %p173, %p174
    %s177 = sadd.s32 %s176, 1
    %p180 = scmp.eq.s32.totalorder %s25, 1
    %p181 = scmp.ne.s32.totalorder %s176, %s178
    %p182 = scmp.eq.s32.totalorder %s25, 0
    %p183 = por %p181, %p182
    %p184 = scmp.ne.s32.totalorder %s176, %s178
    %p185 = scmp.eq.s32.totalorder %s30, 1
    %p186 = por %p184, %p185
    %p187 = scmp.ne.s32.totalorder %s178, %s179
    %p188 = scmp.eq.s32.totalorder %s30, 0
    %p189 = por %p187, %p188
    %p190 = scmp.ne.s32.totalorder %s178, %s179
    %p191 = scmp.eq.s32.totalorder %s31, 1
    %p192 = por %p190, %p191
    %p194 = scmp.ne.s32.totalorder %s179, %s193
    %p195 = scmp.eq.s32.totalorder %s31, 0
    %p196 = por %p194, %p195
    %s198 = sadd.s32 %s197, 1
    %p201 = scmp.eq.s32.totalorder %s25, 1
    %p202 = scmp.ne.s32.totalorder %s197, %s199
    %p203 = scmp.eq.s32.totalorder %s25, 0
    %p204 = por %p202, %p203
    %p205 = scmp.ne.s32.totalorder %s197, %s199
    %p206 = scmp.eq.s32.totalorder %s30, 1
    %p207 = por %p205, %p206
    %p208 = scmp.ne.s32.totalorder %s199, %s200
    %p209 = scmp.eq.s32.totalorder %s30, 0
    %p210 = por %p208, %p209
    %p211 = scmp.ne.s32.totalorder %s199, %s200
    %p212 = scmp.eq.s32.totalorder %s31, 1
    %p213 = por %p211, %p212
    %p215 = scmp.ne.s32.totalorder %s200, %s214
    %p216 = scmp.eq.s32.totalorder %s31, 0
    %p217 = por %p215, %p216
    %s219 = sadd.s32 %s218, 1
    %p222 = scmp.eq.s32.totalorder %s25, 1
    %p223 = scmp.ne.s32.totalorder %s218, %s220
    %p224 = scmp.eq.s32.totalorder %s25, 0
    %p225 = por %p223, %p224
    %p226 = scmp.ne.s32.totalorder %s218, %s220
    %p227 = scmp.eq.s32.totalorder %s30, 1
    %p228 = por %p226, %p227
    %p229 = scmp.ne.s32.totalorder %s220, %s221
    %p230 = scmp.eq.s32.totalorder %s30, 0
    %p231 = por %p229, %p230
    %p232 = scmp.ne.s32.totalorder %s220, %s221
    %p233 = scmp.eq.s32.totalorder %s31, 1
    %p234 = por %p232, %p233
    %p236 = scmp.ne.s32.totalorder %s221, %s235
    %p237 = scmp.eq.s32.totalorder %s31, 0
    %p238 = por %p236, %p237
    %s240 = sadd.s32 %s239, 1
    %p243 = scmp.eq.s32.totalorder %s25, 1
    %p244 = scmp.ne.s32.totalorder %s239, %s241
    %p245 = scmp.eq.s32.totalorder %s25, 0
    %p246 = por %p244, %p245
    %p247 = scmp.ne.s32.totalorder %s239, %s241
    %p248 = scmp.eq.s32.totalorder %s30, 1
    %p249 = por %p247, %p248
    %p250 = scmp.ne.s32.totalorder %s241, %s242
    %p251 = scmp.eq.s32.totalorder %s30, 0
    %p252 = por %p250, %p251
    %p253 = scmp.ne.s32.totalorder %s241, %s242
    %p254 = scmp.eq.s32.totalorder %s31, 1
    %p255 = por %p253, %p254
    %p257 = scmp.ne.s32.totalorder %s242, %s256
    %p258 = scmp.eq.s32.totalorder %s31, 0
    %p259 = por %p257, %p258
    %s261 = sadd.s32 %s260, 1
    %p264 = scmp.eq.s32.totalorder %s25, 1
    %p265 = scmp.ne.s32.totalorder %s260, %s262
    %p266 = scmp.eq.s32.totalorder %s25, 0
    %p267 = por %p265, %p266
    %p268 = scmp.ne.s32.totalorder %s260, %s262
    %p269 = scmp.eq.s32.totalorder %s30, 1
    %p270 = por %p268, %p269
    %p271 = scmp.ne.s32.totalorder %s262, %s263
    %p272 = scmp.eq.s32.totalorder %s30, 0
    %p273 = por %p271, %p272
    %p274 = scmp.ne.s32.totalorder %s262, %s263
    %p275 = scmp.eq.s32.totalorder %s31, 1
    %p276 = por %p274, %p275
    %p278 = scmp.ne.s32.totalorder %s263, %s277
    %p279 = scmp.eq.s32.totalorder %s31, 0
    %p280 = por %p278, %p279
    %s282 = sadd.s32 %s281, 1
    %p285 = scmp.eq.s32.totalorder %s25, 1
    %p286 = scmp.ne.s32.totalorder %s281, %s283
    %p287 = scmp.eq.s32.totalorder %s25, 0
    %p288 = por %p286, %p287
    %p289 = scmp.ne.s32.totalorder %s281, %s283
    %p290 = scmp.eq.s32.totalorder %s30, 1
    %p291 = por %p289, %p290
    %p292 = scmp.ne.s32.totalorder %s283, %s284
    %p293 = scmp.eq.s32.totalorder %s30, 0
    %p294 = por %p292, %p293
    %p295 = scmp.ne.s32.totalorder %s283, %s284
    %p296 = scmp.eq.s32.totalorder %s31, 1
    %p297 = por %p295, %p296
    %p299 = scmp.ne.s32.totalorder %s284, %s298
    %p300 = scmp.eq.s32.totalorder %s31, 0
    %p301 = por %p299, %p300
    %s303 = sadd.s32 %s302, 1
    %p306 = scmp.eq.s32.totalorder %s25, 1
    %p307 = scmp.ne.s32.totalorder %s302, %s304
    %p308 = scmp.eq.s32.totalorder %s25, 0
    %p309 = por %p307, %p308
    %p310 = scmp.ne.s32.totalorder %s302, %s304
    %p311 = scmp.eq.s32.totalorder %s30, 1
    %p312 = por %p310, %p311
    %p313 = scmp.ne.s32.totalorder %s304, %s305
    %p314 = scmp.eq.s32.totalorder %s30, 0
    %p315 = por %p313, %p314
    %p316 = scmp.ne.s32.totalorder %s304, %s305
    %p317 = scmp.eq.s32.totalorder %s31, 1
    %p318 = por %p316, %p317
    %p320 = scmp.ne.s32.totalorder %s305, %s319
    %p321 = scmp.eq.s32.totalorder %s31, 0
    %p322 = por %p320, %p321
    %s324 = sadd.s32 %s323, 1
    %p327 = scmp.eq.s32.totalorder %s25, 1
    %p328 = scmp.ne.s32.totalorder %s323, %s325
    %p329 = scmp.eq.s32.totalorder %s25, 0
    %p330 = por %p328, %p329
    %p331 = scmp.ne.s32.totalorder %s323, %s325
    %p332 = scmp.eq.s32.totalorder %s30, 1
    %p333 = por %p331, %p332
    %p334 = scmp.ne.s32.totalorder %s325, %s326
    %p335 = scmp.eq.s32.totalorder %s30, 0
    %p336 = por %p334, %p335
    %p337 = scmp.ne.s32.totalorder %s325, %s326
    %p338 = scmp.eq.s32.totalorder %s31, 1
    %p339 = por %p337, %p338
    %p341 = scmp.ne.s32.totalorder %s326, %s340
    %p342 = scmp.eq.s32.totalorder %s31, 0
    %p343 = por %p341, %p342
    %s345 = sadd.s32 %s344, 1
    %p348 = scmp.eq.s32.totalorder %s25, 1
    %p349 = scmp.ne.s32.totalorder %s344, %s346
    %p350 = scmp.eq.s32.totalorder %s25, 0
    %p351 = por %p349, %p350
    %p352 = scmp.ne.s32.totalorder %s344, %s346
    %p353 = scmp.eq.s32.totalorder %s30, 1
    %p354 = por %p352, %p353
    %p355 = scmp.ne.s32.totalorder %s346, %s347
    %p356 = scmp.eq.s32.totalorder %s30, 0
    %p357 = por %p355, %p356
    %p358 = scmp.ne.s32.totalorder %s346, %s347
    %p359 = scmp.eq.s32.totalorder %s31, 1
    %p360 = por %p358, %p359
    %p362 = scmp.ne.s32.totalorder %s347, %s361
    %p363 = scmp.eq.s32.totalorder %s31, 0
    %p364 = por %p362, %p363
    %s366 = sadd.s32 %s365, 1
    %p369 = scmp.eq.s32.totalorder %s25, 1
    %p370 = scmp.ne.s32.totalorder %s365, %s367
    %p371 = scmp.eq.s32.totalorder %s25, 0
    %p372 = por %p370, %p371
    %p373 = scmp.ne.s32.totalorder %s365, %s367
    %p374 = scmp.eq.s32.totalorder %s30, 1
    %p375 = por %p373, %p374
    %p376 = scmp.ne.s32.totalorder %s367, %s368
    %p377 = scmp.eq.s32.totalorder %s30, 0
    %p378 = por %p376, %p377
    %p379 = scmp.ne.s32.totalorder %s367, %s368
    %p380 = scmp.eq.s32.totalorder %s31, 1
    %p381 = por %p379, %p380
    %p383 = scmp.ne.s32.totalorder %s368, %s382
    %p384 = scmp.eq.s32.totalorder %s31, 0
    %p385 = por %p383, %p384
    %s387 = sadd.s32 %s386, 1
    %p390 = scmp.eq.s32.totalorder %s25, 1
    %p391 = scmp.ne.s32.totalorder %s386, %s388
    %p392 = scmp.eq.s32.totalorder %s25, 0
    %p393 = por %p391, %p392
    %p394 = scmp.ne.s32.totalorder %s386, %s388
    %p395 = scmp.eq.s32.totalorder %s30, 1
    %p396 = por %p394, %p395
    %p397 = scmp.ne.s32.totalorder %s388, %s389
    %p398 = scmp.eq.s32.totalorder %s30, 0
    %p399 = por %p397, %p398
    %p400 = scmp.ne.s32.totalorder %s388, %s389
    %p401 = scmp.eq.s32.totalorder %s31, 1
    %p402 = por %p400, %p401
    %p404 = scmp.ne.s32.totalorder %s389, %s403
    %p405 = scmp.eq.s32.totalorder %s31, 0
    %p406 = por %p404, %p405
    %s408 = sadd.s32 %s407, 1
    %p411 = scmp.eq.s32.totalorder %s25, 1
    %p412 = scmp.ne.s32.totalorder %s407, %s409
    %p413 = scmp.eq.s32.totalorder %s25, 0
    %p414 = por %p412, %p413
    %p415 = scmp.ne.s32.totalorder %s407, %s409
    %p416 = scmp.eq.s32.totalorder %s30, 1
    %p417 = por %p415, %p416
    %p418 = scmp.ne.s32.totalorder %s409, %s410
    %p419 = scmp.eq.s32.totalorder %s30, 0
    %p420 = por %p418, %p419
    %p421 = scmp.ne.s32.totalorder %s409, %s410
    %p422 = scmp.eq.s32.totalorder %s31, 1
    %p423 = por %p421, %p422
    %p425 = scmp.ne.s32.totalorder %s410, %s424
    %p426 = scmp.eq.s32.totalorder %s31, 0
    %p427 = por %p425, %p426
    %s429 = sadd.s32 %s428, 1
    %p432 = scmp.eq.s32.totalorder %s25, 1
    %p433 = scmp.ne.s32.totalorder %s428, %s430
    %p434 = scmp.eq.s32.totalorder %s25, 0
    %p435 = por %p433, %p434
    %p436 = scmp.ne.s32.totalorder %s428, %s430
    %p437 = scmp.eq.s32.totalorder %s30, 1
    %p438 = por %p436, %p437
    %p439 = scmp.ne.s32.totalorder %s430, %s431
    %p440 = scmp.eq.s32.totalorder %s30, 0
    %p441 = por %p439, %p440
    %p442 = scmp.ne.s32.totalorder %s430, %s431
    %p443 = scmp.eq.s32.totalorder %s31, 1
    %p444 = por %p442, %p443
    %p446 = scmp.ne.s32.totalorder %s431, %s445
    %p447 = scmp.eq.s32.totalorder %s31, 0
    %p448 = por %p446, %p447
    %s449 = ssub.s32 %s32, %s44
    %s450 = ssub.s32 %s33, %s40
    %s451 = sor.u32 %s449, %s450
    %p452 = scmp.eq.s32.totalorder %s451, 0
    %s454 = sadd.s32 %s453, 1
    %s455 = scalar_select %p452, %s453, %s454
    %p458 = pneg %p452
    %p459 = scmp.eq.s32.totalorder %s25, 1
    %p460 = por %p458, %p459
    %p461 = scmp.ne.s32.totalorder %s453, %s456
    %p462 = scmp.eq.s32.totalorder %s25, 0
    %p463 = por %p461, %p462
    %p464 = scmp.ne.s32.totalorder %s453, %s456
    %p465 = scmp.eq.s32.totalorder %s30, 1
    %p466 = por %p464, %p465
    %p467 = scmp.ne.s32.totalorder %s456, %s457
    %p468 = scmp.eq.s32.totalorder %s30, 0
    %p469 = por %p467, %p468
    %p470 = scmp.ne.s32.totalorder %s456, %s457
    %p471 = scmp.eq.s32.totalorder %s31, 1
    %p472 = por %p470, %p471
    %p474 = scmp.ne.s32.totalorder %s457, %s473
    %p475 = scmp.eq.s32.totalorder %s31, 0
    %p476 = por %p474, %p475
    %p477 = scmp.le.s32.totalorder 1, %s25
    %p478 = scmp.lt.s32.totalorder %s25, 3
    %p479 = pnand %p477, %p478
    %p480 = pneg %p479
    // Predicated region
    $region9: #{bert_forward.2} parent=5 // pred_check
      _
    $region10: #{bert_forward.2} parent=5 // pred_check_branch
      %482 = sbr.rel (%p479) target = $region12
    $region11: #{bert_forward.2} parent=5 // pred_region
      %s483 = ssub.s32 %s25, 1
      // Predicated region
      $region13: #{bert_forward.2} parent=11 // pred_check
        %p484 = pneg %p84
      $region14: #{bert_forward.2} parent=11 // pred_check_branch
        %486 = sbr.rel (%p484) target = $region16
      $region15: #{bert_forward.2} parent=11 // pred_region
        _
      $region16: #{bert_forward.2} parent=11 // pred_fallthru
        _
      // Predicated region
      $region17: #{bert_forward.2} parent=11 // pred_check
        %p487 = pneg %p105
      $region18: #{bert_forward.2} parent=11 // pred_check_branch
        %489 = sbr.rel (%p487) target = $region20
      $region19: #{bert_forward.2} parent=11 // pred_region
        _
      $region20: #{bert_forward.2} parent=11 // pred_fallthru
        _
      // Predicated region
      $region21: #{bert_forward.2} parent=11 // pred_check
        %p490 = pneg %p126
      $region22: #{bert_forward.2} parent=11 // pred_check_branch
        %492 = sbr.rel (%p490) target = $region24
      $region23: #{bert_forward.2} parent=11 // pred_region
        _
      $region24: #{bert_forward.2} parent=11 // pred_fallthru
        _
      // Predicated region
      $region25: #{bert_forward.2} parent=11 // pred_check
        %p493 = pneg %p147
      $region26: #{bert_forward.2} parent=11 // pred_check_branch
        %495 = sbr.rel (%p493) target = $region28
      $region27: #{bert_forward.2} parent=11 // pred_region
        _
      $region28: #{bert_forward.2} parent=11 // pred_fallthru
        _
      // Predicated region
      $region29: #{bert_forward.2} parent=11 // pred_check
        %p496 = pneg %p168
      $region30: #{bert_forward.2} parent=11 // pred_check_branch
        %498 = sbr.rel (%p496) target = $region32
      $region31: #{bert_forward.2} parent=11 // pred_region
        _
      $region32: #{bert_forward.2} parent=11 // pred_fallthru
        _
      // Predicated region
      $region33: #{bert_forward.2} parent=11 // pred_check
        %p499 = pneg %p189
      $region34: #{bert_forward.2} parent=11 // pred_check_branch
        %501 = sbr.rel (%p499) target = $region36
      $region35: #{bert_forward.2} parent=11 // pred_region
        _
      $region36: #{bert_forward.2} parent=11 // pred_fallthru
        _
      // Predicated region
      $region37: #{bert_forward.2} parent=11 // pred_check
        %p502 = pneg %p210
      $region38: #{bert_forward.2} parent=11 // pred_check_branch
        %504 = sbr.rel (%p502) target = $region40
      $region39: #{bert_forward.2} parent=11 // pred_region
        _
      $region40: #{bert_forward.2} parent=11 // pred_fallthru
        _
      // Predicated region
      $region41: #{bert_forward.2} parent=11 // pred_check
        %p505 = pneg %p231
      $region42: #{bert_forward.2} parent=11 // pred_check_branch
        %507 = sbr.rel (%p505) target = $region44
      $region43: #{bert_forward.2} parent=11 // pred_region
        _
      $region44: #{bert_forward.2} parent=11 // pred_fallthru
        _
      // Predicated region
      $region45: #{bert_forward.2} parent=11 // pred_check
        %p508 = pneg %p252
      $region46: #{bert_forward.2} parent=11 // pred_check_branch
        %510 = sbr.rel (%p508) target = $region48
      $region47: #{bert_forward.2} parent=11 // pred_region
        _
      $region48: #{bert_forward.2} parent=11 // pred_fallthru
        _
      // Predicated region
      $region49: #{bert_forward.2} parent=11 // pred_check
        %p511 = pneg %p273
      $region50: #{bert_forward.2} parent=11 // pred_check_branch
        %513 = sbr.rel (%p511) target = $region52
      $region51: #{bert_forward.2} parent=11 // pred_region
        _
      $region52: #{bert_forward.2} parent=11 // pred_fallthru
        _
      // Predicated region
      $region53: #{bert_forward.2} parent=11 // pred_check
        %p514 = pneg %p294
      $region54: #{bert_forward.2} parent=11 // pred_check_branch
        %516 = sbr.rel (%p514) target = $region56
      $region55: #{bert_forward.2} parent=11 // pred_region
        _
      $region56: #{bert_forward.2} parent=11 // pred_fallthru
        _
      // Predicated region
      $region57: #{bert_forward.2} parent=11 // pred_check
        %p517 = pneg %p315
      $region58: #{bert_forward.2} parent=11 // pred_check_branch
        %519 = sbr.rel (%p517) target = $region60
      $region59: #{bert_forward.2} parent=11 // pred_region
        _
      $region60: #{bert_forward.2} parent=11 // pred_fallthru
        _
      // Predicated region
      $region61: #{bert_forward.2} parent=11 // pred_check
        %p520 = pneg %p336
      $region62: #{bert_forward.2} parent=11 // pred_check_branch
        %522 = sbr.rel (%p520) target = $region64
      $region63: #{bert_forward.2} parent=11 // pred_region
        _
      $region64: #{bert_forward.2} parent=11 // pred_fallthru
        _
      // Predicated region
      $region65: #{bert_forward.2} parent=11 // pred_check
        %p523 = pneg %p357
      $region66: #{bert_forward.2} parent=11 // pred_check_branch
        %525 = sbr.rel (%p523) target = $region68
      $region67: #{bert_forward.2} parent=11 // pred_region
        _
      $region68: #{bert_forward.2} parent=11 // pred_fallthru
        _
      // Predicated region
      $region69: #{bert_forward.2} parent=11 // pred_check
        %p526 = pneg %p378
      $region70: #{bert_forward.2} parent=11 // pred_check_branch
        %528 = sbr.rel (%p526) target = $region72
      $region71: #{bert_forward.2} parent=11 // pred_region
        _
      $region72: #{bert_forward.2} parent=11 // pred_fallthru
        _
      // Predicated region
      $region73: #{bert_forward.2} parent=11 // pred_check
        %p529 = pneg %p399
      $region74: #{bert_forward.2} parent=11 // pred_check_branch
        %531 = sbr.rel (%p529) target = $region76
      $region75: #{bert_forward.2} parent=11 // pred_region
        _
      $region76: #{bert_forward.2} parent=11 // pred_fallthru
        _
      // Predicated region
      $region77: #{bert_forward.2} parent=11 // pred_check
        %p532 = pneg %p420
      $region78: #{bert_forward.2} parent=11 // pred_check_branch
        %534 = sbr.rel (%p532) target = $region80
      $region79: #{bert_forward.2} parent=11 // pred_region
        _
      $region80: #{bert_forward.2} parent=11 // pred_fallthru
        _
      // Predicated region
      $region81: #{bert_forward.2} parent=11 // pred_check
        %p535 = pneg %p441
      $region82: #{bert_forward.2} parent=11 // pred_check_branch
        %537 = sbr.rel (%p535) target = $region84
      $region83: #{bert_forward.2} parent=11 // pred_region
        _
      $region84: #{bert_forward.2} parent=11 // pred_fallthru
        _
    $region12: #{bert_forward.2} parent=5 // pred_fallthru
      _
    %p538 = scmp.lt.s32.totalorder %s25, 2
    // Predicated region
    $region85: #{bert_forward.2} parent=5 // pred_check
      %p539 = pneg %p538
    $region86: #{bert_forward.2} parent=5 // pred_check_branch
      %541 = sbr.rel (%p539) target = $region88
    $region87: #{bert_forward.2} parent=5 // pred_region
      // Predicated region
      $region89: #{bert_forward.2} parent=87 // pred_check
        %p542 = pneg %p57
      $region90: #{bert_forward.2} parent=87 // pred_check_branch
        %544 = sbr.rel (%p542) target = $region92
      $region91: #{bert_forward.2} parent=87 // pred_region
        %p545 = scmp.lt.s32.totalorder %s32, 1
        %s546 = scalar_select %p545, %s32, 1
        %s547 = smul.addr %s546, 2
        %s548 = smul.addr %s547, 8
        %s549 = scalar_lea.vmem %s0, %s548
      $region92: #{bert_forward.2} parent=87 // pred_fallthru
        _
    $region88: #{bert_forward.2} parent=5 // pred_fallthru
      _
    %p550 = scmp.le.s32.totalorder 1, %s25
    %p551 = scmp.lt.s32.totalorder %s25, 3
    %p552 = pnand %p550, %p551
    %p553 = pneg %p552
    // Predicated region
    $region93: #{bert_forward.2} parent=5 // pred_check
      _
    $region94: #{bert_forward.2} parent=5 // pred_check_branch
      %555 = sbr.rel (%p552) target = $region96
    $region95: #{bert_forward.2} parent=5 // pred_region
      %s556 = ssub.s32 %s25, 1
      %p557 = scmp.lt.s32.totalorder %s34, 1
      %s558 = scalar_select %p557, %s34, 1
      %s559 = smul.addr %s558, 2
      %s560 = smul.addr %s559, 8
      %s561 = scalar_lea.vmem %s0, %s560
      %p562 = pneg %p63
      %p563 = pneg %p60
      %p564 = pneg %p84
      %p565 = pneg %p81
      %p566 = pneg %p105
      %p567 = pneg %p102
      %p568 = pneg %p126
      %p569 = pneg %p123
      %p570 = pneg %p147
      %p571 = pneg %p144
      %p572 = pneg %p168
      %p573 = pneg %p165
      %p574 = pneg %p189
      %p575 = pneg %p186
      %p576 = pneg %p210
      %p577 = pneg %p207
      %p578 = pneg %p231
      %p579 = pneg %p228
      %p580 = pneg %p252
      %p581 = pneg %p249
      %p582 = pneg %p273
      %p583 = pneg %p270
      %p584 = pneg %p294
      %p585 = pneg %p291
      %p586 = pneg %p315
      %p587 = pneg %p312
      %p588 = pneg %p336
      %p589 = pneg %p333
      %p590 = pneg %p357
      %p591 = pneg %p354
      %p592 = pneg %p378
      %p593 = pneg %p375
      %p594 = pneg %p399
      %p595 = pneg %p396
      %p596 = pneg %p420
      %p597 = pneg %p417
      %p598 = pneg %p441
      %p599 = pneg %p438
      %p600 = pneg %p469
      %p601 = pneg %p466
      %s602 = smul.u32 2, %s35
      %p603 = scmp.lt.s32.totalorder %s34, 1
      %s604 = scalar_select %p603, %s34, 1
      %p605 = scmp.lt.s32.totalorder %s602, 1
      %s606 = scalar_select %p605, %s602, 1
      %s607 = smul.addr %s604, 2
      %s608 = sadd.s32 %s606, %s607
      %s609 = smul.addr %s608, 8
      %s610 = scalar_lea.vmem %s19, %s609
      %p611 = scmp.lt.s32.totalorder %s34, 1
      %s612 = scalar_select %p611, %s34, 1
      %s613 = smul.addr %s612, 2
      %s614 = smul.addr %s613, 8
      %s615 = scalar_lea.vmem %s0, %s614
      %s616 = smul.u32 2, %s35
      %p617 = scmp.lt.s32.totalorder %s34, 1
      %s618 = scalar_select %p617, %s34, 1
      %p619 = scmp.lt.s32.totalorder %s616, 1
      %s620 = scalar_select %p619, %s616, 1
      %s621 = smul.addr %s618, 2
      %s622 = sadd.s32 %s620, %s621
      %s623 = smul.addr %s622, 8
      %s624 = scalar_lea.vmem %s19, %s623
      %s625 = smul.u32 2, %s35
      %p627 = scmp.eq.s32.totalorder %s35, 0
      // Predicated region
      $region97: #{bert_forward.2} parent=95 // pred_check
        %p628 = pneg %p627
      $region98: #{bert_forward.2} parent=95 // pred_check_branch
        %630 = sbr.rel (%p628) target = $region100
      $region99: #{bert_forward.2} parent=95 // pred_region
        %v631 = vld [vmem:[%s615] sm:$0xff]
        %v632 = vld [vmem:[%s615 + $0x8] sm:$0xff]
        %v633 = vpack.c.bf16 %v632, %v631
        %v634 = vld [vmem:[%s3] sm:$0xf]
        %v635 = vld [vmem:[%s3 + $0x4] sm:$0xf]
        %v636 = vld [vmem:[%s3 + $0x8] sm:$0xf]
        %v637 = vld [vmem:[%s3 + $0xc] sm:$0xf]
        %v638 = vld [vmem:[%s3 + $0x10] sm:$0xf]
        %v639 = vld [vmem:[%s3 + $0x14] sm:$0xf]
        %v640 = vld [vmem:[%s3 + $0x18] sm:$0xf]
        %v641 = vld [vmem:[%s3 + $0x1c] sm:$0xf]
        %v642 = vld [vmem:[%s3 + $0x20] sm:$0xf]
        %v643 = vld [vmem:[%s3 + $0x24] sm:$0xf]
        %v644 = vld [vmem:[%s3 + $0x28] sm:$0xf]
        %v645 = vld [vmem:[%s3 + $0x2c] sm:$0xf]
        %v646 = vld [vmem:[%s3 + $0x30] sm:$0xf]
        %v647 = vld [vmem:[%s3 + $0x34] sm:$0xf]
        %v648 = vld [vmem:[%s3 + $0x38] sm:$0xf]
        %v649 = vld [vmem:[%s3 + $0x3c] sm:$0xf]
        %v650 = vld [vmem:[%s4] sm:$0x1]
        %v652 = vlaneseq
        %v653 = vshrl.u32 %v652, 7
        %v654 = vsub.s32 0, %v653
        %v655 = vrot.slane %v650, %v654
        %v673 = vunpack.c.l.b16 %v634
        %v674 = vunpack.c.l.b16 %v635
        %v675 = vunpack.c.l.b16 %v636
        %v676 = vunpack.c.l.b16 %v637
        %v677 = vunpack.c.l.b16 %v638
        %v678 = vunpack.c.l.b16 %v639
        %v679 = vunpack.c.l.b16 %v640
        %v680 = vunpack.c.l.b16 %v641
        %v681 = vunpack.c.l.b16 %v642
        %v682 = vunpack.c.l.b16 %v643
        %v683 = vunpack.c.l.b16 %v644
        %v684 = vunpack.c.l.b16 %v645
        %v685 = vunpack.c.l.b16 %v646
        %v686 = vunpack.c.l.b16 %v647
        %v687 = vunpack.c.l.b16 %v648
        %v688 = vunpack.c.l.b16 %v649
        %v689 = vpack.c.b16 %v674, %v673
        %v690 = vpack.c.b16 %v676, %v675
        %v691 = vpack.c.b16 %v678, %v677
        %v692 = vpack.c.b16 %v680, %v679
        %v693 = vpack.c.b16 %v682, %v681
        %v694 = vpack.c.b16 %v684, %v683
        %v695 = vpack.c.b16 %v686, %v685
        %v696 = vpack.c.b16 %v688, %v687
        %705 = vmatprep.subr.bf16.mxu0 0
        %706 = vmatpush1.bf16.msra.mxu0 %v689
        %707 = vmatprep.subr.bf16.mxu0 0
        %708 = vmatpush1.bf16.msra.mxu0 %v690
        %709 = vmatprep.subr.bf16.mxu0 0
        %710 = vmatpush1.bf16.msra.mxu0 %v691
        %711 = vmatprep.subr.bf16.mxu0 0
        %712 = vmatpush1.bf16.msra.mxu0 %v692
        %713 = vmatprep.subr.bf16.mxu0 0
        %714 = vmatpush1.bf16.msra.mxu0 %v693
        %715 = vmatprep.subr.bf16.mxu0 0
        %716 = vmatpush1.bf16.msra.mxu0 %v694
        %717 = vmatprep.subr.bf16.mxu0 0
        %718 = vmatpush1.bf16.msra.mxu0 %v695
        %719 = vmatprep.subr.bf16.mxu0 0
        %720 = vmatpush1.bf16.msra.mxu0 %v696
        %721 = vmatprep.subr.bf16.mxu0 0
        %722 = vmatpush1.bf16.msra.mxu0 0
        %723 = vmatprep.subr.bf16.mxu0 0
        %724 = vmatpush1.bf16.msra.mxu0 0
        %725 = vmatprep.subr.bf16.mxu0 0
        %726 = vmatpush1.bf16.msra.mxu0 0
        %727 = vmatprep.subr.bf16.mxu0 0
        %728 = vmatpush1.bf16.msra.mxu0 0
        %729 = vmatprep.subr.bf16.mxu0 0
        %730 = vmatpush1.bf16.msra.mxu0 0
        %731 = vmatprep.subr.bf16.mxu0 0
        %732 = vmatpush1.bf16.msra.mxu0 0
        %733 = vmatprep.subr.bf16.mxu0 0
        %734 = vmatpush1.bf16.msra.mxu0 0
        %735 = vmatprep.subr.bf16.mxu0 0
        %736 = vmatpush1.bf16.msra.mxu0 0
        %737 = vmatprep.mubr.bf16.mxu0 0
        %738 = vmatmul.mubr.bf16.gmra.mrb[0].mxu0 %v633
        %v739 = vpop.f32.mrb[0].mxu0
        %v740 = vadd.f32 %v655, %v739
        %v741 = vpop.f32.mrb[0].mxu0
        %v742 = vpop.f32.mrb[0].mxu0
        %v743 = vadd.f32 %v655, %v742
        %v744 = vpop.f32.mrb[0].mxu0
        %745 = vdwg.mxu0
        %v746 = vld [vmem:[%s5] sm:$0xf]
        %v747 = vld [vmem:[%s5 + $0x4] sm:$0xf]
        %v748 = vld [vmem:[%s5 + $0x8] sm:$0xf]
        %v749 = vld [vmem:[%s5 + $0xc] sm:$0xf]
        %v750 = vld [vmem:[%s5 + $0x10] sm:$0xf]
        %v751 = vld [vmem:[%s5 + $0x14] sm:$0xf]
        %v752 = vld [vmem:[%s5 + $0x18] sm:$0xf]
        %v753 = vld [vmem:[%s5 + $0x1c] sm:$0xf]
        %v754 = vld [vmem:[%s5 + $0x20] sm:$0xf]
        %v755 = vld [vmem:[%s5 + $0x24] sm:$0xf]
        %v756 = vld [vmem:[%s5 + $0x28] sm:$0xf]
        %v757 = vld [vmem:[%s5 + $0x2c] sm:$0xf]
        %v758 = vld [vmem:[%s5 + $0x30] sm:$0xf]
        %v759 = vld [vmem:[%s5 + $0x34] sm:$0xf]
        %v760 = vld [vmem:[%s5 + $0x38] sm:$0xf]
        %v761 = vld [vmem:[%s5 + $0x3c] sm:$0xf]
        %v762 = vld [vmem:[%s6] sm:$0x1]
        %v764 = vlaneseq
        %v765 = vshrl.u32 %v764, 7
        %v766 = vsub.s32 0, %v765
        %v767 = vrot.slane %v762, %v766
        %v785 = vunpack.c.l.b16 %v746
        %v786 = vunpack.c.l.b16 %v747
        %v787 = vunpack.c.l.b16 %v748
        %v788 = vunpack.c.l.b16 %v749
        %v789 = vunpack.c.l.b16 %v750
        %v790 = vunpack.c.l.b16 %v751
        %v791 = vunpack.c.l.b16 %v752
        %v792 = vunpack.c.l.b16 %v753
        %v793 = vunpack.c.l.b16 %v754
        %v794 = vunpack.c.l.b16 %v755
        %v795 = vunpack.c.l.b16 %v756
        %v796 = vunpack.c.l.b16 %v757
        %v797 = vunpack.c.l.b16 %v758
        %v798 = vunpack.c.l.b16 %v759
        %v799 = vunpack.c.l.b16 %v760
        %v800 = vunpack.c.l.b16 %v761
        %v801 = vpack.c.b16 %v786, %v785
        %v802 = vpack.c.b16 %v788, %v787
        %v803 = vpack.c.b16 %v790, %v789
        %v804 = vpack.c.b16 %v792, %v791
        %v805 = vpack.c.b16 %v794, %v793
        %v806 = vpack.c.b16 %v796, %v795
        %v807 = vpack.c.b16 %v798, %v797
        %v808 = vpack.c.b16 %v800, %v799
        %817 = vmatprep.subr.bf16.mxu0 0
        %818 = vmatpush1.bf16.msra.mxu0 %v801
        %819 = vmatprep.subr.bf16.mxu0 0
        %820 = vmatpush1.bf16.msra.mxu0 %v802
        %821 = vmatprep.subr.bf16.mxu0 0
        %822 = vmatpush1.bf16.msra.mxu0 %v803
        %823 = vmatprep.subr.bf16.mxu0 0
        %824 = vmatpush1.bf16.msra.mxu0 %v804
        %825 = vmatprep.subr.bf16.mxu0 0
        %826 = vmatpush1.bf16.msra.mxu0 %v805
        %827 = vmatprep.subr.bf16.mxu0 0
        %828 = vmatpush1.bf16.msra.mxu0 %v806
        %829 = vmatprep.subr.bf16.mxu0 0
        %830 = vmatpush1.bf16.msra.mxu0 %v807
        %831 = vmatprep.subr.bf16.mxu0 0
        %832 = vmatpush1.bf16.msra.mxu0 %v808
        %833 = vmatprep.subr.bf16.mxu0 0
        %834 = vmatpush1.bf16.msra.mxu0 0
        %835 = vmatprep.subr.bf16.mxu0 0
        %836 = vmatpush1.bf16.msra.mxu0 0
        %837 = vmatprep.subr.bf16.mxu0 0
        %838 = vmatpush1.bf16.msra.mxu0 0
        %839 = vmatprep.subr.bf16.mxu0 0
        %840 = vmatpush1.bf16.msra.mxu0 0
        %841 = vmatprep.subr.bf16.mxu0 0
        %842 = vmatpush1.bf16.msra.mxu0 0
        %843 = vmatprep.subr.bf16.mxu0 0
        %844 = vmatpush1.bf16.msra.mxu0 0
        %845 = vmatprep.subr.bf16.mxu0 0
        %846 = vmatpush1.bf16.msra.mxu0 0
        %847 = vmatprep.subr.bf16.mxu0 0
        %848 = vmatpush1.bf16.msra.mxu0 0
        %849 = vmatprep.mubr.bf16.mxu0 0
        %850 = vmatmul.mubr.bf16.gmra.mrb[0].mxu0 %v633
        %v851 = vpop.f32.mrb[0].mxu0
        %v852 = vadd.f32 %v767, %v851
        %v853 = vpop.f32.mrb[0].mxu0
        %v854 = vpop.f32.mrb[0].mxu0
        %v855 = vadd.f32 %v767, %v854
        %v856 = vpop.f32.mrb[0].mxu0
        %857 = vdwg.mxu0
        %v858 = vpack.c.bf16 %v743, %v740
        %859 = vst [vmem:[#allocation2] sm:$0xff] %v858
        %v860 = vpack.c.bf16 %v855, %v852
        %861 = vst [vmem:[#allocation3] sm:$0xff] %v860
      $region100: #{bert_forward.2} parent=95 // pred_fallthru
        _
      %s862 = smul.u32 %s35, 16
      %s863 = scalar_lea.vmem %s615, %s862
      %v864 = vld [vmem:[%s863] sm:$0xff]
      %v865 = vld [vmem:[%s863 + $0x8] sm:$0xff]
      %v866 = vpack.c.bf16 %v865, %v864
      %v867 = vld [vmem:[%s1] sm:$0xf]
      %v868 = vld [vmem:[%s1 + $0x4] sm:$0xf]
      %v869 = vld [vmem:[%s1 + $0x8] sm:$0xf]
      %v870 = vld [vmem:[%s1 + $0xc] sm:$0xf]
      %v871 = vld [vmem:[%s1 + $0x10] sm:$0xf]
      %v872 = vld [vmem:[%s1 + $0x14] sm:$0xf]
      %v873 = vld [vmem:[%s1 + $0x18] sm:$0xf]
      %v874 = vld [vmem:[%s1 + $0x1c] sm:$0xf]
      %v875 = vld [vmem:[%s1 + $0x20] sm:$0xf]
      %v876 = vld [vmem:[%s1 + $0x24] sm:$0xf]
      %v877 = vld [vmem:[%s1 + $0x28] sm:$0xf]
      %v878 = vld [vmem:[%s1 + $0x2c] sm:$0xf]
      %v879 = vld [vmem:[%s1 + $0x30] sm:$0xf]
      %v880 = vld [vmem:[%s1 + $0x34] sm:$0xf]
      %v881 = vld [vmem:[%s1 + $0x38] sm:$0xf]
      %v882 = vld [vmem:[%s1 + $0x3c] sm:$0xf]
      %v883 = vld [vmem:[%s2] sm:$0x1]
      %v885 = vlaneseq
      %v886 = vshrl.u32 %v885, 7
      %v887 = vsub.s32 0, %v886
      %v888 = vrot.slane %v883, %v887
      %v906 = vunpack.c.l.b16 %v867
      %v907 = vunpack.c.l.b16 %v868
      %v908 = vunpack.c.l.b16 %v869
      %v909 = vunpack.c.l.b16 %v870
      %v910 = vunpack.c.l.b16 %v871
      %v911 = vunpack.c.l.b16 %v872
      %v912 = vunpack.c.l.b16 %v873
      %v913 = vunpack.c.l.b16 %v874
      %v914 = vunpack.c.l.b16 %v875
      %v915 = vunpack.c.l.b16 %v876
      %v916 = vunpack.c.l.b16 %v877
      %v917 = vunpack.c.l.b16 %v878
      %v918 = vunpack.c.l.b16 %v879
      %v919 = vunpack.c.l.b16 %v880
      %v920 = vunpack.c.l.b16 %v881
      %v921 = vunpack.c.l.b16 %v882
      %v922 = vpack.c.b16 %v907, %v906
      %v923 = vpack.c.b16 %v909, %v908
      %v924 = vpack.c.b16 %v911, %v910
      %v925 = vpack.c.b16 %v913, %v912
      %v926 = vpack.c.b16 %v915, %v914
      %v927 = vpack.c.b16 %v917, %v916
      %v928 = vpack.c.b16 %v919, %v918
      %v929 = vpack.c.b16 %v921, %v920
      %938 = vmatprep.subr.bf16.mxu0 0
      %939 = vmatpush1.bf16.msra.mxu0 %v922
      %940 = vmatprep.subr.bf16.mxu0 0
      %941 = vmatpush1.bf16.msra.mxu0 %v923
      %942 = vmatprep.subr.bf16.mxu0 0
      %943 = vmatpush1.bf16.msra.mxu0 %v924
      %944 = vmatprep.subr.bf16.mxu0 0
      %945 = vmatpush1.bf16.msra.mxu0 %v925
      %946 = vmatprep.subr.bf16.mxu0 0
      %947 = vmatpush1.bf16.msra.mxu0 %v926
      %948 = vmatprep.subr.bf16.mxu0 0
      %949 = vmatpush1.bf16.msra.mxu0 %v927
      %950 = vmatprep.subr.bf16.mxu0 0
      %951 = vmatpush1.bf16.msra.mxu0 %v928
      %952 = vmatprep.subr.bf16.mxu0 0
      %953 = vmatpush1.bf16.msra.mxu0 %v929
      %954 = vmatprep.subr.bf16.mxu0 0
      %955 = vmatpush1.bf16.msra.mxu0 0
      %956 = vmatprep.subr.bf16.mxu0 0
      %957 = vmatpush1.bf16.msra.mxu0 0
      %958 = vmatprep.subr.bf16.mxu0 0
      %959 = vmatpush1.bf16.msra.mxu0 0
      %960 = vmatprep.subr.bf16.mxu0 0
      %961 = vmatpush1.bf16.msra.mxu0 0
      %962 = vmatprep.subr.bf16.mxu0 0
      %963 = vmatpush1.bf16.msra.mxu0 0
      %964 = vmatprep.subr.bf16.mxu0 0
      %965 = vmatpush1.bf16.msra.mxu0 0
      %966 = vmatprep.subr.bf16.mxu0 0
      %967 = vmatpush1.bf16.msra.mxu0 0
      %968 = vmatprep.subr.bf16.mxu0 0
      %969 = vmatpush1.bf16.msra.mxu0 0
      %970 = vmatprep.mubr.bf16.mxu0 0
      %971 = vmatmul.mubr.bf16.gmra.mrb[0].mxu0 %v866
      %v972 = vpop.f32.mrb[0].mxu0
      %v973 = vadd.f32 %v888, %v972
      %v974 = vpop.f32.mrb[0].mxu0
      %v975 = vpop.f32.mrb[0].mxu0
      %v976 = vadd.f32 %v888, %v975
      %v977 = vpop.f32.mrb[0].mxu0
      %978 = vdwg.mxu0
      %v979 = vmul.f32 %v973, 0.17677669
      %v980 = vmul.f32 %v976, 0.17677669
      %v981 = vpack.c.bf16 %v980, %v979
      %v982 = vld [vmem:[#allocation2] sm:$0xff]
      %v983 = vld [vmem:[#allocation3] sm:$0xff]
      %vm984 = vcmask 261120
      %v986 = vsel %vm984, %v981, 0
      %v989 = vsel %vm984, %v982, 0
      %991 = vmatprep.subr.bf16.mxu0 0
      %992 = vmatpush1.bf16.xpose.msra.mxu0 %v989
      %993 = vmatprep.subr.bf16.mxu0 0
      %994 = vmatpush1.bf16.xpose.msra.mxu0 0
      %995 = vmatprep.subr.bf16.mxu0 0
      %996 = vmatpush1.bf16.xpose.msra.mxu0 0
      %997 = vmatprep.subr.bf16.mxu0 0
      %998 = vmatpush1.bf16.xpose.msra.mxu0 0
      %999 = vmatprep.subr.bf16.mxu0 0
      %1000 = vmatpush1.bf16.xpose.msra.mxu0 0
      %1001 = vmatprep.subr.bf16.mxu0 0
      %1002 = vmatpush1.bf16.xpose.msra.mxu0 0
      %1003 = vmatprep.subr.bf16.mxu0 0
      %1004 = vmatpush1.bf16.xpose.msra.mxu0 0
      %1005 = vmatprep.subr.bf16.mxu0 0
      %1006 = vmatpush1.bf16.xpose.msra.mxu0 0
      %1007 = vmatprep.subr.bf16.mxu0 0
      %1008 = vmatpush1.bf16.xpose.msra.mxu0 0
      %1009 = vmatprep.subr.bf16.mxu0 0
      %1010 = vmatpush1.bf16.xpose.msra.mxu0 0
      %1011 = vmatprep.subr.bf16.mxu0 0
      %1012 = vmatpush1.bf16.xpose.msra.mxu0 0
      %1013 = vmatprep.subr.bf16.mxu0 0
      %1014 = vmatpush1.bf16.xpose.msra.mxu0 0
      %1015 = vmatprep.subr.bf16.mxu0 0
      %1016 = vmatpush1.bf16.xpose.msra.mxu0 0
      %1017 = vmatprep.subr.bf16.mxu0 0
      %1018 = vmatpush1.bf16.xpose.msra.mxu0 0
      %1019 = vmatprep.subr.bf16.mxu0 0
      %1020 = vmatpush1.bf16.xpose.msra.mxu0 0
      %1021 = vmatprep.subr.bf16.mxu0 0
      %1022 = vmatpush1.bf16.xpose.msra.mxu0 0
      %1023 = vmatprep.mubr.bf16.mxu0 0
      %1024 = vmatmul.mubr.bf16.gmra.mrb[0].mxu0 %v986
      %v1025 = vpop.f32.mrb[0].mxu0
      %v1026 = vadd.f32 0.0, %v1025
      %v1027 = vpop.f32.mrb[0].mxu0
      %v1028 = vpop.f32.mrb[0].mxu0
      %v1029 = vadd.f32 0.0, %v1028
      %v1030 = vpop.f32.mrb[0].mxu0
      %1031 = vdwg.mxu0
      %vm1032 = vcmask 130048
      %v1033 = vsel %vm1032, %v1026, -inf
      %1034 = vmax.xlane.f32.xlu0 %v1033
      %v1035 = vpop.xlane.xlu0 %1034
      %v1036 = vsel %vm1032, %v1029, -inf
      %1037 = vmax.xlane.f32.xlu0 %v1036
      %v1038 = vpop.xlane.xlu0 %1037
      %v1039 = vsub.f32 %v1026, %v1035
      %v1040 = vsub.f32 %v1029, %v1038
      %v1041 = vmul.f32 %v1039, 1.442695
      %v1042 = vpow.pop %v1041
      %v1043 = vmul.f32 %v1040, 1.442695
      %v1044 = vpow.pop %v1043
      %v1045 = vsel %vm1032, %v1042, 0.0
      %1046 = vadd.xlane.f32.xlu0 %v1045
      %v1047 = vpop.xlane.xlu0 %1046
      %v1048 = vsel %vm1032, %v1044, 0.0
      %1049 = vadd.xlane.f32.xlu0 %v1048
      %v1050 = vpop.xlane.xlu0 %1049
      %v1051 = vrcp.pop %v1047
      %v1052 = vrcp.pop %v1050
      %v1053 = vmul.f32 %v1042, %v1051
      %v1054 = vmul.f32 %v1044, %v1052
      %v1055 = vpack.c.bf16 %v1054, %v1053
      %v1057 = vsel %vm1032, %v1055, 0
      %1059 = vmatprep.subr.bf16.mxu0 0
      %1060 = vmatpush1.bf16.msra.mxu0 %v983
      %1061 = vmatprep.subr.bf16.mxu0 0
      %1062 = vmatpush1.bf16.msra.mxu0 0
      %1063 = vmatprep.subr.bf16.mxu0 0
      %1064 = vmatpush1.bf16.msra.mxu0 0
      %1065 = vmatprep.subr.bf16.mxu0 0
      %1066 = vmatpush1.bf16.msra.mxu0 0
      %1067 = vmatprep.subr.bf16.mxu0 0
      %1068 = vmatpush1.bf16.msra.mxu0 0
      %1069 = vmatprep.subr.bf16.mxu0 0
      %1070 = vmatpush1.bf16.msra.mxu0 0
      %1071 = vmatprep.subr.bf16.mxu0 0
      %1072 = vmatpush1.bf16.msra.mxu0 0
      %1073 = vmatprep.subr.bf16.mxu0 0
      %1074 = vmatpush1.bf16.msra.mxu0 0
      %1075 = vmatprep.subr.bf16.mxu0 0
      %1076 = vmatpush1.bf16.msra.mxu0 0
      %1077 = vmatprep.subr.bf16.mxu0 0
      %1078 = vmatpush1.bf16.msra.mxu0 0
      %1079 = vmatprep.subr.bf16.mxu0 0
      %1080 = vmatpush1.bf16.msra.mxu0 0
      %1081 = vmatprep.subr.bf16.mxu0 0
      %1082 = vmatpush1.bf16.msra.mxu0 0
      %1083 = vmatprep.subr.bf16.mxu0 0
      %1084 = vmatpush1.bf16.msra.mxu0 0
      %1085 = vmatprep.subr.bf16.mxu0 0
      %1086 = vmatpush1.bf16.msra.mxu0 0
      %1087 = vmatprep.subr.bf16.mxu0 0
      %1088 = vmatpush1.bf16.msra.mxu0 0
      %1089 = vmatprep.subr.bf16.mxu0 0
      %1090 = vmatpush1.bf16.msra.mxu0 0
      %1091 = vmatprep.mubr.bf16.mxu0 0
      %1092 = vmatmul.mubr.bf16.gmra.mrb[0].mxu0 %v1057
      %v1093 = vpop.f32.mrb[0].mxu0
      %v1094 = vadd.f32 0.0, %v1093
      %v1095 = vpop.f32.mrb[0].mxu0
      %v1096 = vpop.f32.mrb[0].mxu0
      %v1097 = vadd.f32 0.0, %v1096
      %v1098 = vpop.f32.mrb[0].mxu0
      %1099 = vdwg.mxu0
      %v1100 = vpack.c.bf16 %v1097, %v1094
      %1101 = vst.msk [vmem:[#allocation4] sm:$0xff] %vm984, %v1100
      %v1102 = vld [vmem:[#allocation2] sm:$0xff]
      %v1103 = vld [vmem:[#allocation3] sm:$0xff]
      %1105 = vrot.lane.b32.xlu0 %v981, 96
      %v1106 = vpop.permute.xlu0 %1105
      %1108 = vrot.lane.b32.xlu0 %v1102, 96
      %v1109 = vpop.permute.xlu0 %1108
      %v1111 = vsel %vm984, %v1106, 0
      %v1114 = vsel %vm984, %v1109, 0
      %1116 = vmatprep.subr.bf16.mxu0 0
      %1117 = vmatpush1.bf16.xpose.msra.mxu0 %v1114
      %1118 = vmatprep.subr.bf16.mxu0 0
      %1119 = vmatpush1.bf16.xpose.msra.mxu0 0
      %1120 = vmatprep.subr.bf16.mxu0 0
      %1121 = vmatpush1.bf16.xpose.msra.mxu0 0
      %1122 = vmatprep.subr.bf16.mxu0 0
      %1123 = vmatpush1.bf16.xpose.msra.mxu0 0
      %1124 = vmatprep.subr.bf16.mxu0 0
      %1125 = vmatpush1.bf16.xpose.msra.mxu0 0
      %1126 = vmatprep.subr.bf16.mxu0 0
      %1127 = vmatpush1.bf16.xpose.msra.mxu0 0
      %1128 = vmatprep.subr.bf16.mxu0 0
      %1129 = vmatpush1.bf16.xpose.msra.mxu0 0
      %1130 = vmatprep.subr.bf16.mxu0 0
      %1131 = vmatpush1.bf16.xpose.msra.mxu0 0
      %1132 = vmatprep.subr.bf16.mxu0 0
      %1133 = vmatpush1.bf16.xpose.msra.mxu0 0
      %1134 = vmatprep.subr.bf16.mxu0 0
      %1135 = vmatpush1.bf16.xpose.msra.mxu0 0
      %1136 = vmatprep.subr.bf16.mxu0 0
      %1137 = vmatpush1.bf16.xpose.msra.mxu0 0
      %1138 = vmatprep.subr.bf16.mxu0 0
      %1139 = vmatpush1.bf16.xpose.msra.mxu0 0
      %1140 = vmatprep.subr.bf16.mxu0 0
      %1141 = vmatpush1.bf16.xpose.msra.mxu0 0
      %1142 = vmatprep.subr.bf16.mxu0 0
      %1143 = vmatpush1.bf16.xpose.msra.mxu0 0
      %1144 = vmatprep.subr.bf16.mxu0 0
      %1145 = vmatpush1.bf16.xpose.msra.mxu0 0
      %1146 = vmatprep.subr.bf16.mxu0 0
      %1147 = vmatpush1.bf16.xpose.msra.mxu0 0
      %1148 = vmatprep.mubr.bf16.mxu0 0
      %1149 = vmatmul.mubr.bf16.gmra.mrb[0].mxu0 %v1111
      %v1150 = vpop.f32.mrb[0].mxu0
      %v1151 = vadd.f32 0.0, %v1150
      %v1152 = vpop.f32.mrb[0].mxu0
      %v1153 = vpop.f32.mrb[0].mxu0
      %v1154 = vadd.f32 0.0, %v1153
      %v1155 = vpop.f32.mrb[0].mxu0
      %1156 = vdwg.mxu0
      %v1157 = vsel %vm1032, %v1151, -inf
      %1158 = vmax.xlane.f32.xlu0 %v1157
      %v1159 = vpop.xlane.xlu0 %1158
      %v1160 = vsel %vm1032, %v1154, -inf
      %1161 = vmax.xlane.f32.xlu0 %v1160
      %v1162 = vpop.xlane.xlu0 %1161
      %v1163 = vsub.f32 %v1151, %v1159
      %v1164 = vsub.f32 %v1154, %v1162
      %v1165 = vmul.f32 %v1163, 1.442695
      %v1166 = vpow.pop %v1165
      %v1167 = vmul.f32 %v1164, 1.442695
      %v1168 = vpow.pop %v1167
      %v1169 = vsel %vm1032, %v1166, 0.0
      %1170 = vadd.xlane.f32.xlu0 %v1169
      %v1171 = vpop.xlane.xlu0 %1170
      %v1172 = vsel %vm1032, %v1168, 0.0
      %1173 = vadd.xlane.f32.xlu0 %v1172
      %v1174 = vpop.xlane.xlu0 %1173
      %v1175 = vrcp.pop %v1171
      %v1176 = vrcp.pop %v1174
      %v1177 = vmul.f32 %v1166, %v1175
      %v1178 = vmul.f32 %v1168, %v1176
      %v1179 = vpack.c.bf16 %v1178, %v1177
      %1181 = vrot.lane.b32.xlu0 %v1103, 96
      %v1182 = vpop.permute.xlu0 %1181
      %v1185 = vsel %vm1032, %v1179, 0
      %1187 = vmatprep.subr.bf16.mxu0 0
      %1188 = vmatpush1.bf16.msra.mxu0 %v1182
      %1189 = vmatprep.subr.bf16.mxu0 0
      %1190 = vmatpush1.bf16.msra.mxu0 0
      %1191 = vmatprep.subr.bf16.mxu0 0
      %1192 = vmatpush1.bf16.msra.mxu0 0
      %1193 = vmatprep.subr.bf16.mxu0 0
      %1194 = vmatpush1.bf16.msra.mxu0 0
      %1195 = vmatprep.subr.bf16.mxu0 0
      %1196 = vmatpush1.bf16.msra.mxu0 0
      %1197 = vmatprep.subr.bf16.mxu0 0
      %1198 = vmatpush1.bf16.msra.mxu0 0
      %1199 = vmatprep.subr.bf16.mxu0 0
      %1200 = vmatpush1.bf16.msra.mxu0 0
      %1201 = vmatprep.subr.bf16.mxu0 0
      %1202 = vmatpush1.bf16.msra.mxu0 0
      %1203 = vmatprep.subr.bf16.mxu0 0
      %1204 = vmatpush1.bf16.msra.mxu0 0
      %1205 = vmatprep.subr.bf16.mxu0 0
      %1206 = vmatpush1.bf16.msra.mxu0 0
      %1207 = vmatprep.subr.bf16.mxu0 0
      %1208 = vmatpush1.bf16.msra.mxu0 0
      %1209 = vmatprep.subr.bf16.mxu0 0
      %1210 = vmatpush1.bf16.msra.mxu0 0
      %1211 = vmatprep.subr.bf16.mxu0 0
      %1212 = vmatpush1.bf16.msra.mxu0 0
      %1213 = vmatprep.subr.bf16.mxu0 0
      %1214 = vmatpush1.bf16.msra.mxu0 0
      %1215 = vmatprep.subr.bf16.mxu0 0
      %1216 = vmatpush1.bf16.msra.mxu0 0
      %1217 = vmatprep.subr.bf16.mxu0 0
      %1218 = vmatpush1.bf16.msra.mxu0 0
      %1219 = vmatprep.mubr.bf16.mxu0 0
      %1220 = vmatmul.mubr.bf16.gmra.mrb[0].mxu0 %v1185
      %v1221 = vpop.f32.mrb[0].mxu0
      %v1222 = vadd.f32 0.0, %v1221
      %v1223 = vpop.f32.mrb[0].mxu0
      %v1224 = vpop.f32.mrb[0].mxu0
      %v1225 = vadd.f32 0.0, %v1224
      %v1226 = vpop.f32.mrb[0].mxu0
      %1227 = vdwg.mxu0
      %v1228 = vpack.c.bf16 %v1225, %v1222
      %1230 = vrot.lane.b32.xlu0 %v1228, 32
      %v1231 = vpop.permute.xlu0 %1230
      %vm1233 = vcmask 523520
      %1234 = vst.msk [vmem:[#allocation4] sm:$0xff] %vm1233, %v1231
      %v1235 = vld [vmem:[#allocation2] sm:$0xff]
      %v1236 = vld [vmem:[#allocation3] sm:$0xff]
      %1237 = vrot.lane.b32.xlu0 %v981, 64
      %v1238 = vpop.permute.xlu0 %1237
      %1240 = vrot.lane.b32.xlu0 %v1235, 64
      %v1241 = vpop.permute.xlu0 %1240
      %v1243 = vsel %vm984, %v1238, 0
      %v1246 = vsel %vm984, %v1241, 0
      %1248 = vmatprep.subr.bf16.mxu0 0
      %1249 = vmatpush1.bf16.xpose.msra.mxu0 %v1246
      %1250 = vmatprep.subr.bf16.mxu0 0
      %1251 = vmatpush1.bf16.xpose.msra.mxu0 0
      %1252 = vmatprep.subr.bf16.mxu0 0
      %1253 = vmatpush1.bf16.xpose.msra.mxu0 0
      %1254 = vmatprep.subr.bf16.mxu0 0
      %1255 = vmatpush1.bf16.xpose.msra.mxu0 0
      %1256 = vmatprep.subr.bf16.mxu0 0
      %1257 = vmatpush1.bf16.xpose.msra.mxu0 0
      %1258 = vmatprep.subr.bf16.mxu0 0
      %1259 = vmatpush1.bf16.xpose.msra.mxu0 0
      %1260 = vmatprep.subr.bf16.mxu0 0
      %1261 = vmatpush1.bf16.xpose.msra.mxu0 0
      %1262 = vmatprep.subr.bf16.mxu0 0
      %1263 = vmatpush1.bf16.xpose.msra.mxu0 0
      %1264 = vmatprep.subr.bf16.mxu0 0
      %1265 = vmatpush1.bf16.xpose.msra.mxu0 0
      %1266 = vmatprep.subr.bf16.mxu0 0
      %1267 = vmatpush1.bf16.xpose.msra.mxu0 0
      %1268 = vmatprep.subr.bf16.mxu0 0
      %1269 = vmatpush1.bf16.xpose.msra.mxu0 0
      %1270 = vmatprep.subr.bf16.mxu0 0
      %1271 = vmatpush1.bf16.xpose.msra.mxu0 0
      %1272 = vmatprep.subr.bf16.mxu0 0
      %1273 = vmatpush1.bf16.xpose.msra.mxu0 0
      %1274 = vmatprep.subr.bf16.mxu0 0
      %1275 = vmatpush1.bf16.xpose.msra.mxu0 0
      %1276 = vmatprep.subr.bf16.mxu0 0
      %1277 = vmatpush1.bf16.xpose.msra.mxu0 0
      %1278 = vmatprep.subr.bf16.mxu0 0
      %1279 = vmatpush1.bf16.xpose.msra.mxu0 0
      %1280 = vmatprep.mubr.bf16.mxu0 0
      %1281 = vmatmul.mubr.bf16.gmra.mrb[0].mxu0 %v1243
      %v1282 = vpop.f32.mrb[0].mxu0
      %v1283 = vadd.f32 0.0, %v1282
      %v1284 = vpop.f32.mrb[0].mxu0
      %v1285 = vpop.f32.mrb[0].mxu0
      %v1286 = vadd.f32 0.0, %v1285
      %v1287 = vpop.f32.mrb[0].mxu0
      %1288 = vdwg.mxu0
      %v1289 = vsel %vm1032, %v1283, -inf
      %1290 = vmax.xlane.f32.xlu0 %v1289
      %v1291 = vpop.xlane.xlu0 %1290
      %v1292 = vsel %vm1032, %v1286, -inf
      %1293 = vmax.xlane.f32.xlu0 %v1292
      %v1294 = vpop.xlane.xlu0 %1293
      %v1295 = vsub.f32 %v1283, %v1291
      %v1296 = vsub.f32 %v1286, %v1294
      %v1297 = vmul.f32 %v1295, 1.442695
      %v1298 = vpow.pop %v1297
      %v1299 = vmul.f32 %v1296, 1.442695
      %v1300 = vpow.pop %v1299
      %v1301 = vsel %vm1032, %v1298, 0.0
      %1302 = vadd.xlane.f32.xlu0 %v1301
      %v1303 = vpop.xlane.xlu0 %1302
      %v1304 = vsel %vm1032, %v1300, 0.0
      %1305 = vadd.xlane.f32.xlu0 %v1304
      %v1306 = vpop.xlane.xlu0 %1305
      %v1307 = vrcp.pop %v1303
      %v1308 = vrcp.pop %v1306
      %v1309 = vmul.f32 %v1298, %v1307
      %v1310 = vmul.f32 %v1300, %v1308
      %v1311 = vpack.c.bf16 %v1310, %v1309
      %1313 = vrot.lane.b32.xlu0 %v1236, 64
      %v1314 = vpop.permute.xlu0 %1313
      %v1317 = vsel %vm1032, %v1311, 0
      %1319 = vmatprep.subr.bf16.mxu0 0
      %1320 = vmatpush1.bf16.msra.mxu0 %v1314
      %1321 = vmatprep.subr.bf16.mxu0 0
      %1322 = vmatpush1.bf16.msra.mxu0 0
      %1323 = vmatprep.subr.bf16.mxu0 0
      %1324 = vmatpush1.bf16.msra.mxu0 0
      %1325 = vmatprep.subr.bf16.mxu0 0
      %1326 = vmatpush1.bf16.msra.mxu0 0
      %1327 = vmatprep.subr.bf16.mxu0 0
      %1328 = vmatpush1.bf16.msra.mxu0 0
      %1329 = vmatprep.subr.bf16.mxu0 0
      %1330 = vmatpush1.bf16.msra.mxu0 0
      %1331 = vmatprep.subr.bf16.mxu0 0
      %1332 = vmatpush1.bf16.msra.mxu0 0
      %1333 = vmatprep.subr.bf16.mxu0 0
      %1334 = vmatpush1.bf16.msra.mxu0 0
      %1335 = vmatprep.subr.bf16.mxu0 0
      %1336 = vmatpush1.bf16.msra.mxu0 0
      %1337 = vmatprep.subr.bf16.mxu0 0
      %1338 = vmatpush1.bf16.msra.mxu0 0
      %1339 = vmatprep.subr.bf16.mxu0 0
      %1340 = vmatpush1.bf16.msra.mxu0 0
      %1341 = vmatprep.subr.bf16.mxu0 0
      %1342 = vmatpush1.bf16.msra.mxu0 0
      %1343 = vmatprep.subr.bf16.mxu0 0
      %1344 = vmatpush1.bf16.msra.mxu0 0
      %1345 = vmatprep.subr.bf16.mxu0 0
      %1346 = vmatpush1.bf16.msra.mxu0 0
      %1347 = vmatprep.subr.bf16.mxu0 0
      %1348 = vmatpush1.bf16.msra.mxu0 0
      %1349 = vmatprep.subr.bf16.mxu0 0
      %1350 = vmatpush1.bf16.msra.mxu0 0
      %1351 = vmatprep.mubr.bf16.mxu0 0
      %1352 = vmatmul.mubr.bf16.gmra.mrb[0].mxu0 %v1317
      %v1353 = vpop.f32.mrb[0].mxu0
      %v1354 = vadd.f32 0.0, %v1353
      %v1355 = vpop.f32.mrb[0].mxu0
      %v1356 = vpop.f32.mrb[0].mxu0
      %v1357 = vadd.f32 0.0, %v1356
      %v1358 = vpop.f32.mrb[0].mxu0
      %1359 = vdwg.mxu0
      %v1360 = vpack.c.bf16 %v1357, %v1354
      %1362 = vrot.lane.b32.xlu0 %v1360, 64
      %v1363 = vpop.permute.xlu0 %1362
      %vm1365 = vcmask 785920
      %1366 = vst.msk [vmem:[#allocation4] sm:$0xff] %vm1365, %v1363
      %v1367 = vld [vmem:[#allocation2] sm:$0xff]
      %v1368 = vld [vmem:[#allocation3] sm:$0xff]
      %1369 = vrot.lane.b32.xlu0 %v981, 32
      %v1370 = vpop.permute.xlu0 %1369
      %1372 = vrot.lane.b32.xlu0 %v1367, 32
      %v1373 = vpop.permute.xlu0 %1372
      %v1375 = vsel %vm984, %v1370, 0
      %v1378 = vsel %vm984, %v1373, 0
      %1380 = vmatprep.subr.bf16.mxu0 0
      %1381 = vmatpush1.bf16.xpose.msra.mxu0 %v1378
      %1382 = vmatprep.subr.bf16.mxu0 0
      %1383 = vmatpush1.bf16.xpose.msra.mxu0 0
      %1384 = vmatprep.subr.bf16.mxu0 0
      %1385 = vmatpush1.bf16.xpose.msra.mxu0 0
      %1386 = vmatprep.subr.bf16.mxu0 0
      %1387 = vmatpush1.bf16.xpose.msra.mxu0 0
      %1388 = vmatprep.subr.bf16.mxu0 0
      %1389 = vmatpush1.bf16.xpose.msra.mxu0 0
      %1390 = vmatprep.subr.bf16.mxu0 0
      %1391 = vmatpush1.bf16.xpose.msra.mxu0 0
      %1392 = vmatprep.subr.bf16.mxu0 0
      %1393 = vmatpush1.bf16.xpose.msra.mxu0 0
      %1394 = vmatprep.subr.bf16.mxu0 0
      %1395 = vmatpush1.bf16.xpose.msra.mxu0 0
      %1396 = vmatprep.subr.bf16.mxu0 0
      %1397 = vmatpush1.bf16.xpose.msra.mxu0 0
      %1398 = vmatprep.subr.bf16.mxu0 0
      %1399 = vmatpush1.bf16.xpose.msra.mxu0 0
      %1400 = vmatprep.subr.bf16.mxu0 0
      %1401 = vmatpush1.bf16.xpose.msra.mxu0 0
      %1402 = vmatprep.subr.bf16.mxu0 0
      %1403 = vmatpush1.bf16.xpose.msra.mxu0 0
      %1404 = vmatprep.subr.bf16.mxu0 0
      %1405 = vmatpush1.bf16.xpose.msra.mxu0 0
      %1406 = vmatprep.subr.bf16.mxu0 0
      %1407 = vmatpush1.bf16.xpose.msra.mxu0 0
      %1408 = vmatprep.subr.bf16.mxu0 0
      %1409 = vmatpush1.bf16.xpose.msra.mxu0 0
      %1410 = vmatprep.subr.bf16.mxu0 0
      %1411 = vmatpush1.bf16.xpose.msra.mxu0 0
      %1412 = vmatprep.mubr.bf16.mxu0 0
      %1413 = vmatmul.mubr.bf16.gmra.mrb[0].mxu0 %v1375
      %v1414 = vpop.f32.mrb[0].mxu0
      %v1415 = vadd.f32 0.0, %v1414
      %v1416 = vpop.f32.mrb[0].mxu0
      %v1417 = vpop.f32.mrb[0].mxu0
      %v1418 = vadd.f32 0.0, %v1417
      %v1419 = vpop.f32.mrb[0].mxu0
      %1420 = vdwg.mxu0
      %v1421 = vsel %vm1032, %v1415, -inf
      %1422 = vmax.xlane.f32.xlu0 %v1421
      %v1423 = vpop.xlane.xlu0 %1422
      %v1424 = vsel %vm1032, %v1418, -inf
      %1425 = vmax.xlane.f32.xlu0 %v1424
      %v1426 = vpop.xlane.xlu0 %1425
      %v1427 = vsub.f32 %v1415, %v1423
      %v1428 = vsub.f32 %v1418, %v1426
      %v1429 = vmul.f32 %v1427, 1.442695
      %v1430 = vpow.pop %v1429
      %v1431 = vmul.f32 %v1428, 1.442695
      %v1432 = vpow.pop %v1431
      %v1433 = vsel %vm1032, %v1430, 0.0
      %1434 = vadd.xlane.f32.xlu0 %v1433
      %v1435 = vpop.xlane.xlu0 %1434
      %v1436 = vsel %vm1032, %v1432, 0.0
      %1437 = vadd.xlane.f32.xlu0 %v1436
      %v1438 = vpop.xlane.xlu0 %1437
      %v1439 = vrcp.pop %v1435
      %v1440 = vrcp.pop %v1438
      %v1441 = vmul.f32 %v1430, %v1439
      %v1442 = vmul.f32 %v1432, %v1440
      %v1443 = vpack.c.bf16 %v1442, %v1441
      %1445 = vrot.lane.b32.xlu0 %v1368, 32
      %v1446 = vpop.permute.xlu0 %1445
      %v1449 = vsel %vm1032, %v1443, 0
      %1451 = vmatprep.subr.bf16.mxu0 0
      %1452 = vmatpush1.bf16.msra.mxu0 %v1446
      %1453 = vmatprep.subr.bf16.mxu0 0
      %1454 = vmatpush1.bf16.msra.mxu0 0
      %1455 = vmatprep.subr.bf16.mxu0 0
      %1456 = vmatpush1.bf16.msra.mxu0 0
      %1457 = vmatprep.subr.bf16.mxu0 0
      %1458 = vmatpush1.bf16.msra.mxu0 0
      %1459 = vmatprep.subr.bf16.mxu0 0
      %1460 = vmatpush1.bf16.msra.mxu0 0
      %1461 = vmatprep.subr.bf16.mxu0 0
      %1462 = vmatpush1.bf16.msra.mxu0 0
      %1463 = vmatprep.subr.bf16.mxu0 0
      %1464 = vmatpush1.bf16.msra.mxu0 0
      %1465 = vmatprep.subr.bf16.mxu0 0
      %1466 = vmatpush1.bf16.msra.mxu0 0
      %1467 = vmatprep.subr.bf16.mxu0 0
      %1468 = vmatpush1.bf16.msra.mxu0 0
      %1469 = vmatprep.subr.bf16.mxu0 0
      %1470 = vmatpush1.bf16.msra.mxu0 0
      %1471 = vmatprep.subr.bf16.mxu0 0
      %1472 = vmatpush1.bf16.msra.mxu0 0
      %1473 = vmatprep.subr.bf16.mxu0 0
      %1474 = vmatpush1.bf16.msra.mxu0 0
      %1475 = vmatprep.subr.bf16.mxu0 0
      %1476 = vmatpush1.bf16.msra.mxu0 0
      %1477 = vmatprep.subr.bf16.mxu0 0
      %1478 = vmatpush1.bf16.msra.mxu0 0
      %1479 = vmatprep.subr.bf16.mxu0 0
      %1480 = vmatpush1.bf16.msra.mxu0 0
      %1481 = vmatprep.subr.bf16.mxu0 0
      %1482 = vmatpush1.bf16.msra.mxu0 0
      %1483 = vmatprep.mubr.bf16.mxu0 0
      %1484 = vmatmul.mubr.bf16.gmra.mrb[0].mxu0 %v1449
      %v1485 = vpop.f32.mrb[0].mxu0
      %v1486 = vadd.f32 0.0, %v1485
      %v1487 = vpop.f32.mrb[0].mxu0
      %v1488 = vpop.f32.mrb[0].mxu0
      %v1489 = vadd.f32 0.0, %v1488
      %v1490 = vpop.f32.mrb[0].mxu0
      %1491 = vdwg.mxu0
      %v1492 = vpack.c.bf16 %v1489, %v1486
      %1494 = vrot.lane.b32.xlu0 %v1492, 96
      %v1495 = vpop.permute.xlu0 %1494
      %vm1497 = vcmask 1048320
      %1498 = vst.msk [vmem:[#allocation4] sm:$0xff] %vm1497, %v1495
      %v1499 = vld [vmem:[#allocation4] sm:$0xff]
      %v1500 = vld [vmem:[%s7] sm:$0xf]
      %v1501 = vld [vmem:[%s7 + $0x4] sm:$0xf]
      %v1502 = vld [vmem:[%s7 + $0x8] sm:$0xf]
      %v1503 = vld [vmem:[%s7 + $0xc] sm:$0xf]
      %v1504 = vld [vmem:[%s7 + $0x10] sm:$0xf]
      %v1505 = vld [vmem:[%s7 + $0x14] sm:$0xf]
      %v1506 = vld [vmem:[%s7 + $0x18] sm:$0xf]
      %v1507 = vld [vmem:[%s7 + $0x1c] sm:$0xf]
      %v1508 = vld [vmem:[%s7 + $0x20] sm:$0xf]
      %v1509 = vld [vmem:[%s7 + $0x24] sm:$0xf]
      %v1510 = vld [vmem:[%s7 + $0x28] sm:$0xf]
      %v1511 = vld [vmem:[%s7 + $0x2c] sm:$0xf]
      %v1512 = vld [vmem:[%s7 + $0x30] sm:$0xf]
      %v1513 = vld [vmem:[%s7 + $0x34] sm:$0xf]
      %v1514 = vld [vmem:[%s7 + $0x38] sm:$0xf]
      %v1515 = vld [vmem:[%s7 + $0x3c] sm:$0xf]
      %v1516 = vld [vmem:[%s8] sm:$0x1]
      %v1518 = vlaneseq
      %v1519 = vshrl.u32 %v1518, 7
      %v1520 = vsub.s32 0, %v1519
      %v1521 = vrot.slane %v1516, %v1520
      %v1539 = vunpack.c.l.b16 %v1500
      %v1540 = vunpack.c.l.b16 %v1501
      %v1541 = vunpack.c.l.b16 %v1502
      %v1542 = vunpack.c.l.b16 %v1503
      %v1543 = vunpack.c.l.b16 %v1504
      %v1544 = vunpack.c.l.b16 %v1505
      %v1545 = vunpack.c.l.b16 %v1506
      %v1546 = vunpack.c.l.b16 %v1507
      %v1547 = vunpack.c.l.b16 %v1508
      %v1548 = vunpack.c.l.b16 %v1509
      %v1549 = vunpack.c.l.b16 %v1510
      %v1550 = vunpack.c.l.b16 %v1511
      %v1551 = vunpack.c.l.b16 %v1512
      %v1552 = vunpack.c.l.b16 %v1513
      %v1553 = vunpack.c.l.b16 %v1514
      %v1554 = vunpack.c.l.b16 %v1515
      %v1555 = vpack.c.b16 %v1540, %v1539
      %v1556 = vpack.c.b16 %v1542, %v1541
      %v1557 = vpack.c.b16 %v1544, %v1543
      %v1558 = vpack.c.b16 %v1546, %v1545
      %v1559 = vpack.c.b16 %v1548, %v1547
      %v1560 = vpack.c.b16 %v1550, %v1549
      %v1561 = vpack.c.b16 %v1552, %v1551
      %v1562 = vpack.c.b16 %v1554, %v1553
      %1571 = vmatprep.subr.bf16.mxu0 0
      %1572 = vmatpush1.bf16.msra.mxu0 %v1555
      %1573 = vmatprep.subr.bf16.mxu0 0
      %1574 = vmatpush1.bf16.msra.mxu0 %v1556
      %1575 = vmatprep.subr.bf16.mxu0 0
      %1576 = vmatpush1.bf16.msra.mxu0 %v1557
      %1577 = vmatprep.subr.bf16.mxu0 0
      %1578 = vmatpush1.bf16.msra.mxu0 %v1558
      %1579 = vmatprep.subr.bf16.mxu0 0
      %1580 = vmatpush1.bf16.msra.mxu0 %v1559
      %1581 = vmatprep.subr.bf16.mxu0 0
      %1582 = vmatpush1.bf16.msra.mxu0 %v1560
      %1583 = vmatprep.subr.bf16.mxu0 0
      %1584 = vmatpush1.bf16.msra.mxu0 %v1561
      %1585 = vmatprep.subr.bf16.mxu0 0
      %1586 = vmatpush1.bf16.msra.mxu0 %v1562
      %1587 = vmatprep.subr.bf16.mxu0 0
      %1588 = vmatpush1.bf16.msra.mxu0 0
      %1589 = vmatprep.subr.bf16.mxu0 0
      %1590 = vmatpush1.bf16.msra.mxu0 0
      %1591 = vmatprep.subr.bf16.mxu0 0
      %1592 = vmatpush1.bf16.msra.mxu0 0
      %1593 = vmatprep.subr.bf16.mxu0 0
      %1594 = vmatpush1.bf16.msra.mxu0 0
      %1595 = vmatprep.subr.bf16.mxu0 0
      %1596 = vmatpush1.bf16.msra.mxu0 0
      %1597 = vmatprep.subr.bf16.mxu0 0
      %1598 = vmatpush1.bf16.msra.mxu0 0
      %1599 = vmatprep.subr.bf16.mxu0 0
      %1600 = vmatpush1.bf16.msra.mxu0 0
      %1601 = vmatprep.subr.bf16.mxu0 0
      %1602 = vmatpush1.bf16.msra.mxu0 0
      %1603 = vmatprep.mubr.bf16.mxu0 0
      %1604 = vmatmul.mubr.bf16.gmra.mrb[0].mxu0 %v1499
      %v1605 = vpop.f32.mrb[0].mxu0
      %v1606 = vadd.f32 %v1521, %v1605
      %v1607 = vpop.f32.mrb[0].mxu0
      %v1608 = vpop.f32.mrb[0].mxu0
      %v1609 = vadd.f32 %v1521, %v1608
      %v1610 = vpop.f32.mrb[0].mxu0
      %1611 = vdwg.mxu0
      %v1612 = vadd.f32 %v864, %v1606
      %v1613 = vadd.f32 %v865, %v1609
      %v1614 = vld [vmem:[%s13] sm:$0x1]
      %v1615 = vld [vmem:[%s14] sm:$0x1]
      %1616 = vadd.xlane.f32.xlu0 %v1612
      %v1617 = vpop.xlane.xlu0 %1616
      %1618 = vadd.xlane.f32.xlu0 %v1613
      %v1619 = vpop.xlane.xlu0 %1618
      %v1620 = vrcp.pop 128.0
      %v1621 = vmul.f32 %v1617, %v1620
      %v1622 = vmul.f32 %v1619, %v1620
      %v1623 = vsub.f32 %v1612, %v1621
      %v1624 = vsub.f32 %v1613, %v1622
      %v1625 = vmul.f32 %v1623, %v1623
      %v1626 = vmul.f32 %v1624, %v1624
      %1627 = vadd.xlane.f32.xlu0 %v1625
      %v1628 = vpop.xlane.xlu0 %1627
      %1629 = vadd.xlane.f32.xlu0 %v1626
      %v1630 = vpop.xlane.xlu0 %1629
      %v1631 = vmul.f32 %v1628, %v1620
      %v1632 = vmul.f32 %v1630, %v1620
      %v1633 = vadd.f32 %v1631, 1e-05
      %v1634 = vadd.f32 %v1632, 1e-05
      %v1635 = vrsqrt.pop %v1633
      %v1636 = vrsqrt.pop %v1634
      %v1637 = vmul.f32 %v1623, %v1635
      %v1638 = vmul.f32 %v1624, %v1636
      %v1640 = vlaneseq
      %v1641 = vshrl.u32 %v1640, 7
      %v1642 = vsub.s32 0, %v1641
      %v1643 = vrot.slane %v1614, %v1642
      %v1645 = vmul.f32 %v1637, %v1643
      %v1646 = vmul.f32 %v1638, %v1643
      %v1648 = vlaneseq
      %v1649 = vshrl.u32 %v1648, 7
      %v1650 = vsub.s32 0, %v1649
      %v1651 = vrot.slane %v1615, %v1650
      %v1653 = vadd.f32 %v1645, %v1651
      %v1654 = vadd.f32 %v1646, %v1651
      %v1655 = vpack.c.bf16 %v1654, %v1653
      %v1656 = vld [vmem:[%s9] sm:$0xff]
      %v1657 = vld [vmem:[%s9 + $0x8] sm:$0xff]
      %v1658 = vld [vmem:[%s9 + $0x10] sm:$0xff]
      %v1659 = vld [vmem:[%s9 + $0x18] sm:$0xff]
      %v1660 = vld [vmem:[%s9 + $0x20] sm:$0xff]
      %v1661 = vld [vmem:[%s9 + $0x28] sm:$0xff]
      %v1662 = vld [vmem:[%s9 + $0x30] sm:$0xff]
      %v1663 = vld [vmem:[%s9 + $0x38] sm:$0xff]
      %v1664 = vld [vmem:[%s9 + $0x40] sm:$0xff]
      %v1665 = vld [vmem:[%s9 + $0x48] sm:$0xff]
      %v1666 = vld [vmem:[%s9 + $0x50] sm:$0xff]
      %v1667 = vld [vmem:[%s9 + $0x58] sm:$0xff]
      %v1668 = vld [vmem:[%s9 + $0x60] sm:$0xff]
      %v1669 = vld [vmem:[%s9 + $0x68] sm:$0xff]
      %v1670 = vld [vmem:[%s9 + $0x70] sm:$0xff]
      %v1671 = vld [vmem:[%s9 + $0x78] sm:$0xff]
      %v1672 = vld [vmem:[%s10] sm:$0x3]
      %v1674 = vlaneseq
      %v1675 = vshrl.u32 %v1674, 7
      %v1676 = vsub.s32 0, %v1675
      %v1677 = vrot.slane %v1672, %v1676
      %v1678 = vlaneseq
      %v1679 = vshrl.u32 %v1678, 7
      %v1680 = vsub.s32 1, %v1679
      %v1681 = vrot.slane %v1672, %v1680
      %v1700 = vunpack.c.l.b16 %v1656
      %v1701 = vunpack.c.h.b16 %v1656
      %v1702 = vunpack.c.l.b16 %v1657
      %v1703 = vunpack.c.h.b16 %v1657
      %v1704 = vunpack.c.l.b16 %v1658
      %v1705 = vunpack.c.h.b16 %v1658
      %v1706 = vunpack.c.l.b16 %v1659
      %v1707 = vunpack.c.h.b16 %v1659
      %v1708 = vunpack.c.l.b16 %v1660
      %v1709 = vunpack.c.h.b16 %v1660
      %v1710 = vunpack.c.l.b16 %v1661
      %v1711 = vunpack.c.h.b16 %v1661
      %v1712 = vunpack.c.l.b16 %v1662
      %v1713 = vunpack.c.h.b16 %v1662
      %v1714 = vunpack.c.l.b16 %v1663
      %v1715 = vunpack.c.h.b16 %v1663
      %v1716 = vunpack.c.l.b16 %v1664
      %v1717 = vunpack.c.h.b16 %v1664
      %v1718 = vunpack.c.l.b16 %v1665
      %v1719 = vunpack.c.h.b16 %v1665
      %v1720 = vunpack.c.l.b16 %v1666
      %v1721 = vunpack.c.h.b16 %v1666
      %v1722 = vunpack.c.l.b16 %v1667
      %v1723 = vunpack.c.h.b16 %v1667
      %v1724 = vunpack.c.l.b16 %v1668
      %v1725 = vunpack.c.h.b16 %v1668
      %v1726 = vunpack.c.l.b16 %v1669
      %v1727 = vunpack.c.h.b16 %v1669
      %v1728 = vunpack.c.l.b16 %v1670
      %v1729 = vunpack.c.h.b16 %v1670
      %v1730 = vunpack.c.l.b16 %v1671
      %v1731 = vunpack.c.h.b16 %v1671
      %v1732 = vpack.c.b16 %v1702, %v1700
      %v1733 = vpack.c.b16 %v1703, %v1701
      %v1734 = vpack.c.b16 %v1706, %v1704
      %v1735 = vpack.c.b16 %v1707, %v1705
      %v1736 = vpack.c.b16 %v1710, %v1708
      %v1737 = vpack.c.b16 %v1711, %v1709
      %v1738 = vpack.c.b16 %v1714, %v1712
      %v1739 = vpack.c.b16 %v1715, %v1713
      %v1740 = vpack.c.b16 %v1718, %v1716
      %v1741 = vpack.c.b16 %v1719, %v1717
      %v1742 = vpack.c.b16 %v1722, %v1720
      %v1743 = vpack.c.b16 %v1723, %v1721
      %v1744 = vpack.c.b16 %v1726, %v1724
      %v1745 = vpack.c.b16 %v1727, %v1725
      %v1746 = vpack.c.b16 %v1730, %v1728
      %v1747 = vpack.c.b16 %v1731, %v1729
      %1764 = vmatprep.subr.bf16.mxu0 %v1733
      %1765 = vmatpush1.bf16.msra.mxu0 %v1732
      %1766 = vmatprep.subr.bf16.mxu0 %v1735
      %1767 = vmatpush1.bf16.msra.mxu0 %v1734
      %1768 = vmatprep.subr.bf16.mxu0 %v1737
      %1769 = vmatpush1.bf16.msra.mxu0 %v1736
      %1770 = vmatprep.subr.bf16.mxu0 %v1739
      %1771 = vmatpush1.bf16.msra.mxu0 %v1738
      %1772 = vmatprep.subr.bf16.mxu0 %v1741
      %1773 = vmatpush1.bf16.msra.mxu0 %v1740
      %1774 = vmatprep.subr.bf16.mxu0 %v1743
      %1775 = vmatpush1.bf16.msra.mxu0 %v1742
      %1776 = vmatprep.subr.bf16.mxu0 %v1745
      %1777 = vmatpush1.bf16.msra.mxu0 %v1744
      %1778 = vmatprep.subr.bf16.mxu0 %v1747
      %1779 = vmatpush1.bf16.msra.mxu0 %v1746
      %1780 = vmatprep.subr.bf16.mxu0 0
      %1781 = vmatpush1.bf16.msra.mxu0 0
      %1782 = vmatprep.subr.bf16.mxu0 0
      %1783 = vmatpush1.bf16.msra.mxu0 0
      %1784 = vmatprep.subr.bf16.mxu0 0
      %1785 = vmatpush1.bf16.msra.mxu0 0
      %1786 = vmatprep.subr.bf16.mxu0 0
      %1787 = vmatpush1.bf16.msra.mxu0 0
      %1788 = vmatprep.subr.bf16.mxu0 0
      %1789 = vmatpush1.bf16.msra.mxu0 0
      %1790 = vmatprep.subr.bf16.mxu0 0
      %1791 = vmatpush1.bf16.msra.mxu0 0
      %1792 = vmatprep.subr.bf16.mxu0 0
      %1793 = vmatpush1.bf16.msra.mxu0 0
      %1794 = vmatprep.subr.bf16.mxu0 0
      %1795 = vmatpush1.bf16.msra.mxu0 0
      %1796 = vmatprep.mubr.bf16.mxu0 0
      %1797 = vmatmul.mubr.bf16.gmra.mrb[0].mxu0 %v1655
      %v1798 = vpop.f32.mrb[0].mxu0
      %v1799 = vadd.f32 %v1677, %v1798
      %v1800 = vpop.f32.mrb[0].mxu0
      %v1801 = vadd.f32 %v1681, %v1800
      %v1802 = vpop.f32.mrb[0].mxu0
      %v1803 = vadd.f32 %v1677, %v1802
      %v1804 = vpop.f32.mrb[0].mxu0
      %v1805 = vadd.f32 %v1681, %v1804
      %1806 = vdwg.mxu0
      %v1807 = vmax.f32 %v1799, 0.0
      %v1808 = vmax.f32 %v1801, 0.0
      %v1809 = vmax.f32 %v1803, 0.0
      %v1810 = vmax.f32 %v1805, 0.0
      %v1811 = vpack.c.bf16 %v1809, %v1807
      %v1812 = vpack.c.bf16 %v1810, %v1808
      %v1813 = vld [vmem:[%s11] sm:$0xf]
      %v1814 = vld [vmem:[%s11 + $0x4] sm:$0xf]
      %v1815 = vld [vmem:[%s11 + $0x8] sm:$0xf]
      %v1816 = vld [vmem:[%s11 + $0xc] sm:$0xf]
      %v1817 = vld [vmem:[%s11 + $0x10] sm:$0xf]
      %v1818 = vld [vmem:[%s11 + $0x14] sm:$0xf]
      %v1819 = vld [vmem:[%s11 + $0x18] sm:$0xf]
      %v1820 = vld [vmem:[%s11 + $0x1c] sm:$0xf]
      %v1821 = vld [vmem:[%s11 + $0x20] sm:$0xf]
      %v1822 = vld [vmem:[%s11 + $0x24] sm:$0xf]
      %v1823 = vld [vmem:[%s11 + $0x28] sm:$0xf]
      %v1824 = vld [vmem:[%s11 + $0x2c] sm:$0xf]
      %v1825 = vld [vmem:[%s11 + $0x30] sm:$0xf]
      %v1826 = vld [vmem:[%s11 + $0x34] sm:$0xf]
      %v1827 = vld [vmem:[%s11 + $0x38] sm:$0xf]
      %v1828 = vld [vmem:[%s11 + $0x3c] sm:$0xf]
      %v1829 = vld [vmem:[%s11 + $0x40] sm:$0xf]
      %v1830 = vld [vmem:[%s11 + $0x44] sm:$0xf]
      %v1831 = vld [vmem:[%s11 + $0x48] sm:$0xf]
      %v1832 = vld [vmem:[%s11 + $0x4c] sm:$0xf]
      %v1833 = vld [vmem:[%s11 + $0x50] sm:$0xf]
      %v1834 = vld [vmem:[%s11 + $0x54] sm:$0xf]
      %v1835 = vld [vmem:[%s11 + $0x58] sm:$0xf]
      %v1836 = vld [vmem:[%s11 + $0x5c] sm:$0xf]
      %v1837 = vld [vmem:[%s11 + $0x60] sm:$0xf]
      %v1838 = vld [vmem:[%s11 + $0x64] sm:$0xf]
      %v1839 = vld [vmem:[%s11 + $0x68] sm:$0xf]
      %v1840 = vld [vmem:[%s11 + $0x6c] sm:$0xf]
      %v1841 = vld [vmem:[%s11 + $0x70] sm:$0xf]
      %v1842 = vld [vmem:[%s11 + $0x74] sm:$0xf]
      %v1843 = vld [vmem:[%s11 + $0x78] sm:$0xf]
      %v1844 = vld [vmem:[%s11 + $0x7c] sm:$0xf]
      %v1845 = vld [vmem:[%s12] sm:$0x1]
      %v1847 = vlaneseq
      %v1848 = vshrl.u32 %v1847, 7
      %v1849 = vsub.s32 0, %v1848
      %v1850 = vrot.slane %v1845, %v1849
      %v1884 = vunpack.c.l.b16 %v1813
      %v1885 = vunpack.c.l.b16 %v1814
      %v1886 = vunpack.c.l.b16 %v1815
      %v1887 = vunpack.c.l.b16 %v1816
      %v1888 = vunpack.c.l.b16 %v1817
      %v1889 = vunpack.c.l.b16 %v1818
      %v1890 = vunpack.c.l.b16 %v1819
      %v1891 = vunpack.c.l.b16 %v1820
      %v1892 = vunpack.c.l.b16 %v1821
      %v1893 = vunpack.c.l.b16 %v1822
      %v1894 = vunpack.c.l.b16 %v1823
      %v1895 = vunpack.c.l.b16 %v1824
      %v1896 = vunpack.c.l.b16 %v1825
      %v1897 = vunpack.c.l.b16 %v1826
      %v1898 = vunpack.c.l.b16 %v1827
      %v1899 = vunpack.c.l.b16 %v1828
      %v1900 = vunpack.c.l.b16 %v1829
      %v1901 = vunpack.c.l.b16 %v1830
      %v1902 = vunpack.c.l.b16 %v1831
      %v1903 = vunpack.c.l.b16 %v1832
      %v1904 = vunpack.c.l.b16 %v1833
      %v1905 = vunpack.c.l.b16 %v1834
      %v1906 = vunpack.c.l.b16 %v1835
      %v1907 = vunpack.c.l.b16 %v1836
      %v1908 = vunpack.c.l.b16 %v1837
      %v1909 = vunpack.c.l.b16 %v1838
      %v1910 = vunpack.c.l.b16 %v1839
      %v1911 = vunpack.c.l.b16 %v1840
      %v1912 = vunpack.c.l.b16 %v1841
      %v1913 = vunpack.c.l.b16 %v1842
      %v1914 = vunpack.c.l.b16 %v1843
      %v1915 = vunpack.c.l.b16 %v1844
      %v1916 = vpack.c.b16 %v1885, %v1884
      %v1917 = vpack.c.b16 %v1887, %v1886
      %v1918 = vpack.c.b16 %v1889, %v1888
      %v1919 = vpack.c.b16 %v1891, %v1890
      %v1920 = vpack.c.b16 %v1893, %v1892
      %v1921 = vpack.c.b16 %v1895, %v1894
      %v1922 = vpack.c.b16 %v1897, %v1896
      %v1923 = vpack.c.b16 %v1899, %v1898
      %v1924 = vpack.c.b16 %v1901, %v1900
      %v1925 = vpack.c.b16 %v1903, %v1902
      %v1926 = vpack.c.b16 %v1905, %v1904
      %v1927 = vpack.c.b16 %v1907, %v1906
      %v1928 = vpack.c.b16 %v1909, %v1908
      %v1929 = vpack.c.b16 %v1911, %v1910
      %v1930 = vpack.c.b16 %v1913, %v1912
      %v1931 = vpack.c.b16 %v1915, %v1914
      %1948 = vmatprep.subr.bf16.mxu0 0
      %1949 = vmatpush1.bf16.msra.mxu0 %v1916
      %1950 = vmatprep.subr.bf16.mxu0 0
      %1951 = vmatpush1.bf16.msra.mxu0 %v1917
      %1952 = vmatprep.subr.bf16.mxu0 0
      %1953 = vmatpush1.bf16.msra.mxu0 %v1918
      %1954 = vmatprep.subr.bf16.mxu0 0
      %1955 = vmatpush1.bf16.msra.mxu0 %v1919
      %1956 = vmatprep.subr.bf16.mxu0 0
      %1957 = vmatpush1.bf16.msra.mxu0 %v1920
      %1958 = vmatprep.subr.bf16.mxu0 0
      %1959 = vmatpush1.bf16.msra.mxu0 %v1921
      %1960 = vmatprep.subr.bf16.mxu0 0
      %1961 = vmatpush1.bf16.msra.mxu0 %v1922
      %1962 = vmatprep.subr.bf16.mxu0 0
      %1963 = vmatpush1.bf16.msra.mxu0 %v1923
      %1964 = vmatprep.subr.bf16.mxu0 0
      %1965 = vmatpush1.bf16.msra.mxu0 %v1924
      %1966 = vmatprep.subr.bf16.mxu0 0
      %1967 = vmatpush1.bf16.msra.mxu0 %v1925
      %1968 = vmatprep.subr.bf16.mxu0 0
      %1969 = vmatpush1.bf16.msra.mxu0 %v1926
      %1970 = vmatprep.subr.bf16.mxu0 0
      %1971 = vmatpush1.bf16.msra.mxu0 %v1927
      %1972 = vmatprep.subr.bf16.mxu0 0
      %1973 = vmatpush1.bf16.msra.mxu0 %v1928
      %1974 = vmatprep.subr.bf16.mxu0 0
      %1975 = vmatpush1.bf16.msra.mxu0 %v1929
      %1976 = vmatprep.subr.bf16.mxu0 0
      %1977 = vmatpush1.bf16.msra.mxu0 %v1930
      %1978 = vmatprep.subr.bf16.mxu0 0
      %1979 = vmatpush1.bf16.msra.mxu0 %v1931
      %1980 = vmatprep.mubr.bf16.mxu0 %v1812
      %1981 = vmatmul.mubr.bf16.gmra.mrb[0].mxu0 %v1811
      %v1982 = vpop.f32.mrb[0].mxu0
      %v1983 = vadd.f32 %v1850, %v1982
      %v1984 = vpop.f32.mrb[0].mxu0
      %v1985 = vpop.f32.mrb[0].mxu0
      %v1986 = vadd.f32 %v1850, %v1985
      %v1987 = vpop.f32.mrb[0].mxu0
      %1988 = vdwg.mxu0
      %v1989 = vadd.f32 %v1653, %v1983
      %v1990 = vadd.f32 %v1654, %v1986
      %v1991 = vld [vmem:[%s15] sm:$0x1]
      %v1992 = vld [vmem:[%s16] sm:$0x1]
      %1993 = vadd.xlane.f32.xlu0 %v1989
      %v1994 = vpop.xlane.xlu0 %1993
      %1995 = vadd.xlane.f32.xlu0 %v1990
      %v1996 = vpop.xlane.xlu0 %1995
      %v1997 = vmul.f32 %v1994, %v1620
      %v1998 = vmul.f32 %v1996, %v1620
      %v1999 = vsub.f32 %v1989, %v1997
      %v2000 = vsub.f32 %v1990, %v1998
      %v2001 = vmul.f32 %v1999, %v1999
      %v2002 = vmul.f32 %v2000, %v2000
      %2003 = vadd.xlane.f32.xlu0 %v2001
      %v2004 = vpop.xlane.xlu0 %2003
      %2005 = vadd.xlane.f32.xlu0 %v2002
      %v2006 = vpop.xlane.xlu0 %2005
      %v2007 = vmul.f32 %v2004, %v1620
      %v2008 = vmul.f32 %v2006, %v1620
      %v2009 = vadd.f32 %v2007, 1e-05
      %v2010 = vadd.f32 %v2008, 1e-05
      %v2011 = vrsqrt.pop %v2009
      %v2012 = vrsqrt.pop %v2010
      %v2013 = vmul.f32 %v1999, %v2011
      %v2014 = vmul.f32 %v2000, %v2012
      %v2016 = vlaneseq
      %v2017 = vshrl.u32 %v2016, 7
      %v2018 = vsub.s32 0, %v2017
      %v2019 = vrot.slane %v1991, %v2018
      %v2021 = vmul.f32 %v2013, %v2019
      %v2022 = vmul.f32 %v2014, %v2019
      %v2024 = vlaneseq
      %v2025 = vshrl.u32 %v2024, 7
      %v2026 = vsub.s32 0, %v2025
      %v2027 = vrot.slane %v1992, %v2026
      %v2029 = vadd.f32 %v2021, %v2027
      %v2030 = vadd.f32 %v2022, %v2027
      %2031 = vst [vmem:[%s624] sm:$0xff] %v2029
      %2032 = vst [vmem:[%s624 + $0x8] sm:$0xff] %v2030
      %s2033 = smul.u32 2, %s35
      %p2034 = scmp.lt.s32.totalorder %s34, 1
      %s2035 = scalar_select %p2034, %s34, 1
      %p2036 = scmp.lt.s32.totalorder %s2033, 1
      %s2037 = scalar_select %p2036, %s2033, 1
      %s2038 = smul.addr %s2035, 2
      %s2039 = sadd.s32 %s2037, %s2038
      %s2040 = smul.addr %s2039, 8
      %s2041 = scalar_lea.vmem %s19, %s2040
      // Predicated region
      $region101: #{bert_forward.2} parent=95 // pred_check
        %p2042 = pneg %p466
      $region102: #{bert_forward.2} parent=95 // pred_check_branch
        %2044 = sbr.rel (%p2042) target = $region104
      $region103: #{bert_forward.2} parent=95 // pred_region
        %s2045 = smul.u32 2, %s35
      $region104: #{bert_forward.2} parent=95 // pred_fallthru
        _
    $region96: #{bert_forward.2} parent=5 // pred_fallthru
      _
    %p2046 = scmp.le.s32.totalorder 2, %s25
    // Predicated region
    $region105: #{bert_forward.2} parent=5 // pred_check
      %p2047 = pneg %p2046
    $region106: #{bert_forward.2} parent=5 // pred_check_branch
      %2049 = sbr.rel (%p2047) target = $region108
    $region107: #{bert_forward.2} parent=5 // pred_region
      %s2050 = ssub.s32 %s25, 2
      // Predicated region
      $region109: #{bert_forward.2} parent=107 // pred_check
        %p2051 = pneg %p472
      $region110: #{bert_forward.2} parent=107 // pred_check_branch
        %2053 = sbr.rel (%p2051) target = $region112
      $region111: #{bert_forward.2} parent=107 // pred_region
        %s2054 = smul.u32 2, %s37
        %p2055 = scmp.lt.s32.totalorder %s36, 1
        %s2056 = scalar_select %p2055, %s36, 1
        %p2057 = scmp.lt.s32.totalorder %s2054, 1
        %s2058 = scalar_select %p2057, %s2054, 1
        %s2059 = smul.addr %s2056, 2
        %s2060 = sadd.s32 %s2058, %s2059
        %s2061 = smul.addr %s2060, 8
        %s2062 = scalar_lea.vmem %s19, %s2061
      $region112: #{bert_forward.2} parent=107 // pred_fallthru
        _
    $region108: #{bert_forward.2} parent=5 // pred_fallthru
      _
  $region6: #{bert_forward.2} parent=0 // loop_footer
    %s29 = sadd.s32 1, %s25
  $region7: #{bert_forward.2} parent=0 // loop_footer_branch
    %24 = sbr.rel target = $region3
  $region8: #{bert_forward.2} parent=0 // loop_exit
    _

// kernel: bert_forward.3
$region0: #{bert_forward.3}
  #allocation0 [shape = 'u32[]', space=smem, size = 0x4, offset = 0x4, fixed_abs, tag = 'smem constant byte address 0x4 - core index']
  #allocation1 [shape = 'u32[144,128]{1,0:T(1,128)}', space=vmem, size = 0x12000, scoped, tag = 'internal scratch']
  #allocation2 [shape = 'bf16[16,128]{1,0:T(16,128)(2,1)}', space=vmem, size = 0x1000, scoped, tag = 'scratch operand']
  #allocation3 [shape = 'bf16[16,128]{1,0:T(16,128)(2,1)}', space=vmem, size = 0x1000, scoped, tag = 'scratch operand']
  #allocation4 [shape = 'bf16[16,128]{1,0:T(16,128)(2,1)}', space=vmem, size = 0x1000, scoped, tag = 'scratch operand']
  %s0 = inlined_call_operand.vmem [shape: f32[2,16,128], index: 0, kind: input, shape index: {}]
  %s1 = inlined_call_operand.vmem [shape: bf16[128,128], index: 1, kind: input, shape index: {}]
  %s2 = inlined_call_operand.vmem [shape: f32[1,128], index: 2, kind: input, shape index: {}]
  %s3 = inlined_call_operand.vmem [shape: bf16[128,128], index: 3, kind: input, shape index: {}]
  %s4 = inlined_call_operand.vmem [shape: f32[1,128], index: 4, kind: input, shape index: {}]
  %s5 = inlined_call_operand.vmem [shape: bf16[128,128], index: 5, kind: input, shape index: {}]
  %s6 = inlined_call_operand.vmem [shape: f32[1,128], index: 6, kind: input, shape index: {}]
  %s7 = inlined_call_operand.vmem [shape: bf16[128,128], index: 7, kind: input, shape index: {}]
  %s8 = inlined_call_operand.vmem [shape: f32[1,128], index: 8, kind: input, shape index: {}]
  %s9 = inlined_call_operand.vmem [shape: bf16[128,256], index: 9, kind: input, shape index: {}]
  %s10 = inlined_call_operand.vmem [shape: f32[1,256], index: 10, kind: input, shape index: {}]
  %s11 = inlined_call_operand.vmem [shape: bf16[256,128], index: 11, kind: input, shape index: {}]
  %s12 = inlined_call_operand.vmem [shape: f32[1,128], index: 12, kind: input, shape index: {}]
  %s13 = inlined_call_operand.vmem [shape: f32[1,128], index: 13, kind: input, shape index: {}]
  %s14 = inlined_call_operand.vmem [shape: f32[1,128], index: 14, kind: input, shape index: {}]
  %s15 = inlined_call_operand.vmem [shape: f32[1,128], index: 15, kind: input, shape index: {}]
  %s16 = inlined_call_operand.vmem [shape: f32[1,128], index: 16, kind: input, shape index: {}]
  %s17 = inlined_call_operand.vmem [shape: f32[1,128], index: 17, kind: input, shape index: {}]
  %s18 = inlined_call_operand.vmem [shape: f32[1,128], index: 18, kind: input, shape index: {}]
  %s19 = inlined_call_operand.hbm [shape: f32[2,16,128], index: 19, kind: output, shape index: {}]
  %s20 = sld [smem:[#allocation0]]
  $region113: #{bert_forward.3} parent=0
    _
  %s22 = ssub.s32 1, %s20
  %s23 = scalar_select 0, %s22, %s20
  $region1: #{bert_forward.3} parent=0
    #allocation5 [shape = 'u8[16384]{0}', space=vmem, size = 0x4000, scoped, tag = 'output window, operand 0']
    #allocation6 [shape = 's32[2]{0}', space=sflag, size = 0x8, scoped, tag = 'scoped memory for bert_forward.3']
    %24 = vsyncpa [#allocation6], 0
    %s25 = scalar_lea.sflag [#allocation6], 1
    %26 = vsyncpa %s25, 0
    loop: start=0, step=1, limit=4
    $region2: #{bert_forward.3} parent=1 // loop_pre_header
      _
    $region3: #{bert_forward.3} parent=1 // loop_header
      %s28 = sphi 0, %s32
      %p29 = scmp.ge.s32.totalorder %s28, 4
      %s35 = sphi 0, %s47
      %s36 = sphi 0, %s43
      %s37 = sphi 0, %s35
      %s38 = sphi 0, %s36
      %s39 = sphi 0, %s37
      %s40 = sphi 0, %s38
      %s50 = sphi 0, %s52
      %s53 = sphi 0, %s50
      %s54 = sphi 0, %s53
      %s70 = sphi 0, %s54
      %s74 = sphi 0, %s74
      %s76 = sphi 0, %s74
      %s77 = sphi 0, %s76
      %s91 = sphi 0, %s77
      %s95 = sphi 0, %s95
      %s97 = sphi 0, %s95
      %s98 = sphi 0, %s97
      %s112 = sphi 0, %s98
      %s116 = sphi 0, %s116
      %s118 = sphi 0, %s116
      %s119 = sphi 0, %s118
      %s133 = sphi 0, %s119
      %s137 = sphi 0, %s137
      %s139 = sphi 0, %s137
      %s140 = sphi 0, %s139
      %s154 = sphi 0, %s140
      %s158 = sphi 0, %s158
      %s160 = sphi 0, %s158
      %s161 = sphi 0, %s160
      %s175 = sphi 0, %s161
      %s179 = sphi 0, %s179
      %s181 = sphi 0, %s179
      %s182 = sphi 0, %s181
      %s196 = sphi 0, %s182
      %s200 = sphi 0, %s200
      %s202 = sphi 0, %s200
      %s203 = sphi 0, %s202
      %s217 = sphi 0, %s203
      %s221 = sphi 0, %s221
      %s223 = sphi 0, %s221
      %s224 = sphi 0, %s223
      %s238 = sphi 0, %s224
      %s242 = sphi 0, %s242
      %s244 = sphi 0, %s242
      %s245 = sphi 0, %s244
      %s259 = sphi 0, %s245
      %s263 = sphi 0, %s263
      %s265 = sphi 0, %s263
      %s266 = sphi 0, %s265
      %s280 = sphi 0, %s266
      %s284 = sphi 0, %s284
      %s286 = sphi 0, %s284
      %s287 = sphi 0, %s286
      %s301 = sphi 0, %s287
      %s305 = sphi 0, %s305
      %s307 = sphi 0, %s305
      %s308 = sphi 0, %s307
      %s322 = sphi 0, %s308
      %s326 = sphi 0, %s326
      %s328 = sphi 0, %s326
      %s329 = sphi 0, %s328
      %s343 = sphi 0, %s329
      %s347 = sphi 0, %s347
      %s349 = sphi 0, %s347
      %s350 = sphi 0, %s349
      %s364 = sphi 0, %s350
      %s368 = sphi 0, %s368
      %s370 = sphi 0, %s368
      %s371 = sphi 0, %s370
      %s385 = sphi 0, %s371
      %s389 = sphi 0, %s389
      %s391 = sphi 0, %s389
      %s392 = sphi 0, %s391
      %s406 = sphi 0, %s392
      %s410 = sphi 0, %s410
      %s412 = sphi 0, %s410
      %s413 = sphi 0, %s412
      %s427 = sphi 0, %s413
      %s431 = sphi 0, %s431
      %s433 = sphi 0, %s431
      %s434 = sphi 0, %s433
      %s448 = sphi 0, %s434
      %s456 = sphi 0, %s458
      %s459 = sphi 0, %s456
      %s460 = sphi 0, %s459
      %s476 = sphi 0, %s460
    $region4: #{bert_forward.3} parent=1 // loop_header_branch
      %31 = sbr.rel (%p29) target = $region8
    $region5: #{bert_forward.3} parent=1 // loop_body
      %s33 = ssub.s32 %s28, 1
      %s34 = ssub.s32 %s28, 2
      %s41 = sadd.s32 1, %s36
      %p42 = scmp.ge.s32.totalorder %s41, 1
      %s43 = scalar_select %p42, 0, %s41
      %s44 = sadd.s32 1, %s35
      %s45 = scalar_select %p42, %s44, %s35
      %p46 = scmp.ge.s32.totalorder %s45, 2
      %s47 = scalar_select %p46, 0, %s45
      %s48 = ssub.s32 %s35, %s47
      %p49 = scmp.eq.s32.totalorder %s48, 0
      %s51 = sadd.s32 %s50, 1
      %s52 = scalar_select %p49, %s50, %s51
      %p55 = pneg %p49
      %p56 = scmp.eq.s32.totalorder %s28, 1
      %p57 = por %p55, %p56
      %p58 = scmp.ne.s32.totalorder %s50, %s53
      %p59 = scmp.eq.s32.totalorder %s28, 0
      %p60 = por %p58, %p59
      %p61 = scmp.ne.s32.totalorder %s50, %s53
      %p62 = scmp.eq.s32.totalorder %s33, 1
      %p63 = por %p61, %p62
      %p64 = scmp.ne.s32.totalorder %s53, %s54
      %p65 = scmp.eq.s32.totalorder %s33, 0
      %p66 = por %p64, %p65
      %p67 = scmp.ne.s32.totalorder %s53, %s54
      %p68 = scmp.eq.s32.totalorder %s34, 1
      %p69 = por %p67, %p68
      %p71 = scmp.ne.s32.totalorder %s54, %s70
      %p72 = scmp.eq.s32.totalorder %s34, 0
      %p73 = por %p71, %p72
      %s75 = sadd.s32 %s74, 1
      %p78 = scmp.eq.s32.totalorder %s28, 1
      %p79 = scmp.ne.s32.totalorder %s74, %s76
      %p80 = scmp.eq.s32.totalorder %s28, 0
      %p81 = por %p79, %p80
      %p82 = scmp.ne.s32.totalorder %s74, %s76
      %p83 = scmp.eq.s32.totalorder %s33, 1
      %p84 = por %p82, %p83
      %p85 = scmp.ne.s32.totalorder %s76, %s77
      %p86 = scmp.eq.s32.totalorder %s33, 0
      %p87 = por %p85, %p86
      %p88 = scmp.ne.s32.totalorder %s76, %s77
      %p89 = scmp.eq.s32.totalorder %s34, 1
      %p90 = por %p88, %p89
      %p92 = scmp.ne.s32.totalorder %s77, %s91
      %p93 = scmp.eq.s32.totalorder %s34, 0
      %p94 = por %p92, %p93
      %s96 = sadd.s32 %s95, 1
      %p99 = scmp.eq.s32.totalorder %s28, 1
      %p100 = scmp.ne.s32.totalorder %s95, %s97
      %p101 = scmp.eq.s32.totalorder %s28, 0
      %p102 = por %p100, %p101
      %p103 = scmp.ne.s32.totalorder %s95, %s97
      %p104 = scmp.eq.s32.totalorder %s33, 1
      %p105 = por %p103, %p104
      %p106 = scmp.ne.s32.totalorder %s97, %s98
      %p107 = scmp.eq.s32.totalorder %s33, 0
      %p108 = por %p106, %p107
      %p109 = scmp.ne.s32.totalorder %s97, %s98
      %p110 = scmp.eq.s32.totalorder %s34, 1
      %p111 = por %p109, %p110
      %p113 = scmp.ne.s32.totalorder %s98, %s112
      %p114 = scmp.eq.s32.totalorder %s34, 0
      %p115 = por %p113, %p114
      %s117 = sadd.s32 %s116, 1
      %p120 = scmp.eq.s32.totalorder %s28, 1
      %p121 = scmp.ne.s32.totalorder %s116, %s118
      %p122 = scmp.eq.s32.totalorder %s28, 0
      %p123 = por %p121, %p122
      %p124 = scmp.ne.s32.totalorder %s116, %s118
      %p125 = scmp.eq.s32.totalorder %s33, 1
      %p126 = por %p124, %p125
      %p127 = scmp.ne.s32.totalorder %s118, %s119
      %p128 = scmp.eq.s32.totalorder %s33, 0
      %p129 = por %p127, %p128
      %p130 = scmp.ne.s32.totalorder %s118, %s119
      %p131 = scmp.eq.s32.totalorder %s34, 1
      %p132 = por %p130, %p131
      %p134 = scmp.ne.s32.totalorder %s119, %s133
      %p135 = scmp.eq.s32.totalorder %s34, 0
      %p136 = por %p134, %p135
      %s138 = sadd.s32 %s137, 1
      %p141 = scmp.eq.s32.totalorder %s28, 1
      %p142 = scmp.ne.s32.totalorder %s137, %s139
      %p143 = scmp.eq.s32.totalorder %s28, 0
      %p144 = por %p142, %p143
      %p145 = scmp.ne.s32.totalorder %s137, %s139
      %p146 = scmp.eq.s32.totalorder %s33, 1
      %p147 = por %p145, %p146
      %p148 = scmp.ne.s32.totalorder %s139, %s140
      %p149 = scmp.eq.s32.totalorder %s33, 0
      %p150 = por %p148, %p149
      %p151 = scmp.ne.s32.totalorder %s139, %s140
      %p152 = scmp.eq.s32.totalorder %s34, 1
      %p153 = por %p151, %p152
      %p155 = scmp.ne.s32.totalorder %s140, %s154
      %p156 = scmp.eq.s32.totalorder %s34, 0
      %p157 = por %p155, %p156
      %s159 = sadd.s32 %s158, 1
      %p162 = scmp.eq.s32.totalorder %s28, 1
      %p163 = scmp.ne.s32.totalorder %s158, %s160
      %p164 = scmp.eq.s32.totalorder %s28, 0
      %p165 = por %p163, %p164
      %p166 = scmp.ne.s32.totalorder %s158, %s160
      %p167 = scmp.eq.s32.totalorder %s33, 1
      %p168 = por %p166, %p167
      %p169 = scmp.ne.s32.totalorder %s160, %s161
      %p170 = scmp.eq.s32.totalorder %s33, 0
      %p171 = por %p169, %p170
      %p172 = scmp.ne.s32.totalorder %s160, %s161
      %p173 = scmp.eq.s32.totalorder %s34, 1
      %p174 = por %p172, %p173
      %p176 = scmp.ne.s32.totalorder %s161, %s175
      %p177 = scmp.eq.s32.totalorder %s34, 0
      %p178 = por %p176, %p177
      %s180 = sadd.s32 %s179, 1
      %p183 = scmp.eq.s32.totalorder %s28, 1
      %p184 = scmp.ne.s32.totalorder %s179, %s181
      %p185 = scmp.eq.s32.totalorder %s28, 0
      %p186 = por %p184, %p185
      %p187 = scmp.ne.s32.totalorder %s179, %s181
      %p188 = scmp.eq.s32.totalorder %s33, 1
      %p189 = por %p187, %p188
      %p190 = scmp.ne.s32.totalorder %s181, %s182
      %p191 = scmp.eq.s32.totalorder %s33, 0
      %p192 = por %p190, %p191
      %p193 = scmp.ne.s32.totalorder %s181, %s182
      %p194 = scmp.eq.s32.totalorder %s34, 1
      %p195 = por %p193, %p194
      %p197 = scmp.ne.s32.totalorder %s182, %s196
      %p198 = scmp.eq.s32.totalorder %s34, 0
      %p199 = por %p197, %p198
      %s201 = sadd.s32 %s200, 1
      %p204 = scmp.eq.s32.totalorder %s28, 1
      %p205 = scmp.ne.s32.totalorder %s200, %s202
      %p206 = scmp.eq.s32.totalorder %s28, 0
      %p207 = por %p205, %p206
      %p208 = scmp.ne.s32.totalorder %s200, %s202
      %p209 = scmp.eq.s32.totalorder %s33, 1
      %p210 = por %p208, %p209
      %p211 = scmp.ne.s32.totalorder %s202, %s203
      %p212 = scmp.eq.s32.totalorder %s33, 0
      %p213 = por %p211, %p212
      %p214 = scmp.ne.s32.totalorder %s202, %s203
      %p215 = scmp.eq.s32.totalorder %s34, 1
      %p216 = por %p214, %p215
      %p218 = scmp.ne.s32.totalorder %s203, %s217
      %p219 = scmp.eq.s32.totalorder %s34, 0
      %p220 = por %p218, %p219
      %s222 = sadd.s32 %s221, 1
      %p225 = scmp.eq.s32.totalorder %s28, 1
      %p226 = scmp.ne.s32.totalorder %s221, %s223
      %p227 = scmp.eq.s32.totalorder %s28, 0
      %p228 = por %p226, %p227
      %p229 = scmp.ne.s32.totalorder %s221, %s223
      %p230 = scmp.eq.s32.totalorder %s33, 1
      %p231 = por %p229, %p230
      %p232 = scmp.ne.s32.totalorder %s223, %s224
      %p233 = scmp.eq.s32.totalorder %s33, 0
      %p234 = por %p232, %p233
      %p235 = scmp.ne.s32.totalorder %s223, %s224
      %p236 = scmp.eq.s32.totalorder %s34, 1
      %p237 = por %p235, %p236
      %p239 = scmp.ne.s32.totalorder %s224, %s238
      %p240 = scmp.eq.s32.totalorder %s34, 0
      %p241 = por %p239, %p240
      %s243 = sadd.s32 %s242, 1
      %p246 = scmp.eq.s32.totalorder %s28, 1
      %p247 = scmp.ne.s32.totalorder %s242, %s244
      %p248 = scmp.eq.s32.totalorder %s28, 0
      %p249 = por %p247, %p248
      %p250 = scmp.ne.s32.totalorder %s242, %s244
      %p251 = scmp.eq.s32.totalorder %s33, 1
      %p252 = por %p250, %p251
      %p253 = scmp.ne.s32.totalorder %s244, %s245
      %p254 = scmp.eq.s32.totalorder %s33, 0
      %p255 = por %p253, %p254
      %p256 = scmp.ne.s32.totalorder %s244, %s245
      %p257 = scmp.eq.s32.totalorder %s34, 1
      %p258 = por %p256, %p257
      %p260 = scmp.ne.s32.totalorder %s245, %s259
      %p261 = scmp.eq.s32.totalorder %s34, 0
      %p262 = por %p260, %p261
      %s264 = sadd.s32 %s263, 1
      %p267 = scmp.eq.s32.totalorder %s28, 1
      %p268 = scmp.ne.s32.totalorder %s263, %s265
      %p269 = scmp.eq.s32.totalorder %s28, 0
      %p270 = por %p268, %p269
      %p271 = scmp.ne.s32.totalorder %s263, %s265
      %p272 = scmp.eq.s32.totalorder %s33, 1
      %p273 = por %p271, %p272
      %p274 = scmp.ne.s32.totalorder %s265, %s266
      %p275 = scmp.eq.s32.totalorder %s33, 0
      %p276 = por %p274, %p275
      %p277 = scmp.ne.s32.totalorder %s265, %s266
      %p278 = scmp.eq.s32.totalorder %s34, 1
      %p279 = por %p277, %p278
      %p281 = scmp.ne.s32.totalorder %s266, %s280
      %p282 = scmp.eq.s32.totalorder %s34, 0
      %p283 = por %p281, %p282
      %s285 = sadd.s32 %s284, 1
      %p288 = scmp.eq.s32.totalorder %s28, 1
      %p289 = scmp.ne.s32.totalorder %s284, %s286
      %p290 = scmp.eq.s32.totalorder %s28, 0
      %p291 = por %p289, %p290
      %p292 = scmp.ne.s32.totalorder %s284, %s286
      %p293 = scmp.eq.s32.totalorder %s33, 1
      %p294 = por %p292, %p293
      %p295 = scmp.ne.s32.totalorder %s286, %s287
      %p296 = scmp.eq.s32.totalorder %s33, 0
      %p297 = por %p295, %p296
      %p298 = scmp.ne.s32.totalorder %s286, %s287
      %p299 = scmp.eq.s32.totalorder %s34, 1
      %p300 = por %p298, %p299
      %p302 = scmp.ne.s32.totalorder %s287, %s301
      %p303 = scmp.eq.s32.totalorder %s34, 0
      %p304 = por %p302, %p303
      %s306 = sadd.s32 %s305, 1
      %p309 = scmp.eq.s32.totalorder %s28, 1
      %p310 = scmp.ne.s32.totalorder %s305, %s307
      %p311 = scmp.eq.s32.totalorder %s28, 0
      %p312 = por %p310, %p311
      %p313 = scmp.ne.s32.totalorder %s305, %s307
      %p314 = scmp.eq.s32.totalorder %s33, 1
      %p315 = por %p313, %p314
      %p316 = scmp.ne.s32.totalorder %s307, %s308
      %p317 = scmp.eq.s32.totalorder %s33, 0
      %p318 = por %p316, %p317
      %p319 = scmp.ne.s32.totalorder %s307, %s308
      %p320 = scmp.eq.s32.totalorder %s34, 1
      %p321 = por %p319, %p320
      %p323 = scmp.ne.s32.totalorder %s308, %s322
      %p324 = scmp.eq.s32.totalorder %s34, 0
      %p325 = por %p323, %p324
      %s327 = sadd.s32 %s326, 1
      %p330 = scmp.eq.s32.totalorder %s28, 1
      %p331 = scmp.ne.s32.totalorder %s326, %s328
      %p332 = scmp.eq.s32.totalorder %s28, 0
      %p333 = por %p331, %p332
      %p334 = scmp.ne.s32.totalorder %s326, %s328
      %p335 = scmp.eq.s32.totalorder %s33, 1
      %p336 = por %p334, %p335
      %p337 = scmp.ne.s32.totalorder %s328, %s329
      %p338 = scmp.eq.s32.totalorder %s33, 0
      %p339 = por %p337, %p338
      %p340 = scmp.ne.s32.totalorder %s328, %s329
      %p341 = scmp.eq.s32.totalorder %s34, 1
      %p342 = por %p340, %p341
      %p344 = scmp.ne.s32.totalorder %s329, %s343
      %p345 = scmp.eq.s32.totalorder %s34, 0
      %p346 = por %p344, %p345
      %s348 = sadd.s32 %s347, 1
      %p351 = scmp.eq.s32.totalorder %s28, 1
      %p352 = scmp.ne.s32.totalorder %s347, %s349
      %p353 = scmp.eq.s32.totalorder %s28, 0
      %p354 = por %p352, %p353
      %p355 = scmp.ne.s32.totalorder %s347, %s349
      %p356 = scmp.eq.s32.totalorder %s33, 1
      %p357 = por %p355, %p356
      %p358 = scmp.ne.s32.totalorder %s349, %s350
      %p359 = scmp.eq.s32.totalorder %s33, 0
      %p360 = por %p358, %p359
      %p361 = scmp.ne.s32.totalorder %s349, %s350
      %p362 = scmp.eq.s32.totalorder %s34, 1
      %p363 = por %p361, %p362
      %p365 = scmp.ne.s32.totalorder %s350, %s364
      %p366 = scmp.eq.s32.totalorder %s34, 0
      %p367 = por %p365, %p366
      %s369 = sadd.s32 %s368, 1
      %p372 = scmp.eq.s32.totalorder %s28, 1
      %p373 = scmp.ne.s32.totalorder %s368, %s370
      %p374 = scmp.eq.s32.totalorder %s28, 0
      %p375 = por %p373, %p374
      %p376 = scmp.ne.s32.totalorder %s368, %s370
      %p377 = scmp.eq.s32.totalorder %s33, 1
      %p378 = por %p376, %p377
      %p379 = scmp.ne.s32.totalorder %s370, %s371
      %p380 = scmp.eq.s32.totalorder %s33, 0
      %p381 = por %p379, %p380
      %p382 = scmp.ne.s32.totalorder %s370, %s371
      %p383 = scmp.eq.s32.totalorder %s34, 1
      %p384 = por %p382, %p383
      %p386 = scmp.ne.s32.totalorder %s371, %s385
      %p387 = scmp.eq.s32.totalorder %s34, 0
      %p388 = por %p386, %p387
      %s390 = sadd.s32 %s389, 1
      %p393 = scmp.eq.s32.totalorder %s28, 1
      %p394 = scmp.ne.s32.totalorder %s389, %s391
      %p395 = scmp.eq.s32.totalorder %s28, 0
      %p396 = por %p394, %p395
      %p397 = scmp.ne.s32.totalorder %s389, %s391
      %p398 = scmp.eq.s32.totalorder %s33, 1
      %p399 = por %p397, %p398
      %p400 = scmp.ne.s32.totalorder %s391, %s392
      %p401 = scmp.eq.s32.totalorder %s33, 0
      %p402 = por %p400, %p401
      %p403 = scmp.ne.s32.totalorder %s391, %s392
      %p404 = scmp.eq.s32.totalorder %s34, 1
      %p405 = por %p403, %p404
      %p407 = scmp.ne.s32.totalorder %s392, %s406
      %p408 = scmp.eq.s32.totalorder %s34, 0
      %p409 = por %p407, %p408
      %s411 = sadd.s32 %s410, 1
      %p414 = scmp.eq.s32.totalorder %s28, 1
      %p415 = scmp.ne.s32.totalorder %s410, %s412
      %p416 = scmp.eq.s32.totalorder %s28, 0
      %p417 = por %p415, %p416
      %p418 = scmp.ne.s32.totalorder %s410, %s412
      %p419 = scmp.eq.s32.totalorder %s33, 1
      %p420 = por %p418, %p419
      %p421 = scmp.ne.s32.totalorder %s412, %s413
      %p422 = scmp.eq.s32.totalorder %s33, 0
      %p423 = por %p421, %p422
      %p424 = scmp.ne.s32.totalorder %s412, %s413
      %p425 = scmp.eq.s32.totalorder %s34, 1
      %p426 = por %p424, %p425
      %p428 = scmp.ne.s32.totalorder %s413, %s427
      %p429 = scmp.eq.s32.totalorder %s34, 0
      %p430 = por %p428, %p429
      %s432 = sadd.s32 %s431, 1
      %p435 = scmp.eq.s32.totalorder %s28, 1
      %p436 = scmp.ne.s32.totalorder %s431, %s433
      %p437 = scmp.eq.s32.totalorder %s28, 0
      %p438 = por %p436, %p437
      %p439 = scmp.ne.s32.totalorder %s431, %s433
      %p440 = scmp.eq.s32.totalorder %s33, 1
      %p441 = por %p439, %p440
      %p442 = scmp.ne.s32.totalorder %s433, %s434
      %p443 = scmp.eq.s32.totalorder %s33, 0
      %p444 = por %p442, %p443
      %p445 = scmp.ne.s32.totalorder %s433, %s434
      %p446 = scmp.eq.s32.totalorder %s34, 1
      %p447 = por %p445, %p446
      %p449 = scmp.ne.s32.totalorder %s434, %s448
      %p450 = scmp.eq.s32.totalorder %s34, 0
      %p451 = por %p449, %p450
      %s452 = ssub.s32 %s35, %s47
      %s453 = ssub.s32 %s36, %s43
      %s454 = sor.u32 %s452, %s453
      %p455 = scmp.eq.s32.totalorder %s454, 0
      %s457 = sadd.s32 %s456, 1
      %s458 = scalar_select %p455, %s456, %s457
      %p461 = pneg %p455
      %p462 = scmp.eq.s32.totalorder %s28, 1
      %p463 = por %p461, %p462
      %p464 = scmp.ne.s32.totalorder %s456, %s459
      %p465 = scmp.eq.s32.totalorder %s28, 0
      %p466 = por %p464, %p465
      %p467 = scmp.ne.s32.totalorder %s456, %s459
      %p468 = scmp.eq.s32.totalorder %s33, 1
      %p469 = por %p467, %p468
      %p470 = scmp.ne.s32.totalorder %s459, %s460
      %p471 = scmp.eq.s32.totalorder %s33, 0
      %p472 = por %p470, %p471
      %p473 = scmp.ne.s32.totalorder %s459, %s460
      %p474 = scmp.eq.s32.totalorder %s34, 1
      %p475 = por %p473, %p474
      %p477 = scmp.ne.s32.totalorder %s460, %s476
      %p478 = scmp.eq.s32.totalorder %s34, 0
      %p479 = por %p477, %p478
      %p480 = scmp.le.s32.totalorder 1, %s28
      %p481 = scmp.lt.s32.totalorder %s28, 3
      %p482 = pnand %p480, %p481
      %p483 = pneg %p482
      // Predicated region
      $region9: #{bert_forward.3} parent=5 // pred_check
        _
      $region10: #{bert_forward.3} parent=5 // pred_check_branch
        %485 = sbr.rel (%p482) target = $region12
      $region11: #{bert_forward.3} parent=5 // pred_region
        %s486 = ssub.s32 %s28, 1
        // Predicated region
        $region13: #{bert_forward.3} parent=11 // pred_check
          %p487 = pneg %p87
        $region14: #{bert_forward.3} parent=11 // pred_check_branch
          %489 = sbr.rel (%p487) target = $region16
        $region15: #{bert_forward.3} parent=11 // pred_region
          _
        $region16: #{bert_forward.3} parent=11 // pred_fallthru
          _
        // Predicated region
        $region17: #{bert_forward.3} parent=11 // pred_check
          %p490 = pneg %p108
        $region18: #{bert_forward.3} parent=11 // pred_check_branch
          %492 = sbr.rel (%p490) target = $region20
        $region19: #{bert_forward.3} parent=11 // pred_region
          _
        $region20: #{bert_forward.3} parent=11 // pred_fallthru
          _
        // Predicated region
        $region21: #{bert_forward.3} parent=11 // pred_check
          %p493 = pneg %p129
        $region22: #{bert_forward.3} parent=11 // pred_check_branch
          %495 = sbr.rel (%p493) target = $region24
        $region23: #{bert_forward.3} parent=11 // pred_region
          _
        $region24: #{bert_forward.3} parent=11 // pred_fallthru
          _
        // Predicated region
        $region25: #{bert_forward.3} parent=11 // pred_check
          %p496 = pneg %p150
        $region26: #{bert_forward.3} parent=11 // pred_check_branch
          %498 = sbr.rel (%p496) target = $region28
        $region27: #{bert_forward.3} parent=11 // pred_region
          _
        $region28: #{bert_forward.3} parent=11 // pred_fallthru
          _
        // Predicated region
        $region29: #{bert_forward.3} parent=11 // pred_check
          %p499 = pneg %p171
        $region30: #{bert_forward.3} parent=11 // pred_check_branch
          %501 = sbr.rel (%p499) target = $region32
        $region31: #{bert_forward.3} parent=11 // pred_region
          _
        $region32: #{bert_forward.3} parent=11 // pred_fallthru
          _
        // Predicated region
        $region33: #{bert_forward.3} parent=11 // pred_check
          %p502 = pneg %p192
        $region34: #{bert_forward.3} parent=11 // pred_check_branch
          %504 = sbr.rel (%p502) target = $region36
        $region35: #{bert_forward.3} parent=11 // pred_region
          _
        $region36: #{bert_forward.3} parent=11 // pred_fallthru
          _
        // Predicated region
        $region37: #{bert_forward.3} parent=11 // pred_check
          %p505 = pneg %p213
        $region38: #{bert_forward.3} parent=11 // pred_check_branch
          %507 = sbr.rel (%p505) target = $region40
        $region39: #{bert_forward.3} parent=11 // pred_region
          _
        $region40: #{bert_forward.3} parent=11 // pred_fallthru
          _
        // Predicated region
        $region41: #{bert_forward.3} parent=11 // pred_check
          %p508 = pneg %p234
        $region42: #{bert_forward.3} parent=11 // pred_check_branch
          %510 = sbr.rel (%p508) target = $region44
        $region43: #{bert_forward.3} parent=11 // pred_region
          _
        $region44: #{bert_forward.3} parent=11 // pred_fallthru
          _
        // Predicated region
        $region45: #{bert_forward.3} parent=11 // pred_check
          %p511 = pneg %p255
        $region46: #{bert_forward.3} parent=11 // pred_check_branch
          %513 = sbr.rel (%p511) target = $region48
        $region47: #{bert_forward.3} parent=11 // pred_region
          _
        $region48: #{bert_forward.3} parent=11 // pred_fallthru
          _
        // Predicated region
        $region49: #{bert_forward.3} parent=11 // pred_check
          %p514 = pneg %p276
        $region50: #{bert_forward.3} parent=11 // pred_check_branch
          %516 = sbr.rel (%p514) target = $region52
        $region51: #{bert_forward.3} parent=11 // pred_region
          _
        $region52: #{bert_forward.3} parent=11 // pred_fallthru
          _
        // Predicated region
        $region53: #{bert_forward.3} parent=11 // pred_check
          %p517 = pneg %p297
        $region54: #{bert_forward.3} parent=11 // pred_check_branch
          %519 = sbr.rel (%p517) target = $region56
        $region55: #{bert_forward.3} parent=11 // pred_region
          _
        $region56: #{bert_forward.3} parent=11 // pred_fallthru
          _
        // Predicated region
        $region57: #{bert_forward.3} parent=11 // pred_check
          %p520 = pneg %p318
        $region58: #{bert_forward.3} parent=11 // pred_check_branch
          %522 = sbr.rel (%p520) target = $region60
        $region59: #{bert_forward.3} parent=11 // pred_region
          _
        $region60: #{bert_forward.3} parent=11 // pred_fallthru
          _
        // Predicated region
        $region61: #{bert_forward.3} parent=11 // pred_check
          %p523 = pneg %p339
        $region62: #{bert_forward.3} parent=11 // pred_check_branch
          %525 = sbr.rel (%p523) target = $region64
        $region63: #{bert_forward.3} parent=11 // pred_region
          _
        $region64: #{bert_forward.3} parent=11 // pred_fallthru
          _
        // Predicated region
        $region65: #{bert_forward.3} parent=11 // pred_check
          %p526 = pneg %p360
        $region66: #{bert_forward.3} parent=11 // pred_check_branch
          %528 = sbr.rel (%p526) target = $region68
        $region67: #{bert_forward.3} parent=11 // pred_region
          _
        $region68: #{bert_forward.3} parent=11 // pred_fallthru
          _
        // Predicated region
        $region69: #{bert_forward.3} parent=11 // pred_check
          %p529 = pneg %p381
        $region70: #{bert_forward.3} parent=11 // pred_check_branch
          %531 = sbr.rel (%p529) target = $region72
        $region71: #{bert_forward.3} parent=11 // pred_region
          _
        $region72: #{bert_forward.3} parent=11 // pred_fallthru
          _
        // Predicated region
        $region73: #{bert_forward.3} parent=11 // pred_check
          %p532 = pneg %p402
        $region74: #{bert_forward.3} parent=11 // pred_check_branch
          %534 = sbr.rel (%p532) target = $region76
        $region75: #{bert_forward.3} parent=11 // pred_region
          _
        $region76: #{bert_forward.3} parent=11 // pred_fallthru
          _
        // Predicated region
        $region77: #{bert_forward.3} parent=11 // pred_check
          %p535 = pneg %p423
        $region78: #{bert_forward.3} parent=11 // pred_check_branch
          %537 = sbr.rel (%p535) target = $region80
        $region79: #{bert_forward.3} parent=11 // pred_region
          _
        $region80: #{bert_forward.3} parent=11 // pred_fallthru
          _
        // Predicated region
        $region81: #{bert_forward.3} parent=11 // pred_check
          %p538 = pneg %p444
        $region82: #{bert_forward.3} parent=11 // pred_check_branch
          %540 = sbr.rel (%p538) target = $region84
        $region83: #{bert_forward.3} parent=11 // pred_region
          _
        $region84: #{bert_forward.3} parent=11 // pred_fallthru
          _
      $region12: #{bert_forward.3} parent=5 // pred_fallthru
        _
      %p541 = scmp.lt.s32.totalorder %s28, 2
      // Predicated region
      $region85: #{bert_forward.3} parent=5 // pred_check
        %p542 = pneg %p541
      $region86: #{bert_forward.3} parent=5 // pred_check_branch
        %544 = sbr.rel (%p542) target = $region88
      $region87: #{bert_forward.3} parent=5 // pred_region
        // Predicated region
        $region89: #{bert_forward.3} parent=87 // pred_check
          %p545 = pneg %p60
        $region90: #{bert_forward.3} parent=87 // pred_check_branch
          %547 = sbr.rel (%p545) target = $region92
        $region91: #{bert_forward.3} parent=87 // pred_region
          %p548 = scmp.lt.s32.totalorder %s35, 1
          %s549 = scalar_select %p548, %s35, 1
          %s550 = smul.addr %s549, 2
          %s551 = smul.addr %s550, 8
          %s552 = scalar_lea.vmem %s0, %s551
        $region92: #{bert_forward.3} parent=87 // pred_fallthru
          _
      $region88: #{bert_forward.3} parent=5 // pred_fallthru
        _
      %p553 = scmp.le.s32.totalorder 1, %s28
      %p554 = scmp.lt.s32.totalorder %s28, 3
      %p555 = pnand %p553, %p554
      %p556 = pneg %p555
      // Predicated region
      $region93: #{bert_forward.3} parent=5 // pred_check
        _
      $region94: #{bert_forward.3} parent=5 // pred_check_branch
        %558 = sbr.rel (%p555) target = $region96
      $region95: #{bert_forward.3} parent=5 // pred_region
        %s559 = ssub.s32 %s28, 1
        %p560 = scmp.lt.s32.totalorder %s37, 1
        %s561 = scalar_select %p560, %s37, 1
        %s562 = smul.addr %s561, 2
        %s563 = smul.addr %s562, 8
        %s564 = scalar_lea.vmem %s0, %s563
        %p565 = pneg %p66
        %p566 = pneg %p63
        %p567 = pneg %p87
        %p568 = pneg %p84
        %p569 = pneg %p108
        %p570 = pneg %p105
        %p571 = pneg %p129
        %p572 = pneg %p126
        %p573 = pneg %p150
        %p574 = pneg %p147
        %p575 = pneg %p171
        %p576 = pneg %p168
        %p577 = pneg %p192
        %p578 = pneg %p189
        %p579 = pneg %p213
        %p580 = pneg %p210
        %p581 = pneg %p234
        %p582 = pneg %p231
        %p583 = pneg %p255
        %p584 = pneg %p252
        %p585 = pneg %p276
        %p586 = pneg %p273
        %p587 = pneg %p297
        %p588 = pneg %p294
        %p589 = pneg %p318
        %p590 = pneg %p315
        %p591 = pneg %p339
        %p592 = pneg %p336
        %p593 = pneg %p360
        %p594 = pneg %p357
        %p595 = pneg %p381
        %p596 = pneg %p378
        %p597 = pneg %p402
        %p598 = pneg %p399
        %p599 = pneg %p423
        %p600 = pneg %p420
        %p601 = pneg %p444
        %p602 = pneg %p441
        %p603 = pneg %p472
        %p604 = pneg %p469
        %s605 = sand.u32 %s459, 1
        %s606 = scalar_lea.sflag [#allocation6], %s605
        %s607 = sand.u32 %s459, 1
        %s608 = smul.addr %s607, 16
        %s609 = scalar_lea.vmem [#allocation5], %s608
        %p610 = scmp.lt.s32.totalorder %s37, 1
        %s611 = scalar_select %p610, %s37, 1
        %s612 = smul.addr %s611, 2
        %s613 = smul.addr %s612, 8
        %s614 = scalar_lea.vmem %s0, %s613
        %s615 = smul.u32 2, %s38
        %p617 = scmp.eq.s32.totalorder %s38, 0
        // Predicated region
        $region97: #{bert_forward.3} parent=95 // pred_check
          %p618 = pneg %p617
        $region98: #{bert_forward.3} parent=95 // pred_check_branch
          %620 = sbr.rel (%p618) target = $region100
        $region99: #{bert_forward.3} parent=95 // pred_region
          %v621 = vld [vmem:[%s614] sm:$0xff]
          %v622 = vld [vmem:[%s614 + $0x8] sm:$0xff]
          %v623 = vpack.c.bf16 %v622, %v621
          %v624 = vld [vmem:[%s3] sm:$0xf]
          %v625 = vld [vmem:[%s3 + $0x4] sm:$0xf]
          %v626 = vld [vmem:[%s3 + $0x8] sm:$0xf]
          %v627 = vld [vmem:[%s3 + $0xc] sm:$0xf]
          %v628 = vld [vmem:[%s3 + $0x10] sm:$0xf]
          %v629 = vld [vmem:[%s3 + $0x14] sm:$0xf]
          %v630 = vld [vmem:[%s3 + $0x18] sm:$0xf]
          %v631 = vld [vmem:[%s3 + $0x1c] sm:$0xf]
          %v632 = vld [vmem:[%s3 + $0x20] sm:$0xf]
          %v633 = vld [vmem:[%s3 + $0x24] sm:$0xf]
          %v634 = vld [vmem:[%s3 + $0x28] sm:$0xf]
          %v635 = vld [vmem:[%s3 + $0x2c] sm:$0xf]
          %v636 = vld [vmem:[%s3 + $0x30] sm:$0xf]
          %v637 = vld [vmem:[%s3 + $0x34] sm:$0xf]
          %v638 = vld [vmem:[%s3 + $0x38] sm:$0xf]
          %v639 = vld [vmem:[%s3 + $0x3c] sm:$0xf]
          %v640 = vld [vmem:[%s4] sm:$0x1]
          %v642 = vlaneseq
          %v643 = vshrl.u32 %v642, 7
          %v644 = vsub.s32 0, %v643
          %v645 = vrot.slane %v640, %v644
          %v663 = vunpack.c.l.b16 %v624
          %v664 = vunpack.c.l.b16 %v625
          %v665 = vunpack.c.l.b16 %v626
          %v666 = vunpack.c.l.b16 %v627
          %v667 = vunpack.c.l.b16 %v628
          %v668 = vunpack.c.l.b16 %v629
          %v669 = vunpack.c.l.b16 %v630
          %v670 = vunpack.c.l.b16 %v631
          %v671 = vunpack.c.l.b16 %v632
          %v672 = vunpack.c.l.b16 %v633
          %v673 = vunpack.c.l.b16 %v634
          %v674 = vunpack.c.l.b16 %v635
          %v675 = vunpack.c.l.b16 %v636
          %v676 = vunpack.c.l.b16 %v637
          %v677 = vunpack.c.l.b16 %v638
          %v678 = vunpack.c.l.b16 %v639
          %v679 = vpack.c.b16 %v664, %v663
          %v680 = vpack.c.b16 %v666, %v665
          %v681 = vpack.c.b16 %v668, %v667
          %v682 = vpack.c.b16 %v670, %v669
          %v683 = vpack.c.b16 %v672, %v671
          %v684 = vpack.c.b16 %v674, %v673
          %v685 = vpack.c.b16 %v676, %v675
          %v686 = vpack.c.b16 %v678, %v677
          %695 = vmatprep.subr.bf16.mxu0 0
          %696 = vmatpush1.bf16.msra.mxu0 %v679
          %697 = vmatprep.subr.bf16.mxu0 0
          %698 = vmatpush1.bf16.msra.mxu0 %v680
          %699 = vmatprep.subr.bf16.mxu0 0
          %700 = vmatpush1.bf16.msra.mxu0 %v681
          %701 = vmatprep.subr.bf16.mxu0 0
          %702 = vmatpush1.bf16.msra.mxu0 %v682
          %703 = vmatprep.subr.bf16.mxu0 0
          %704 = vmatpush1.bf16.msra.mxu0 %v683
          %705 = vmatprep.subr.bf16.mxu0 0
          %706 = vmatpush1.bf16.msra.mxu0 %v684
          %707 = vmatprep.subr.bf16.mxu0 0
          %708 = vmatpush1.bf16.msra.mxu0 %v685
          %709 = vmatprep.subr.bf16.mxu0 0
          %710 = vmatpush1.bf16.msra.mxu0 %v686
          %711 = vmatprep.subr.bf16.mxu0 0
          %712 = vmatpush1.bf16.msra.mxu0 0
          %713 = vmatprep.subr.bf16.mxu0 0
          %714 = vmatpush1.bf16.msra.mxu0 0
          %715 = vmatprep.subr.bf16.mxu0 0
          %716 = vmatpush1.bf16.msra.mxu0 0
          %717 = vmatprep.subr.bf16.mxu0 0
          %718 = vmatpush1.bf16.msra.mxu0 0
          %719 = vmatprep.subr.bf16.mxu0 0
          %720 = vmatpush1.bf16.msra.mxu0 0
          %721 = vmatprep.subr.bf16.mxu0 0
          %722 = vmatpush1.bf16.msra.mxu0 0
          %723 = vmatprep.subr.bf16.mxu0 0
          %724 = vmatpush1.bf16.msra.mxu0 0
          %725 = vmatprep.subr.bf16.mxu0 0
          %726 = vmatpush1.bf16.msra.mxu0 0
          %727 = vmatprep.mubr.bf16.mxu0 0
          %728 = vmatmul.mubr.bf16.gmra.mrb[0].mxu0 %v623
          %v729 = vpop.f32.mrb[0].mxu0
          %v730 = vadd.f32 %v645, %v729
          %v731 = vpop.f32.mrb[0].mxu0
          %v732 = vpop.f32.mrb[0].mxu0
          %v733 = vadd.f32 %v645, %v732
          %v734 = vpop.f32.mrb[0].mxu0
          %735 = vdwg.mxu0
          %v736 = vld [vmem:[%s5] sm:$0xf]
          %v737 = vld [vmem:[%s5 + $0x4] sm:$0xf]
          %v738 = vld [vmem:[%s5 + $0x8] sm:$0xf]
          %v739 = vld [vmem:[%s5 + $0xc] sm:$0xf]
          %v740 = vld [vmem:[%s5 + $0x10] sm:$0xf]
          %v741 = vld [vmem:[%s5 + $0x14] sm:$0xf]
          %v742 = vld [vmem:[%s5 + $0x18] sm:$0xf]
          %v743 = vld [vmem:[%s5 + $0x1c] sm:$0xf]
          %v744 = vld [vmem:[%s5 + $0x20] sm:$0xf]
          %v745 = vld [vmem:[%s5 + $0x24] sm:$0xf]
          %v746 = vld [vmem:[%s5 + $0x28] sm:$0xf]
          %v747 = vld [vmem:[%s5 + $0x2c] sm:$0xf]
          %v748 = vld [vmem:[%s5 + $0x30] sm:$0xf]
          %v749 = vld [vmem:[%s5 + $0x34] sm:$0xf]
          %v750 = vld [vmem:[%s5 + $0x38] sm:$0xf]
          %v751 = vld [vmem:[%s5 + $0x3c] sm:$0xf]
          %v752 = vld [vmem:[%s6] sm:$0x1]
          %v754 = vlaneseq
          %v755 = vshrl.u32 %v754, 7
          %v756 = vsub.s32 0, %v755
          %v757 = vrot.slane %v752, %v756
          %v775 = vunpack.c.l.b16 %v736
          %v776 = vunpack.c.l.b16 %v737
          %v777 = vunpack.c.l.b16 %v738
          %v778 = vunpack.c.l.b16 %v739
          %v779 = vunpack.c.l.b16 %v740
          %v780 = vunpack.c.l.b16 %v741
          %v781 = vunpack.c.l.b16 %v742
          %v782 = vunpack.c.l.b16 %v743
          %v783 = vunpack.c.l.b16 %v744
          %v784 = vunpack.c.l.b16 %v745
          %v785 = vunpack.c.l.b16 %v746
          %v786 = vunpack.c.l.b16 %v747
          %v787 = vunpack.c.l.b16 %v748
          %v788 = vunpack.c.l.b16 %v749
          %v789 = vunpack.c.l.b16 %v750
          %v790 = vunpack.c.l.b16 %v751
          %v791 = vpack.c.b16 %v776, %v775
          %v792 = vpack.c.b16 %v778, %v777
          %v793 = vpack.c.b16 %v780, %v779
          %v794 = vpack.c.b16 %v782, %v781
          %v795 = vpack.c.b16 %v784, %v783
          %v796 = vpack.c.b16 %v786, %v785
          %v797 = vpack.c.b16 %v788, %v787
          %v798 = vpack.c.b16 %v790, %v789
          %807 = vmatprep.subr.bf16.mxu0 0
          %808 = vmatpush1.bf16.msra.mxu0 %v791
          %809 = vmatprep.subr.bf16.mxu0 0
          %810 = vmatpush1.bf16.msra.mxu0 %v792
          %811 = vmatprep.subr.bf16.mxu0 0
          %812 = vmatpush1.bf16.msra.mxu0 %v793
          %813 = vmatprep.subr.bf16.mxu0 0
          %814 = vmatpush1.bf16.msra.mxu0 %v794
          %815 = vmatprep.subr.bf16.mxu0 0
          %816 = vmatpush1.bf16.msra.mxu0 %v795
          %817 = vmatprep.subr.bf16.mxu0 0
          %818 = vmatpush1.bf16.msra.mxu0 %v796
          %819 = vmatprep.subr.bf16.mxu0 0
          %820 = vmatpush1.bf16.msra.mxu0 %v797
          %821 = vmatprep.subr.bf16.mxu0 0
          %822 = vmatpush1.bf16.msra.mxu0 %v798
          %823 = vmatprep.subr.bf16.mxu0 0
          %824 = vmatpush1.bf16.msra.mxu0 0
          %825 = vmatprep.subr.bf16.mxu0 0
          %826 = vmatpush1.bf16.msra.mxu0 0
          %827 = vmatprep.subr.bf16.mxu0 0
          %828 = vmatpush1.bf16.msra.mxu0 0
          %829 = vmatprep.subr.bf16.mxu0 0
          %830 = vmatpush1.bf16.msra.mxu0 0
          %831 = vmatprep.subr.bf16.mxu0 0
          %832 = vmatpush1.bf16.msra.mxu0 0
          %833 = vmatprep.subr.bf16.mxu0 0
          %834 = vmatpush1.bf16.msra.mxu0 0
          %835 = vmatprep.subr.bf16.mxu0 0
          %836 = vmatpush1.bf16.msra.mxu0 0
          %837 = vmatprep.subr.bf16.mxu0 0
          %838 = vmatpush1.bf16.msra.mxu0 0
          %839 = vmatprep.mubr.bf16.mxu0 0
          %840 = vmatmul.mubr.bf16.gmra.mrb[0].mxu0 %v623
          %v841 = vpop.f32.mrb[0].mxu0
          %v842 = vadd.f32 %v757, %v841
          %v843 = vpop.f32.mrb[0].mxu0
          %v844 = vpop.f32.mrb[0].mxu0
          %v845 = vadd.f32 %v757, %v844
          %v846 = vpop.f32.mrb[0].mxu0
          %847 = vdwg.mxu0
          %v848 = vpack.c.bf16 %v733, %v730
          %849 = vst [vmem:[#allocation2] sm:$0xff] %v848
          %v850 = vpack.c.bf16 %v845, %v842
          %851 = vst [vmem:[#allocation3] sm:$0xff] %v850
        $region100: #{bert_forward.3} parent=95 // pred_fallthru
          _
        %s852 = smul.u32 %s38, 16
        %s853 = scalar_lea.vmem %s614, %s852
        %v854 = vld [vmem:[%s853] sm:$0xff]
        %v855 = vld [vmem:[%s853 + $0x8] sm:$0xff]
        %v856 = vpack.c.bf16 %v855, %v854
        %v857 = vld [vmem:[%s1] sm:$0xf]
        %v858 = vld [vmem:[%s1 + $0x4] sm:$0xf]
        %v859 = vld [vmem:[%s1 + $0x8] sm:$0xf]
        %v860 = vld [vmem:[%s1 + $0xc] sm:$0xf]
        %v861 = vld [vmem:[%s1 + $0x10] sm:$0xf]
        %v862 = vld [vmem:[%s1 + $0x14] sm:$0xf]
        %v863 = vld [vmem:[%s1 + $0x18] sm:$0xf]
        %v864 = vld [vmem:[%s1 + $0x1c] sm:$0xf]
        %v865 = vld [vmem:[%s1 + $0x20] sm:$0xf]
        %v866 = vld [vmem:[%s1 + $0x24] sm:$0xf]
        %v867 = vld [vmem:[%s1 + $0x28] sm:$0xf]
        %v868 = vld [vmem:[%s1 + $0x2c] sm:$0xf]
        %v869 = vld [vmem:[%s1 + $0x30] sm:$0xf]
        %v870 = vld [vmem:[%s1 + $0x34] sm:$0xf]
        %v871 = vld [vmem:[%s1 + $0x38] sm:$0xf]
        %v872 = vld [vmem:[%s1 + $0x3c] sm:$0xf]
        %v873 = vld [vmem:[%s2] sm:$0x1]
        %v875 = vlaneseq
        %v876 = vshrl.u32 %v875, 7
        %v877 = vsub.s32 0, %v876
        %v878 = vrot.slane %v873, %v877
        %v896 = vunpack.c.l.b16 %v857
        %v897 = vunpack.c.l.b16 %v858
        %v898 = vunpack.c.l.b16 %v859
        %v899 = vunpack.c.l.b16 %v860
        %v900 = vunpack.c.l.b16 %v861
        %v901 = vunpack.c.l.b16 %v862
        %v902 = vunpack.c.l.b16 %v863
        %v903 = vunpack.c.l.b16 %v864
        %v904 = vunpack.c.l.b16 %v865
        %v905 = vunpack.c.l.b16 %v866
        %v906 = vunpack.c.l.b16 %v867
        %v907 = vunpack.c.l.b16 %v868
        %v908 = vunpack.c.l.b16 %v869
        %v909 = vunpack.c.l.b16 %v870
        %v910 = vunpack.c.l.b16 %v871
        %v911 = vunpack.c.l.b16 %v872
        %v912 = vpack.c.b16 %v897, %v896
        %v913 = vpack.c.b16 %v899, %v898
        %v914 = vpack.c.b16 %v901, %v900
        %v915 = vpack.c.b16 %v903, %v902
        %v916 = vpack.c.b16 %v905, %v904
        %v917 = vpack.c.b16 %v907, %v906
        %v918 = vpack.c.b16 %v909, %v908
        %v919 = vpack.c.b16 %v911, %v910
        %928 = vmatprep.subr.bf16.mxu0 0
        %929 = vmatpush1.bf16.msra.mxu0 %v912
        %930 = vmatprep.subr.bf16.mxu0 0
        %931 = vmatpush1.bf16.msra.mxu0 %v913
        %932 = vmatprep.subr.bf16.mxu0 0
        %933 = vmatpush1.bf16.msra.mxu0 %v914
        %934 = vmatprep.subr.bf16.mxu0 0
        %935 = vmatpush1.bf16.msra.mxu0 %v915
        %936 = vmatprep.subr.bf16.mxu0 0
        %937 = vmatpush1.bf16.msra.mxu0 %v916
        %938 = vmatprep.subr.bf16.mxu0 0
        %939 = vmatpush1.bf16.msra.mxu0 %v917
        %940 = vmatprep.subr.bf16.mxu0 0
        %941 = vmatpush1.bf16.msra.mxu0 %v918
        %942 = vmatprep.subr.bf16.mxu0 0
        %943 = vmatpush1.bf16.msra.mxu0 %v919
        %944 = vmatprep.subr.bf16.mxu0 0
        %945 = vmatpush1.bf16.msra.mxu0 0
        %946 = vmatprep.subr.bf16.mxu0 0
        %947 = vmatpush1.bf16.msra.mxu0 0
        %948 = vmatprep.subr.bf16.mxu0 0
        %949 = vmatpush1.bf16.msra.mxu0 0
        %950 = vmatprep.subr.bf16.mxu0 0
        %951 = vmatpush1.bf16.msra.mxu0 0
        %952 = vmatprep.subr.bf16.mxu0 0
        %953 = vmatpush1.bf16.msra.mxu0 0
        %954 = vmatprep.subr.bf16.mxu0 0
        %955 = vmatpush1.bf16.msra.mxu0 0
        %956 = vmatprep.subr.bf16.mxu0 0
        %957 = vmatpush1.bf16.msra.mxu0 0
        %958 = vmatprep.subr.bf16.mxu0 0
        %959 = vmatpush1.bf16.msra.mxu0 0
        %960 = vmatprep.mubr.bf16.mxu0 0
        %961 = vmatmul.mubr.bf16.gmra.mrb[0].mxu0 %v856
        %v962 = vpop.f32.mrb[0].mxu0
        %v963 = vadd.f32 %v878, %v962
        %v964 = vpop.f32.mrb[0].mxu0
        %v965 = vpop.f32.mrb[0].mxu0
        %v966 = vadd.f32 %v878, %v965
        %v967 = vpop.f32.mrb[0].mxu0
        %968 = vdwg.mxu0
        %v969 = vmul.f32 %v963, 0.17677669
        %v970 = vmul.f32 %v966, 0.17677669
        %v971 = vpack.c.bf16 %v970, %v969
        %v972 = vld [vmem:[#allocation2] sm:$0xff]
        %v973 = vld [vmem:[#allocation3] sm:$0xff]
        %vm974 = vcmask 261120
        %v976 = vsel %vm974, %v971, 0
        %v979 = vsel %vm974, %v972, 0
        %981 = vmatprep.subr.bf16.mxu0 0
        %982 = vmatpush1.bf16.xpose.msra.mxu0 %v979
        %983 = vmatprep.subr.bf16.mxu0 0
        %984 = vmatpush1.bf16.xpose.msra.mxu0 0
        %985 = vmatprep.subr.bf16.mxu0 0
        %986 = vmatpush1.bf16.xpose.msra.mxu0 0
        %987 = vmatprep.subr.bf16.mxu0 0
        %988 = vmatpush1.bf16.xpose.msra.mxu0 0
        %989 = vmatprep.subr.bf16.mxu0 0
        %990 = vmatpush1.bf16.xpose.msra.mxu0 0
        %991 = vmatprep.subr.bf16.mxu0 0
        %992 = vmatpush1.bf16.xpose.msra.mxu0 0
        %993 = vmatprep.subr.bf16.mxu0 0
        %994 = vmatpush1.bf16.xpose.msra.mxu0 0
        %995 = vmatprep.subr.bf16.mxu0 0
        %996 = vmatpush1.bf16.xpose.msra.mxu0 0
        %997 = vmatprep.subr.bf16.mxu0 0
        %998 = vmatpush1.bf16.xpose.msra.mxu0 0
        %999 = vmatprep.subr.bf16.mxu0 0
        %1000 = vmatpush1.bf16.xpose.msra.mxu0 0
        %1001 = vmatprep.subr.bf16.mxu0 0
        %1002 = vmatpush1.bf16.xpose.msra.mxu0 0
        %1003 = vmatprep.subr.bf16.mxu0 0
        %1004 = vmatpush1.bf16.xpose.msra.mxu0 0
        %1005 = vmatprep.subr.bf16.mxu0 0
        %1006 = vmatpush1.bf16.xpose.msra.mxu0 0
        %1007 = vmatprep.subr.bf16.mxu0 0
        %1008 = vmatpush1.bf16.xpose.msra.mxu0 0
        %1009 = vmatprep.subr.bf16.mxu0 0
        %1010 = vmatpush1.bf16.xpose.msra.mxu0 0
        %1011 = vmatprep.subr.bf16.mxu0 0
        %1012 = vmatpush1.bf16.xpose.msra.mxu0 0
        %1013 = vmatprep.mubr.bf16.mxu0 0
        %1014 = vmatmul.mubr.bf16.gmra.mrb[0].mxu0 %v976
        %v1015 = vpop.f32.mrb[0].mxu0
        %v1016 = vadd.f32 0.0, %v1015
        %v1017 = vpop.f32.mrb[0].mxu0
        %v1018 = vpop.f32.mrb[0].mxu0
        %v1019 = vadd.f32 0.0, %v1018
        %v1020 = vpop.f32.mrb[0].mxu0
        %1021 = vdwg.mxu0
        %vm1022 = vcmask 130048
        %v1023 = vsel %vm1022, %v1016, -inf
        %1024 = vmax.xlane.f32.xlu0 %v1023
        %v1025 = vpop.xlane.xlu0 %1024
        %v1026 = vsel %vm1022, %v1019, -inf
        %1027 = vmax.xlane.f32.xlu0 %v1026
        %v1028 = vpop.xlane.xlu0 %1027
        %v1029 = vsub.f32 %v1016, %v1025
        %v1030 = vsub.f32 %v1019, %v1028
        %v1031 = vmul.f32 %v1029, 1.442695
        %v1032 = vpow.pop %v1031
        %v1033 = vmul.f32 %v1030, 1.442695
        %v1034 = vpow.pop %v1033
        %v1035 = vsel %vm1022, %v1032, 0.0
        %1036 = vadd.xlane.f32.xlu0 %v1035
        %v1037 = vpop.xlane.xlu0 %1036
        %v1038 = vsel %vm1022, %v1034, 0.0
        %1039 = vadd.xlane.f32.xlu0 %v1038
        %v1040 = vpop.xlane.xlu0 %1039
        %v1041 = vrcp.pop %v1037
        %v1042 = vrcp.pop %v1040
        %v1043 = vmul.f32 %v1032, %v1041
        %v1044 = vmul.f32 %v1034, %v1042
        %v1045 = vpack.c.bf16 %v1044, %v1043
        %v1047 = vsel %vm1022, %v1045, 0
        %1049 = vmatprep.subr.bf16.mxu0 0
        %1050 = vmatpush1.bf16.msra.mxu0 %v973
        %1051 = vmatprep.subr.bf16.mxu0 0
        %1052 = vmatpush1.bf16.msra.mxu0 0
        %1053 = vmatprep.subr.bf16.mxu0 0
        %1054 = vmatpush1.bf16.msra.mxu0 0
        %1055 = vmatprep.subr.bf16.mxu0 0
        %1056 = vmatpush1.bf16.msra.mxu0 0
        %1057 = vmatprep.subr.bf16.mxu0 0
        %1058 = vmatpush1.bf16.msra.mxu0 0
        %1059 = vmatprep.subr.bf16.mxu0 0
        %1060 = vmatpush1.bf16.msra.mxu0 0
        %1061 = vmatprep.subr.bf16.mxu0 0
        %1062 = vmatpush1.bf16.msra.mxu0 0
        %1063 = vmatprep.subr.bf16.mxu0 0
        %1064 = vmatpush1.bf16.msra.mxu0 0
        %1065 = vmatprep.subr.bf16.mxu0 0
        %1066 = vmatpush1.bf16.msra.mxu0 0
        %1067 = vmatprep.subr.bf16.mxu0 0
        %1068 = vmatpush1.bf16.msra.mxu0 0
        %1069 = vmatprep.subr.bf16.mxu0 0
        %1070 = vmatpush1.bf16.msra.mxu0 0
        %1071 = vmatprep.subr.bf16.mxu0 0
        %1072 = vmatpush1.bf16.msra.mxu0 0
        %1073 = vmatprep.subr.bf16.mxu0 0
        %1074 = vmatpush1.bf16.msra.mxu0 0
        %1075 = vmatprep.subr.bf16.mxu0 0
        %1076 = vmatpush1.bf16.msra.mxu0 0
        %1077 = vmatprep.subr.bf16.mxu0 0
        %1078 = vmatpush1.bf16.msra.mxu0 0
        %1079 = vmatprep.subr.bf16.mxu0 0
        %1080 = vmatpush1.bf16.msra.mxu0 0
        %1081 = vmatprep.mubr.bf16.mxu0 0
        %1082 = vmatmul.mubr.bf16.gmra.mrb[0].mxu0 %v1047
        %v1083 = vpop.f32.mrb[0].mxu0
        %v1084 = vadd.f32 0.0, %v1083
        %v1085 = vpop.f32.mrb[0].mxu0
        %v1086 = vpop.f32.mrb[0].mxu0
        %v1087 = vadd.f32 0.0, %v1086
        %v1088 = vpop.f32.mrb[0].mxu0
        %1089 = vdwg.mxu0
        %v1090 = vpack.c.bf16 %v1087, %v1084
        %1091 = vst.msk [vmem:[#allocation4] sm:$0xff] %vm974, %v1090
        %v1092 = vld [vmem:[#allocation2] sm:$0xff]
        %v1093 = vld [vmem:[#allocation3] sm:$0xff]
        %1095 = vrot.lane.b32.xlu0 %v971, 96
        %v1096 = vpop.permute.xlu0 %1095
        %1098 = vrot.lane.b32.xlu0 %v1092, 96
        %v1099 = vpop.permute.xlu0 %1098
        %v1101 = vsel %vm974, %v1096, 0
        %v1104 = vsel %vm974, %v1099, 0
        %1106 = vmatprep.subr.bf16.mxu0 0
        %1107 = vmatpush1.bf16.xpose.msra.mxu0 %v1104
        %1108 = vmatprep.subr.bf16.mxu0 0
        %1109 = vmatpush1.bf16.xpose.msra.mxu0 0
        %1110 = vmatprep.subr.bf16.mxu0 0
        %1111 = vmatpush1.bf16.xpose.msra.mxu0 0
        %1112 = vmatprep.subr.bf16.mxu0 0
        %1113 = vmatpush1.bf16.xpose.msra.mxu0 0
        %1114 = vmatprep.subr.bf16.mxu0 0
        %1115 = vmatpush1.bf16.xpose.msra.mxu0 0
        %1116 = vmatprep.subr.bf16.mxu0 0
        %1117 = vmatpush1.bf16.xpose.msra.mxu0 0
        %1118 = vmatprep.subr.bf16.mxu0 0
        %1119 = vmatpush1.bf16.xpose.msra.mxu0 0
        %1120 = vmatprep.subr.bf16.mxu0 0
        %1121 = vmatpush1.bf16.xpose.msra.mxu0 0
        %1122 = vmatprep.subr.bf16.mxu0 0
        %1123 = vmatpush1.bf16.xpose.msra.mxu0 0
        %1124 = vmatprep.subr.bf16.mxu0 0
        %1125 = vmatpush1.bf16.xpose.msra.mxu0 0
        %1126 = vmatprep.subr.bf16.mxu0 0
        %1127 = vmatpush1.bf16.xpose.msra.mxu0 0
        %1128 = vmatprep.subr.bf16.mxu0 0
        %1129 = vmatpush1.bf16.xpose.msra.mxu0 0
        %1130 = vmatprep.subr.bf16.mxu0 0
        %1131 = vmatpush1.bf16.xpose.msra.mxu0 0
        %1132 = vmatprep.subr.bf16.mxu0 0
        %1133 = vmatpush1.bf16.xpose.msra.mxu0 0
        %1134 = vmatprep.subr.bf16.mxu0 0
        %1135 = vmatpush1.bf16.xpose.msra.mxu0 0
        %1136 = vmatprep.subr.bf16.mxu0 0
        %1137 = vmatpush1.bf16.xpose.msra.mxu0 0
        %1138 = vmatprep.mubr.bf16.mxu0 0
        %1139 = vmatmul.mubr.bf16.gmra.mrb[0].mxu0 %v1101
        %v1140 = vpop.f32.mrb[0].mxu0
        %v1141 = vadd.f32 0.0, %v1140
        %v1142 = vpop.f32.mrb[0].mxu0
        %v1143 = vpop.f32.mrb[0].mxu0
        %v1144 = vadd.f32 0.0, %v1143
        %v1145 = vpop.f32.mrb[0].mxu0
        %1146 = vdwg.mxu0
        %v1147 = vsel %vm1022, %v1141, -inf
        %1148 = vmax.xlane.f32.xlu0 %v1147
        %v1149 = vpop.xlane.xlu0 %1148
        %v1150 = vsel %vm1022, %v1144, -inf
        %1151 = vmax.xlane.f32.xlu0 %v1150
        %v1152 = vpop.xlane.xlu0 %1151
        %v1153 = vsub.f32 %v1141, %v1149
        %v1154 = vsub.f32 %v1144, %v1152
        %v1155 = vmul.f32 %v1153, 1.442695
        %v1156 = vpow.pop %v1155
        %v1157 = vmul.f32 %v1154, 1.442695
        %v1158 = vpow.pop %v1157
        %v1159 = vsel %vm1022, %v1156, 0.0
        %1160 = vadd.xlane.f32.xlu0 %v1159
        %v1161 = vpop.xlane.xlu0 %1160
        %v1162 = vsel %vm1022, %v1158, 0.0
        %1163 = vadd.xlane.f32.xlu0 %v1162
        %v1164 = vpop.xlane.xlu0 %1163
        %v1165 = vrcp.pop %v1161
        %v1166 = vrcp.pop %v1164
        %v1167 = vmul.f32 %v1156, %v1165
        %v1168 = vmul.f32 %v1158, %v1166
        %v1169 = vpack.c.bf16 %v1168, %v1167
        %1171 = vrot.lane.b32.xlu0 %v1093, 96
        %v1172 = vpop.permute.xlu0 %1171
        %v1175 = vsel %vm1022, %v1169, 0
        %1177 = vmatprep.subr.bf16.mxu0 0
        %1178 = vmatpush1.bf16.msra.mxu0 %v1172
        %1179 = vmatprep.subr.bf16.mxu0 0
        %1180 = vmatpush1.bf16.msra.mxu0 0
        %1181 = vmatprep.subr.bf16.mxu0 0
        %1182 = vmatpush1.bf16.msra.mxu0 0
        %1183 = vmatprep.subr.bf16.mxu0 0
        %1184 = vmatpush1.bf16.msra.mxu0 0
        %1185 = vmatprep.subr.bf16.mxu0 0
        %1186 = vmatpush1.bf16.msra.mxu0 0
        %1187 = vmatprep.subr.bf16.mxu0 0
        %1188 = vmatpush1.bf16.msra.mxu0 0
        %1189 = vmatprep.subr.bf16.mxu0 0
        %1190 = vmatpush1.bf16.msra.mxu0 0
        %1191 = vmatprep.subr.bf16.mxu0 0
        %1192 = vmatpush1.bf16.msra.mxu0 0
        %1193 = vmatprep.subr.bf16.mxu0 0
        %1194 = vmatpush1.bf16.msra.mxu0 0
        %1195 = vmatprep.subr.bf16.mxu0 0
        %1196 = vmatpush1.bf16.msra.mxu0 0
        %1197 = vmatprep.subr.bf16.mxu0 0
        %1198 = vmatpush1.bf16.msra.mxu0 0
        %1199 = vmatprep.subr.bf16.mxu0 0
        %1200 = vmatpush1.bf16.msra.mxu0 0
        %1201 = vmatprep.subr.bf16.mxu0 0
        %1202 = vmatpush1.bf16.msra.mxu0 0
        %1203 = vmatprep.subr.bf16.mxu0 0
        %1204 = vmatpush1.bf16.msra.mxu0 0
        %1205 = vmatprep.subr.bf16.mxu0 0
        %1206 = vmatpush1.bf16.msra.mxu0 0
        %1207 = vmatprep.subr.bf16.mxu0 0
        %1208 = vmatpush1.bf16.msra.mxu0 0
        %1209 = vmatprep.mubr.bf16.mxu0 0
        %1210 = vmatmul.mubr.bf16.gmra.mrb[0].mxu0 %v1175
        %v1211 = vpop.f32.mrb[0].mxu0
        %v1212 = vadd.f32 0.0, %v1211
        %v1213 = vpop.f32.mrb[0].mxu0
        %v1214 = vpop.f32.mrb[0].mxu0
        %v1215 = vadd.f32 0.0, %v1214
        %v1216 = vpop.f32.mrb[0].mxu0
        %1217 = vdwg.mxu0
        %v1218 = vpack.c.bf16 %v1215, %v1212
        %1220 = vrot.lane.b32.xlu0 %v1218, 32
        %v1221 = vpop.permute.xlu0 %1220
        %vm1223 = vcmask 523520
        %1224 = vst.msk [vmem:[#allocation4] sm:$0xff] %vm1223, %v1221
        %v1225 = vld [vmem:[#allocation2] sm:$0xff]
        %v1226 = vld [vmem:[#allocation3] sm:$0xff]
        %1227 = vrot.lane.b32.xlu0 %v971, 64
        %v1228 = vpop.permute.xlu0 %1227
        %1230 = vrot.lane.b32.xlu0 %v1225, 64
        %v1231 = vpop.permute.xlu0 %1230
        %v1233 = vsel %vm974, %v1228, 0
        %v1236 = vsel %vm974, %v1231, 0
        %1238 = vmatprep.subr.bf16.mxu0 0
        %1239 = vmatpush1.bf16.xpose.msra.mxu0 %v1236
        %1240 = vmatprep.subr.bf16.mxu0 0
        %1241 = vmatpush1.bf16.xpose.msra.mxu0 0
        %1242 = vmatprep.subr.bf16.mxu0 0
        %1243 = vmatpush1.bf16.xpose.msra.mxu0 0
        %1244 = vmatprep.subr.bf16.mxu0 0
        %1245 = vmatpush1.bf16.xpose.msra.mxu0 0
        %1246 = vmatprep.subr.bf16.mxu0 0
        %1247 = vmatpush1.bf16.xpose.msra.mxu0 0
        %1248 = vmatprep.subr.bf16.mxu0 0
        %1249 = vmatpush1.bf16.xpose.msra.mxu0 0
        %1250 = vmatprep.subr.bf16.mxu0 0
        %1251 = vmatpush1.bf16.xpose.msra.mxu0 0
        %1252 = vmatprep.subr.bf16.mxu0 0
        %1253 = vmatpush1.bf16.xpose.msra.mxu0 0
        %1254 = vmatprep.subr.bf16.mxu0 0
        %1255 = vmatpush1.bf16.xpose.msra.mxu0 0
        %1256 = vmatprep.subr.bf16.mxu0 0
        %1257 = vmatpush1.bf16.xpose.msra.mxu0 0
        %1258 = vmatprep.subr.bf16.mxu0 0
        %1259 = vmatpush1.bf16.xpose.msra.mxu0 0
        %1260 = vmatprep.subr.bf16.mxu0 0
        %1261 = vmatpush1.bf16.xpose.msra.mxu0 0
        %1262 = vmatprep.subr.bf16.mxu0 0
        %1263 = vmatpush1.bf16.xpose.msra.mxu0 0
        %1264 = vmatprep.subr.bf16.mxu0 0
        %1265 = vmatpush1.bf16.xpose.msra.mxu0 0
        %1266 = vmatprep.subr.bf16.mxu0 0
        %1267 = vmatpush1.bf16.xpose.msra.mxu0 0
        %1268 = vmatprep.subr.bf16.mxu0 0
        %1269 = vmatpush1.bf16.xpose.msra.mxu0 0
        %1270 = vmatprep.mubr.bf16.mxu0 0
        %1271 = vmatmul.mubr.bf16.gmra.mrb[0].mxu0 %v1233
        %v1272 = vpop.f32.mrb[0].mxu0
        %v1273 = vadd.f32 0.0, %v1272
        %v1274 = vpop.f32.mrb[0].mxu0
        %v1275 = vpop.f32.mrb[0].mxu0
        %v1276 = vadd.f32 0.0, %v1275
        %v1277 = vpop.f32.mrb[0].mxu0
        %1278 = vdwg.mxu0
        %v1279 = vsel %vm1022, %v1273, -inf
        %1280 = vmax.xlane.f32.xlu0 %v1279
        %v1281 = vpop.xlane.xlu0 %1280
        %v1282 = vsel %vm1022, %v1276, -inf
        %1283 = vmax.xlane.f32.xlu0 %v1282
        %v1284 = vpop.xlane.xlu0 %1283
        %v1285 = vsub.f32 %v1273, %v1281
        %v1286 = vsub.f32 %v1276, %v1284
        %v1287 = vmul.f32 %v1285, 1.442695
        %v1288 = vpow.pop %v1287
        %v1289 = vmul.f32 %v1286, 1.442695
        %v1290 = vpow.pop %v1289
        %v1291 = vsel %vm1022, %v1288, 0.0
        %1292 = vadd.xlane.f32.xlu0 %v1291
        %v1293 = vpop.xlane.xlu0 %1292
        %v1294 = vsel %vm1022, %v1290, 0.0
        %1295 = vadd.xlane.f32.xlu0 %v1294
        %v1296 = vpop.xlane.xlu0 %1295
        %v1297 = vrcp.pop %v1293
        %v1298 = vrcp.pop %v1296
        %v1299 = vmul.f32 %v1288, %v1297
        %v1300 = vmul.f32 %v1290, %v1298
        %v1301 = vpack.c.bf16 %v1300, %v1299
        %1303 = vrot.lane.b32.xlu0 %v1226, 64
        %v1304 = vpop.permute.xlu0 %1303
        %v1307 = vsel %vm1022, %v1301, 0
        %1309 = vmatprep.subr.bf16.mxu0 0
        %1310 = vmatpush1.bf16.msra.mxu0 %v1304
        %1311 = vmatprep.subr.bf16.mxu0 0
        %1312 = vmatpush1.bf16.msra.mxu0 0
        %1313 = vmatprep.subr.bf16.mxu0 0
        %1314 = vmatpush1.bf16.msra.mxu0 0
        %1315 = vmatprep.subr.bf16.mxu0 0
        %1316 = vmatpush1.bf16.msra.mxu0 0
        %1317 = vmatprep.subr.bf16.mxu0 0
        %1318 = vmatpush1.bf16.msra.mxu0 0
        %1319 = vmatprep.subr.bf16.mxu0 0
        %1320 = vmatpush1.bf16.msra.mxu0 0
        %1321 = vmatprep.subr.bf16.mxu0 0
        %1322 = vmatpush1.bf16.msra.mxu0 0
        %1323 = vmatprep.subr.bf16.mxu0 0
        %1324 = vmatpush1.bf16.msra.mxu0 0
        %1325 = vmatprep.subr.bf16.mxu0 0
        %1326 = vmatpush1.bf16.msra.mxu0 0
        %1327 = vmatprep.subr.bf16.mxu0 0
        %1328 = vmatpush1.bf16.msra.mxu0 0
        %1329 = vmatprep.subr.bf16.mxu0 0
        %1330 = vmatpush1.bf16.msra.mxu0 0
        %1331 = vmatprep.subr.bf16.mxu0 0
        %1332 = vmatpush1.bf16.msra.mxu0 0
        %1333 = vmatprep.subr.bf16.mxu0 0
        %1334 = vmatpush1.bf16.msra.mxu0 0
        %1335 = vmatprep.subr.bf16.mxu0 0
        %1336 = vmatpush1.bf16.msra.mxu0 0
        %1337 = vmatprep.subr.bf16.mxu0 0
        %1338 = vmatpush1.bf16.msra.mxu0 0
        %1339 = vmatprep.subr.bf16.mxu0 0
        %1340 = vmatpush1.bf16.msra.mxu0 0
        %1341 = vmatprep.mubr.bf16.mxu0 0
        %1342 = vmatmul.mubr.bf16.gmra.mrb[0].mxu0 %v1307
        %v1343 = vpop.f32.mrb[0].mxu0
        %v1344 = vadd.f32 0.0, %v1343
        %v1345 = vpop.f32.mrb[0].mxu0
        %v1346 = vpop.f32.mrb[0].mxu0
        %v1347 = vadd.f32 0.0, %v1346
        %v1348 = vpop.f32.mrb[0].mxu0
        %1349 = vdwg.mxu0
        %v1350 = vpack.c.bf16 %v1347, %v1344
        %1352 = vrot.lane.b32.xlu0 %v1350, 64
        %v1353 = vpop.permute.xlu0 %1352
        %vm1355 = vcmask 785920
        %1356 = vst.msk [vmem:[#allocation4] sm:$0xff] %vm1355, %v1353
        %v1357 = vld [vmem:[#allocation2] sm:$0xff]
        %v1358 = vld [vmem:[#allocation3] sm:$0xff]
        %1359 = vrot.lane.b32.xlu0 %v971, 32
        %v1360 = vpop.permute.xlu0 %1359
        %1362 = vrot.lane.b32.xlu0 %v1357, 32
        %v1363 = vpop.permute.xlu0 %1362
        %v1365 = vsel %vm974, %v1360, 0
        %v1368 = vsel %vm974, %v1363, 0
        %1370 = vmatprep.subr.bf16.mxu0 0
        %1371 = vmatpush1.bf16.xpose.msra.mxu0 %v1368
        %1372 = vmatprep.subr.bf16.mxu0 0
        %1373 = vmatpush1.bf16.xpose.msra.mxu0 0
        %1374 = vmatprep.subr.bf16.mxu0 0
        %1375 = vmatpush1.bf16.xpose.msra.mxu0 0
        %1376 = vmatprep.subr.bf16.mxu0 0
        %1377 = vmatpush1.bf16.xpose.msra.mxu0 0
        %1378 = vmatprep.subr.bf16.mxu0 0
        %1379 = vmatpush1.bf16.xpose.msra.mxu0 0
        %1380 = vmatprep.subr.bf16.mxu0 0
        %1381 = vmatpush1.bf16.xpose.msra.mxu0 0
        %1382 = vmatprep.subr.bf16.mxu0 0
        %1383 = vmatpush1.bf16.xpose.msra.mxu0 0
        %1384 = vmatprep.subr.bf16.mxu0 0
        %1385 = vmatpush1.bf16.xpose.msra.mxu0 0
        %1386 = vmatprep.subr.bf16.mxu0 0
        %1387 = vmatpush1.bf16.xpose.msra.mxu0 0
        %1388 = vmatprep.subr.bf16.mxu0 0
        %1389 = vmatpush1.bf16.xpose.msra.mxu0 0
        %1390 = vmatprep.subr.bf16.mxu0 0
        %1391 = vmatpush1.bf16.xpose.msra.mxu0 0
        %1392 = vmatprep.subr.bf16.mxu0 0
        %1393 = vmatpush1.bf16.xpose.msra.mxu0 0
        %1394 = vmatprep.subr.bf16.mxu0 0
        %1395 = vmatpush1.bf16.xpose.msra.mxu0 0
        %1396 = vmatprep.subr.bf16.mxu0 0
        %1397 = vmatpush1.bf16.xpose.msra.mxu0 0
        %1398 = vmatprep.subr.bf16.mxu0 0
        %1399 = vmatpush1.bf16.xpose.msra.mxu0 0
        %1400 = vmatprep.subr.bf16.mxu0 0
        %1401 = vmatpush1.bf16.xpose.msra.mxu0 0
        %1402 = vmatprep.mubr.bf16.mxu0 0
        %1403 = vmatmul.mubr.bf16.gmra.mrb[0].mxu0 %v1365
        %v1404 = vpop.f32.mrb[0].mxu0
        %v1405 = vadd.f32 0.0, %v1404
        %v1406 = vpop.f32.mrb[0].mxu0
        %v1407 = vpop.f32.mrb[0].mxu0
        %v1408 = vadd.f32 0.0, %v1407
        %v1409 = vpop.f32.mrb[0].mxu0
        %1410 = vdwg.mxu0
        %v1411 = vsel %vm1022, %v1405, -inf
        %1412 = vmax.xlane.f32.xlu0 %v1411
        %v1413 = vpop.xlane.xlu0 %1412
        %v1414 = vsel %vm1022, %v1408, -inf
        %1415 = vmax.xlane.f32.xlu0 %v1414
        %v1416 = vpop.xlane.xlu0 %1415
        %v1417 = vsub.f32 %v1405, %v1413
        %v1418 = vsub.f32 %v1408, %v1416
        %v1419 = vmul.f32 %v1417, 1.442695
        %v1420 = vpow.pop %v1419
        %v1421 = vmul.f32 %v1418, 1.442695
        %v1422 = vpow.pop %v1421
        %v1423 = vsel %vm1022, %v1420, 0.0
        %1424 = vadd.xlane.f32.xlu0 %v1423
        %v1425 = vpop.xlane.xlu0 %1424
        %v1426 = vsel %vm1022, %v1422, 0.0
        %1427 = vadd.xlane.f32.xlu0 %v1426
        %v1428 = vpop.xlane.xlu0 %1427
        %v1429 = vrcp.pop %v1425
        %v1430 = vrcp.pop %v1428
        %v1431 = vmul.f32 %v1420, %v1429
        %v1432 = vmul.f32 %v1422, %v1430
        %v1433 = vpack.c.bf16 %v1432, %v1431
        %1435 = vrot.lane.b32.xlu0 %v1358, 32
        %v1436 = vpop.permute.xlu0 %1435
        %v1439 = vsel %vm1022, %v1433, 0
        %1441 = vmatprep.subr.bf16.mxu0 0
        %1442 = vmatpush1.bf16.msra.mxu0 %v1436
        %1443 = vmatprep.subr.bf16.mxu0 0
        %1444 = vmatpush1.bf16.msra.mxu0 0
        %1445 = vmatprep.subr.bf16.mxu0 0
        %1446 = vmatpush1.bf16.msra.mxu0 0
        %1447 = vmatprep.subr.bf16.mxu0 0
        %1448 = vmatpush1.bf16.msra.mxu0 0
        %1449 = vmatprep.subr.bf16.mxu0 0
        %1450 = vmatpush1.bf16.msra.mxu0 0
        %1451 = vmatprep.subr.bf16.mxu0 0
        %1452 = vmatpush1.bf16.msra.mxu0 0
        %1453 = vmatprep.subr.bf16.mxu0 0
        %1454 = vmatpush1.bf16.msra.mxu0 0
        %1455 = vmatprep.subr.bf16.mxu0 0
        %1456 = vmatpush1.bf16.msra.mxu0 0
        %1457 = vmatprep.subr.bf16.mxu0 0
        %1458 = vmatpush1.bf16.msra.mxu0 0
        %1459 = vmatprep.subr.bf16.mxu0 0
        %1460 = vmatpush1.bf16.msra.mxu0 0
        %1461 = vmatprep.subr.bf16.mxu0 0
        %1462 = vmatpush1.bf16.msra.mxu0 0
        %1463 = vmatprep.subr.bf16.mxu0 0
        %1464 = vmatpush1.bf16.msra.mxu0 0
        %1465 = vmatprep.subr.bf16.mxu0 0
        %1466 = vmatpush1.bf16.msra.mxu0 0
        %1467 = vmatprep.subr.bf16.mxu0 0
        %1468 = vmatpush1.bf16.msra.mxu0 0
        %1469 = vmatprep.subr.bf16.mxu0 0
        %1470 = vmatpush1.bf16.msra.mxu0 0
        %1471 = vmatprep.subr.bf16.mxu0 0
        %1472 = vmatpush1.bf16.msra.mxu0 0
        %1473 = vmatprep.mubr.bf16.mxu0 0
        %1474 = vmatmul.mubr.bf16.gmra.mrb[0].mxu0 %v1439
        %v1475 = vpop.f32.mrb[0].mxu0
        %v1476 = vadd.f32 0.0, %v1475
        %v1477 = vpop.f32.mrb[0].mxu0
        %v1478 = vpop.f32.mrb[0].mxu0
        %v1479 = vadd.f32 0.0, %v1478
        %v1480 = vpop.f32.mrb[0].mxu0
        %1481 = vdwg.mxu0
        %v1482 = vpack.c.bf16 %v1479, %v1476
        %1484 = vrot.lane.b32.xlu0 %v1482, 96
        %v1485 = vpop.permute.xlu0 %1484
        %vm1487 = vcmask 1048320
        %1488 = vst.msk [vmem:[#allocation4] sm:$0xff] %vm1487, %v1485
        %v1489 = vld [vmem:[#allocation4] sm:$0xff]
        %v1490 = vld [vmem:[%s7] sm:$0xf]
        %v1491 = vld [vmem:[%s7 + $0x4] sm:$0xf]
        %v1492 = vld [vmem:[%s7 + $0x8] sm:$0xf]
        %v1493 = vld [vmem:[%s7 + $0xc] sm:$0xf]
        %v1494 = vld [vmem:[%s7 + $0x10] sm:$0xf]
        %v1495 = vld [vmem:[%s7 + $0x14] sm:$0xf]
        %v1496 = vld [vmem:[%s7 + $0x18] sm:$0xf]
        %v1497 = vld [vmem:[%s7 + $0x1c] sm:$0xf]
        %v1498 = vld [vmem:[%s7 + $0x20] sm:$0xf]
        %v1499 = vld [vmem:[%s7 + $0x24] sm:$0xf]
        %v1500 = vld [vmem:[%s7 + $0x28] sm:$0xf]
        %v1501 = vld [vmem:[%s7 + $0x2c] sm:$0xf]
        %v1502 = vld [vmem:[%s7 + $0x30] sm:$0xf]
        %v1503 = vld [vmem:[%s7 + $0x34] sm:$0xf]
        %v1504 = vld [vmem:[%s7 + $0x38] sm:$0xf]
        %v1505 = vld [vmem:[%s7 + $0x3c] sm:$0xf]
        %v1506 = vld [vmem:[%s8] sm:$0x1]
        %v1508 = vlaneseq
        %v1509 = vshrl.u32 %v1508, 7
        %v1510 = vsub.s32 0, %v1509
        %v1511 = vrot.slane %v1506, %v1510
        %v1529 = vunpack.c.l.b16 %v1490
        %v1530 = vunpack.c.l.b16 %v1491
        %v1531 = vunpack.c.l.b16 %v1492
        %v1532 = vunpack.c.l.b16 %v1493
        %v1533 = vunpack.c.l.b16 %v1494
        %v1534 = vunpack.c.l.b16 %v1495
        %v1535 = vunpack.c.l.b16 %v1496
        %v1536 = vunpack.c.l.b16 %v1497
        %v1537 = vunpack.c.l.b16 %v1498
        %v1538 = vunpack.c.l.b16 %v1499
        %v1539 = vunpack.c.l.b16 %v1500
        %v1540 = vunpack.c.l.b16 %v1501
        %v1541 = vunpack.c.l.b16 %v1502
        %v1542 = vunpack.c.l.b16 %v1503
        %v1543 = vunpack.c.l.b16 %v1504
        %v1544 = vunpack.c.l.b16 %v1505
        %v1545 = vpack.c.b16 %v1530, %v1529
        %v1546 = vpack.c.b16 %v1532, %v1531
        %v1547 = vpack.c.b16 %v1534, %v1533
        %v1548 = vpack.c.b16 %v1536, %v1535
        %v1549 = vpack.c.b16 %v1538, %v1537
        %v1550 = vpack.c.b16 %v1540, %v1539
        %v1551 = vpack.c.b16 %v1542, %v1541
        %v1552 = vpack.c.b16 %v1544, %v1543
        %1561 = vmatprep.subr.bf16.mxu0 0
        %1562 = vmatpush1.bf16.msra.mxu0 %v1545
        %1563 = vmatprep.subr.bf16.mxu0 0
        %1564 = vmatpush1.bf16.msra.mxu0 %v1546
        %1565 = vmatprep.subr.bf16.mxu0 0
        %1566 = vmatpush1.bf16.msra.mxu0 %v1547
        %1567 = vmatprep.subr.bf16.mxu0 0
        %1568 = vmatpush1.bf16.msra.mxu0 %v1548
        %1569 = vmatprep.subr.bf16.mxu0 0
        %1570 = vmatpush1.bf16.msra.mxu0 %v1549
        %1571 = vmatprep.subr.bf16.mxu0 0
        %1572 = vmatpush1.bf16.msra.mxu0 %v1550
        %1573 = vmatprep.subr.bf16.mxu0 0
        %1574 = vmatpush1.bf16.msra.mxu0 %v1551
        %1575 = vmatprep.subr.bf16.mxu0 0
        %1576 = vmatpush1.bf16.msra.mxu0 %v1552
        %1577 = vmatprep.subr.bf16.mxu0 0
        %1578 = vmatpush1.bf16.msra.mxu0 0
        %1579 = vmatprep.subr.bf16.mxu0 0
        %1580 = vmatpush1.bf16.msra.mxu0 0
        %1581 = vmatprep.subr.bf16.mxu0 0
        %1582 = vmatpush1.bf16.msra.mxu0 0
        %1583 = vmatprep.subr.bf16.mxu0 0
        %1584 = vmatpush1.bf16.msra.mxu0 0
        %1585 = vmatprep.subr.bf16.mxu0 0
        %1586 = vmatpush1.bf16.msra.mxu0 0
        %1587 = vmatprep.subr.bf16.mxu0 0
        %1588 = vmatpush1.bf16.msra.mxu0 0
        %1589 = vmatprep.subr.bf16.mxu0 0
        %1590 = vmatpush1.bf16.msra.mxu0 0
        %1591 = vmatprep.subr.bf16.mxu0 0
        %1592 = vmatpush1.bf16.msra.mxu0 0
        %1593 = vmatprep.mubr.bf16.mxu0 0
        %1594 = vmatmul.mubr.bf16.gmra.mrb[0].mxu0 %v1489
        %v1595 = vpop.f32.mrb[0].mxu0
        %v1596 = vadd.f32 %v1511, %v1595
        %v1597 = vpop.f32.mrb[0].mxu0
        %v1598 = vpop.f32.mrb[0].mxu0
        %v1599 = vadd.f32 %v1511, %v1598
        %v1600 = vpop.f32.mrb[0].mxu0
        %1601 = vdwg.mxu0
        %v1602 = vadd.f32 %v854, %v1596
        %v1603 = vadd.f32 %v855, %v1599
        %v1604 = vld [vmem:[%s13] sm:$0x1]
        %v1605 = vld [vmem:[%s14] sm:$0x1]
        %1606 = vadd.xlane.f32.xlu0 %v1602
        %v1607 = vpop.xlane.xlu0 %1606
        %1608 = vadd.xlane.f32.xlu0 %v1603
        %v1609 = vpop.xlane.xlu0 %1608
        %v1610 = vrcp.pop 128.0
        %v1611 = vmul.f32 %v1607, %v1610
        %v1612 = vmul.f32 %v1609, %v1610
        %v1613 = vsub.f32 %v1602, %v1611
        %v1614 = vsub.f32 %v1603, %v1612
        %v1615 = vmul.f32 %v1613, %v1613
        %v1616 = vmul.f32 %v1614, %v1614
        %1617 = vadd.xlane.f32.xlu0 %v1615
        %v1618 = vpop.xlane.xlu0 %1617
        %1619 = vadd.xlane.f32.xlu0 %v1616
        %v1620 = vpop.xlane.xlu0 %1619
        %v1621 = vmul.f32 %v1618, %v1610
        %v1622 = vmul.f32 %v1620, %v1610
        %v1623 = vadd.f32 %v1621, 1e-05
        %v1624 = vadd.f32 %v1622, 1e-05
        %v1625 = vrsqrt.pop %v1623
        %v1626 = vrsqrt.pop %v1624
        %v1627 = vmul.f32 %v1613, %v1625
        %v1628 = vmul.f32 %v1614, %v1626
        %v1630 = vlaneseq
        %v1631 = vshrl.u32 %v1630, 7
        %v1632 = vsub.s32 0, %v1631
        %v1633 = vrot.slane %v1604, %v1632
        %v1635 = vmul.f32 %v1627, %v1633
        %v1636 = vmul.f32 %v1628, %v1633
        %v1638 = vlaneseq
        %v1639 = vshrl.u32 %v1638, 7
        %v1640 = vsub.s32 0, %v1639
        %v1641 = vrot.slane %v1605, %v1640
        %v1643 = vadd.f32 %v1635, %v1641
        %v1644 = vadd.f32 %v1636, %v1641
        %v1645 = vpack.c.bf16 %v1644, %v1643
        %v1646 = vld [vmem:[%s9] sm:$0xff]
        %v1647 = vld [vmem:[%s9 + $0x8] sm:$0xff]
        %v1648 = vld [vmem:[%s9 + $0x10] sm:$0xff]
        %v1649 = vld [vmem:[%s9 + $0x18] sm:$0xff]
        %v1650 = vld [vmem:[%s9 + $0x20] sm:$0xff]
        %v1651 = vld [vmem:[%s9 + $0x28] sm:$0xff]
        %v1652 = vld [vmem:[%s9 + $0x30] sm:$0xff]
        %v1653 = vld [vmem:[%s9 + $0x38] sm:$0xff]
        %v1654 = vld [vmem:[%s9 + $0x40] sm:$0xff]
        %v1655 = vld [vmem:[%s9 + $0x48] sm:$0xff]
        %v1656 = vld [vmem:[%s9 + $0x50] sm:$0xff]
        %v1657 = vld [vmem:[%s9 + $0x58] sm:$0xff]
        %v1658 = vld [vmem:[%s9 + $0x60] sm:$0xff]
        %v1659 = vld [vmem:[%s9 + $0x68] sm:$0xff]
        %v1660 = vld [vmem:[%s9 + $0x70] sm:$0xff]
        %v1661 = vld [vmem:[%s9 + $0x78] sm:$0xff]
        %v1662 = vld [vmem:[%s10] sm:$0x3]
        %v1664 = vlaneseq
        %v1665 = vshrl.u32 %v1664, 7
        %v1666 = vsub.s32 0, %v1665
        %v1667 = vrot.slane %v1662, %v1666
        %v1668 = vlaneseq
        %v1669 = vshrl.u32 %v1668, 7
        %v1670 = vsub.s32 1, %v1669
        %v1671 = vrot.slane %v1662, %v1670
        %v1690 = vunpack.c.l.b16 %v1646
        %v1691 = vunpack.c.h.b16 %v1646
        %v1692 = vunpack.c.l.b16 %v1647
        %v1693 = vunpack.c.h.b16 %v1647
        %v1694 = vunpack.c.l.b16 %v1648
        %v1695 = vunpack.c.h.b16 %v1648
        %v1696 = vunpack.c.l.b16 %v1649
        %v1697 = vunpack.c.h.b16 %v1649
        %v1698 = vunpack.c.l.b16 %v1650
        %v1699 = vunpack.c.h.b16 %v1650
        %v1700 = vunpack.c.l.b16 %v1651
        %v1701 = vunpack.c.h.b16 %v1651
        %v1702 = vunpack.c.l.b16 %v1652
        %v1703 = vunpack.c.h.b16 %v1652
        %v1704 = vunpack.c.l.b16 %v1653
        %v1705 = vunpack.c.h.b16 %v1653
        %v1706 = vunpack.c.l.b16 %v1654
        %v1707 = vunpack.c.h.b16 %v1654
        %v1708 = vunpack.c.l.b16 %v1655
        %v1709 = vunpack.c.h.b16 %v1655
        %v1710 = vunpack.c.l.b16 %v1656
        %v1711 = vunpack.c.h.b16 %v1656
        %v1712 = vunpack.c.l.b16 %v1657
        %v1713 = vunpack.c.h.b16 %v1657
        %v1714 = vunpack.c.l.b16 %v1658
        %v1715 = vunpack.c.h.b16 %v1658
        %v1716 = vunpack.c.l.b16 %v1659
        %v1717 = vunpack.c.h.b16 %v1659
        %v1718 = vunpack.c.l.b16 %v1660
        %v1719 = vunpack.c.h.b16 %v1660
        %v1720 = vunpack.c.l.b16 %v1661
        %v1721 = vunpack.c.h.b16 %v1661
        %v1722 = vpack.c.b16 %v1692, %v1690
        %v1723 = vpack.c.b16 %v1693, %v1691
        %v1724 = vpack.c.b16 %v1696, %v1694
        %v1725 = vpack.c.b16 %v1697, %v1695
        %v1726 = vpack.c.b16 %v1700, %v1698
        %v1727 = vpack.c.b16 %v1701, %v1699
        %v1728 = vpack.c.b16 %v1704, %v1702
        %v1729 = vpack.c.b16 %v1705, %v1703
        %v1730 = vpack.c.b16 %v1708, %v1706
        %v1731 = vpack.c.b16 %v1709, %v1707
        %v1732 = vpack.c.b16 %v1712, %v1710
        %v1733 = vpack.c.b16 %v1713, %v1711
        %v1734 = vpack.c.b16 %v1716, %v1714
        %v1735 = vpack.c.b16 %v1717, %v1715
        %v1736 = vpack.c.b16 %v1720, %v1718
        %v1737 = vpack.c.b16 %v1721, %v1719
        %1754 = vmatprep.subr.bf16.mxu0 %v1723
        %1755 = vmatpush1.bf16.msra.mxu0 %v1722
        %1756 = vmatprep.subr.bf16.mxu0 %v1725
        %1757 = vmatpush1.bf16.msra.mxu0 %v1724
        %1758 = vmatprep.subr.bf16.mxu0 %v1727
        %1759 = vmatpush1.bf16.msra.mxu0 %v1726
        %1760 = vmatprep.subr.bf16.mxu0 %v1729
        %1761 = vmatpush1.bf16.msra.mxu0 %v1728
        %1762 = vmatprep.subr.bf16.mxu0 %v1731
        %1763 = vmatpush1.bf16.msra.mxu0 %v1730
        %1764 = vmatprep.subr.bf16.mxu0 %v1733
        %1765 = vmatpush1.bf16.msra.mxu0 %v1732
        %1766 = vmatprep.subr.bf16.mxu0 %v1735
        %1767 = vmatpush1.bf16.msra.mxu0 %v1734
        %1768 = vmatprep.subr.bf16.mxu0 %v1737
        %1769 = vmatpush1.bf16.msra.mxu0 %v1736
        %1770 = vmatprep.subr.bf16.mxu0 0
        %1771 = vmatpush1.bf16.msra.mxu0 0
        %1772 = vmatprep.subr.bf16.mxu0 0
        %1773 = vmatpush1.bf16.msra.mxu0 0
        %1774 = vmatprep.subr.bf16.mxu0 0
        %1775 = vmatpush1.bf16.msra.mxu0 0
        %1776 = vmatprep.subr.bf16.mxu0 0
        %1777 = vmatpush1.bf16.msra.mxu0 0
        %1778 = vmatprep.subr.bf16.mxu0 0
        %1779 = vmatpush1.bf16.msra.mxu0 0
        %1780 = vmatprep.subr.bf16.mxu0 0
        %1781 = vmatpush1.bf16.msra.mxu0 0
        %1782 = vmatprep.subr.bf16.mxu0 0
        %1783 = vmatpush1.bf16.msra.mxu0 0
        %1784 = vmatprep.subr.bf16.mxu0 0
        %1785 = vmatpush1.bf16.msra.mxu0 0
        %1786 = vmatprep.mubr.bf16.mxu0 0
        %1787 = vmatmul.mubr.bf16.gmra.mrb[0].mxu0 %v1645
        %v1788 = vpop.f32.mrb[0].mxu0
        %v1789 = vadd.f32 %v1667, %v1788
        %v1790 = vpop.f32.mrb[0].mxu0
        %v1791 = vadd.f32 %v1671, %v1790
        %v1792 = vpop.f32.mrb[0].mxu0
        %v1793 = vadd.f32 %v1667, %v1792
        %v1794 = vpop.f32.mrb[0].mxu0
        %v1795 = vadd.f32 %v1671, %v1794
        %1796 = vdwg.mxu0
        %v1797 = vmax.f32 %v1789, 0.0
        %v1798 = vmax.f32 %v1791, 0.0
        %v1799 = vmax.f32 %v1793, 0.0
        %v1800 = vmax.f32 %v1795, 0.0
        %v1801 = vpack.c.bf16 %v1799, %v1797
        %v1802 = vpack.c.bf16 %v1800, %v1798
        %v1803 = vld [vmem:[%s11] sm:$0xf]
        %v1804 = vld [vmem:[%s11 + $0x4] sm:$0xf]
        %v1805 = vld [vmem:[%s11 + $0x8] sm:$0xf]
        %v1806 = vld [vmem:[%s11 + $0xc] sm:$0xf]
        %v1807 = vld [vmem:[%s11 + $0x10] sm:$0xf]
        %v1808 = vld [vmem:[%s11 + $0x14] sm:$0xf]
        %v1809 = vld [vmem:[%s11 + $0x18] sm:$0xf]
        %v1810 = vld [vmem:[%s11 + $0x1c] sm:$0xf]
        %v1811 = vld [vmem:[%s11 + $0x20] sm:$0xf]
        %v1812 = vld [vmem:[%s11 + $0x24] sm:$0xf]
        %v1813 = vld [vmem:[%s11 + $0x28] sm:$0xf]
        %v1814 = vld [vmem:[%s11 + $0x2c] sm:$0xf]
        %v1815 = vld [vmem:[%s11 + $0x30] sm:$0xf]
        %v1816 = vld [vmem:[%s11 + $0x34] sm:$0xf]
        %v1817 = vld [vmem:[%s11 + $0x38] sm:$0xf]
        %v1818 = vld [vmem:[%s11 + $0x3c] sm:$0xf]
        %v1819 = vld [vmem:[%s11 + $0x40] sm:$0xf]
        %v1820 = vld [vmem:[%s11 + $0x44] sm:$0xf]
        %v1821 = vld [vmem:[%s11 + $0x48] sm:$0xf]
        %v1822 = vld [vmem:[%s11 + $0x4c] sm:$0xf]
        %v1823 = vld [vmem:[%s11 + $0x50] sm:$0xf]
        %v1824 = vld [vmem:[%s11 + $0x54] sm:$0xf]
        %v1825 = vld [vmem:[%s11 + $0x58] sm:$0xf]
        %v1826 = vld [vmem:[%s11 + $0x5c] sm:$0xf]
        %v1827 = vld [vmem:[%s11 + $0x60] sm:$0xf]
        %v1828 = vld [vmem:[%s11 + $0x64] sm:$0xf]
        %v1829 = vld [vmem:[%s11 + $0x68] sm:$0xf]
        %v1830 = vld [vmem:[%s11 + $0x6c] sm:$0xf]
        %v1831 = vld [vmem:[%s11 + $0x70] sm:$0xf]
        %v1832 = vld [vmem:[%s11 + $0x74] sm:$0xf]
        %v1833 = vld [vmem:[%s11 + $0x78] sm:$0xf]
        %v1834 = vld [vmem:[%s11 + $0x7c] sm:$0xf]
        %v1835 = vld [vmem:[%s12] sm:$0x1]
        %v1837 = vlaneseq
        %v1838 = vshrl.u32 %v1837, 7
        %v1839 = vsub.s32 0, %v1838
        %v1840 = vrot.slane %v1835, %v1839
        %v1874 = vunpack.c.l.b16 %v1803
        %v1875 = vunpack.c.l.b16 %v1804
        %v1876 = vunpack.c.l.b16 %v1805
        %v1877 = vunpack.c.l.b16 %v1806
        %v1878 = vunpack.c.l.b16 %v1807
        %v1879 = vunpack.c.l.b16 %v1808
        %v1880 = vunpack.c.l.b16 %v1809
        %v1881 = vunpack.c.l.b16 %v1810
        %v1882 = vunpack.c.l.b16 %v1811
        %v1883 = vunpack.c.l.b16 %v1812
        %v1884 = vunpack.c.l.b16 %v1813
        %v1885 = vunpack.c.l.b16 %v1814
        %v1886 = vunpack.c.l.b16 %v1815
        %v1887 = vunpack.c.l.b16 %v1816
        %v1888 = vunpack.c.l.b16 %v1817
        %v1889 = vunpack.c.l.b16 %v1818
        %v1890 = vunpack.c.l.b16 %v1819
        %v1891 = vunpack.c.l.b16 %v1820
        %v1892 = vunpack.c.l.b16 %v1821
        %v1893 = vunpack.c.l.b16 %v1822
        %v1894 = vunpack.c.l.b16 %v1823
        %v1895 = vunpack.c.l.b16 %v1824
        %v1896 = vunpack.c.l.b16 %v1825
        %v1897 = vunpack.c.l.b16 %v1826
        %v1898 = vunpack.c.l.b16 %v1827
        %v1899 = vunpack.c.l.b16 %v1828
        %v1900 = vunpack.c.l.b16 %v1829
        %v1901 = vunpack.c.l.b16 %v1830
        %v1902 = vunpack.c.l.b16 %v1831
        %v1903 = vunpack.c.l.b16 %v1832
        %v1904 = vunpack.c.l.b16 %v1833
        %v1905 = vunpack.c.l.b16 %v1834
        %v1906 = vpack.c.b16 %v1875, %v1874
        %v1907 = vpack.c.b16 %v1877, %v1876
        %v1908 = vpack.c.b16 %v1879, %v1878
        %v1909 = vpack.c.b16 %v1881, %v1880
        %v1910 = vpack.c.b16 %v1883, %v1882
        %v1911 = vpack.c.b16 %v1885, %v1884
        %v1912 = vpack.c.b16 %v1887, %v1886
        %v1913 = vpack.c.b16 %v1889, %v1888
        %v1914 = vpack.c.b16 %v1891, %v1890
        %v1915 = vpack.c.b16 %v1893, %v1892
        %v1916 = vpack.c.b16 %v1895, %v1894
        %v1917 = vpack.c.b16 %v1897, %v1896
        %v1918 = vpack.c.b16 %v1899, %v1898
        %v1919 = vpack.c.b16 %v1901, %v1900
        %v1920 = vpack.c.b16 %v1903, %v1902
        %v1921 = vpack.c.b16 %v1905, %v1904
        %1938 = vmatprep.subr.bf16.mxu0 0
        %1939 = vmatpush1.bf16.msra.mxu0 %v1906
        %1940 = vmatprep.subr.bf16.mxu0 0
        %1941 = vmatpush1.bf16.msra.mxu0 %v1907
        %1942 = vmatprep.subr.bf16.mxu0 0
        %1943 = vmatpush1.bf16.msra.mxu0 %v1908
        %1944 = vmatprep.subr.bf16.mxu0 0
        %1945 = vmatpush1.bf16.msra.mxu0 %v1909
        %1946 = vmatprep.subr.bf16.mxu0 0
        %1947 = vmatpush1.bf16.msra.mxu0 %v1910
        %1948 = vmatprep.subr.bf16.mxu0 0
        %1949 = vmatpush1.bf16.msra.mxu0 %v1911
        %1950 = vmatprep.subr.bf16.mxu0 0
        %1951 = vmatpush1.bf16.msra.mxu0 %v1912
        %1952 = vmatprep.subr.bf16.mxu0 0
        %1953 = vmatpush1.bf16.msra.mxu0 %v1913
        %1954 = vmatprep.subr.bf16.mxu0 0
        %1955 = vmatpush1.bf16.msra.mxu0 %v1914
        %1956 = vmatprep.subr.bf16.mxu0 0
        %1957 = vmatpush1.bf16.msra.mxu0 %v1915
        %1958 = vmatprep.subr.bf16.mxu0 0
        %1959 = vmatpush1.bf16.msra.mxu0 %v1916
        %1960 = vmatprep.subr.bf16.mxu0 0
        %1961 = vmatpush1.bf16.msra.mxu0 %v1917
        %1962 = vmatprep.subr.bf16.mxu0 0
        %1963 = vmatpush1.bf16.msra.mxu0 %v1918
        %1964 = vmatprep.subr.bf16.mxu0 0
        %1965 = vmatpush1.bf16.msra.mxu0 %v1919
        %1966 = vmatprep.subr.bf16.mxu0 0
        %1967 = vmatpush1.bf16.msra.mxu0 %v1920
        %1968 = vmatprep.subr.bf16.mxu0 0
        %1969 = vmatpush1.bf16.msra.mxu0 %v1921
        %1970 = vmatprep.mubr.bf16.mxu0 %v1802
        %1971 = vmatmul.mubr.bf16.gmra.mrb[0].mxu0 %v1801
        %v1972 = vpop.f32.mrb[0].mxu0
        %v1973 = vadd.f32 %v1840, %v1972
        %v1974 = vpop.f32.mrb[0].mxu0
        %v1975 = vpop.f32.mrb[0].mxu0
        %v1976 = vadd.f32 %v1840, %v1975
        %v1977 = vpop.f32.mrb[0].mxu0
        %1978 = vdwg.mxu0
        %v1979 = vadd.f32 %v1643, %v1973
        %v1980 = vadd.f32 %v1644, %v1976
        %v1981 = vld [vmem:[%s15] sm:$0x1]
        %v1982 = vld [vmem:[%s16] sm:$0x1]
        %1983 = vadd.xlane.f32.xlu0 %v1979
        %v1984 = vpop.xlane.xlu0 %1983
        %1985 = vadd.xlane.f32.xlu0 %v1980
        %v1986 = vpop.xlane.xlu0 %1985
        %v1987 = vmul.f32 %v1984, %v1610
        %v1988 = vmul.f32 %v1986, %v1610
        %v1989 = vsub.f32 %v1979, %v1987
        %v1990 = vsub.f32 %v1980, %v1988
        %v1991 = vmul.f32 %v1989, %v1989
        %v1992 = vmul.f32 %v1990, %v1990
        %1993 = vadd.xlane.f32.xlu0 %v1991
        %v1994 = vpop.xlane.xlu0 %1993
        %1995 = vadd.xlane.f32.xlu0 %v1992
        %v1996 = vpop.xlane.xlu0 %1995
        %v1997 = vmul.f32 %v1994, %v1610
        %v1998 = vmul.f32 %v1996, %v1610
        %v1999 = vadd.f32 %v1997, 1e-05
        %v2000 = vadd.f32 %v1998, 1e-05
        %v2001 = vrsqrt.pop %v1999
        %v2002 = vrsqrt.pop %v2000
        %v2003 = vmul.f32 %v1989, %v2001
        %v2004 = vmul.f32 %v1990, %v2002
        %v2006 = vlaneseq
        %v2007 = vshrl.u32 %v2006, 7
        %v2008 = vsub.s32 0, %v2007
        %v2009 = vrot.slane %v1981, %v2008
        %v2011 = vmul.f32 %v2003, %v2009
        %v2012 = vmul.f32 %v2004, %v2009
        %v2014 = vlaneseq
        %v2015 = vshrl.u32 %v2014, 7
        %v2016 = vsub.s32 0, %v2015
        %v2017 = vrot.slane %v1982, %v2016
        %v2019 = vadd.f32 %v2011, %v2017
        %v2020 = vadd.f32 %v2012, %v2017
        %v2021 = vld [vmem:[%s17] sm:$0x1]
        %v2022 = vld [vmem:[%s18] sm:$0x1]
        %2023 = vadd.xlane.f32.xlu0 %v2019
        %v2024 = vpop.xlane.xlu0 %2023
        %2025 = vadd.xlane.f32.xlu0 %v2020
        %v2026 = vpop.xlane.xlu0 %2025
        %v2027 = vmul.f32 %v2024, %v1610
        %v2028 = vmul.f32 %v2026, %v1610
        %v2029 = vsub.f32 %v2019, %v2027
        %v2030 = vsub.f32 %v2020, %v2028
        %v2031 = vmul.f32 %v2029, %v2029
        %v2032 = vmul.f32 %v2030, %v2030
        %2033 = vadd.xlane.f32.xlu0 %v2031
        %v2034 = vpop.xlane.xlu0 %2033
        %2035 = vadd.xlane.f32.xlu0 %v2032
        %v2036 = vpop.xlane.xlu0 %2035
        %v2037 = vmul.f32 %v2034, %v1610
        %v2038 = vmul.f32 %v2036, %v1610
        %v2039 = vadd.f32 %v2037, 1e-05
        %v2040 = vadd.f32 %v2038, 1e-05
        %v2041 = vrsqrt.pop %v2039
        %v2042 = vrsqrt.pop %v2040
        %v2043 = vmul.f32 %v2029, %v2041
        %v2044 = vmul.f32 %v2030, %v2042
        %v2046 = vlaneseq
        %v2047 = vshrl.u32 %v2046, 7
        %v2048 = vsub.s32 0, %v2047
        %v2049 = vrot.slane %v2021, %v2048
        %v2051 = vmul.f32 %v2043, %v2049
        %v2052 = vmul.f32 %v2044, %v2049
        %v2054 = vlaneseq
        %v2055 = vshrl.u32 %v2054, 7
        %v2056 = vsub.s32 0, %v2055
        %v2057 = vrot.slane %v2022, %v2056
        %v2059 = vadd.f32 %v2051, %v2057
        %v2060 = vadd.f32 %v2052, %v2057
        %2061 = vst [vmem:[%s609] sm:$0xff] %v2059
        %2062 = vst [vmem:[%s609 + $0x8] sm:$0xff] %v2060
        %s2063 = sand.u32 %s459, 1
        %s2064 = scalar_lea.sflag [#allocation6], %s2063
        %s2065 = sand.u32 %s459, 1
        %s2066 = smul.addr %s2065, 16
        %s2067 = scalar_lea.vmem [#allocation5], %s2066
        // Predicated region
        $region101: #{bert_forward.3} parent=95 // pred_check
          %p2068 = pneg %p469
        $region102: #{bert_forward.3} parent=95 // pred_check_branch
          %2070 = sbr.rel (%p2068) target = $region104
        $region103: #{bert_forward.3} parent=95 // pred_region
          %s2071 = smul.u32 2, %s38
          %s2073 = ssub.s32 256, 256
          %2074 = vsyncadd %s2064, %s2073
          %s2075 = smul.addr %s37, 2
          %s2076 = sadd.s32 %s2071, %s2075
          %s2077 = smul.addr %s2076, 128
          %s2078 = scalar_lea.hbm %s19, %s2077
          %s2079 = sshll.u32 %s2067, 4
          %s2080 = int_to_ptr.vmem [resolvable:$true] %s2079
          %2085 = dma.vmem_to_hbm [thread:$0]  %s2080, 256, %s2078, %s2064, 128, 128, 8
        $region104: #{bert_forward.3} parent=95 // pred_fallthru
          _
      $region96: #{bert_forward.3} parent=5 // pred_fallthru
        _
      %p2086 = scmp.le.s32.totalorder 2, %s28
      // Predicated region
      $region105: #{bert_forward.3} parent=5 // pred_check
        %p2087 = pneg %p2086
      $region106: #{bert_forward.3} parent=5 // pred_check_branch
        %2089 = sbr.rel (%p2087) target = $region108
      $region107: #{bert_forward.3} parent=5 // pred_region
        %s2090 = ssub.s32 %s28, 2
        // Predicated region
        $region109: #{bert_forward.3} parent=107 // pred_check
          %p2091 = pneg %p475
        $region110: #{bert_forward.3} parent=107 // pred_check_branch
          %2093 = sbr.rel (%p2091) target = $region112
        $region111: #{bert_forward.3} parent=107 // pred_region
          %s2094 = sand.u32 %s460, 1
          %s2095 = scalar_lea.sflag [#allocation6], %s2094
          %s2096 = sand.u32 %s460, 1
          %s2097 = smul.addr %s2096, 16
          %s2098 = scalar_lea.vmem [#allocation5], %s2097
          %2099 = dma.done %s2095, 256
        $region112: #{bert_forward.3} parent=107 // pred_fallthru
          _
      $region108: #{bert_forward.3} parent=5 // pred_fallthru
        _
    $region6: #{bert_forward.3} parent=1 // loop_footer
      %s32 = sadd.s32 1, %s28
    $region7: #{bert_forward.3} parent=1 // loop_footer_branch
      %27 = sbr.rel target = $region3
    $region8: #{bert_forward.3} parent=1 // loop_exit
      _
    %2100 = vsyncpa [#allocation6], 1
    %s2101 = scalar_lea.sflag [#allocation6], 1
    %2102 = vsyncpa %s2101, 1

</llo_original>
